<compile_context>
chip_gen: v6e
topology: v6e:2x2x1
jax: 0.10.0
libtpu: 0.0.40
codegen_flags: <defaults>
</compile_context>

<pallas_src>
import functools

import jax
import jax.numpy as jnp
from jax.experimental import pallas as pl
from jax.experimental.pallas import tpu as pltpu


def _attention_kernel(x_ref, wqkv_ref, wproj_ref, b_ref, o_ref, *,
                      num_heads, rows):
    dim = wproj_ref.shape[0]
    hd = dim // num_heads
    n = x_ref.shape[1]

    wqkv = wqkv_ref[...]          # (D, 3D) bf16, scale pre-folded into q cols
    wproj = wproj_ref[...]        # (D, D)  bf16
    bias = b_ref[...]             # (1, D)  f32

    # Static unroll over the batch rows handled by this grid step (1 or B).
    for r in range(rows):
        x = x_ref[r]              # (N, D) bf16

        # ---- QKV: one full-depth matmul, f32 accumulation ------------------
        qkv = jnp.dot(x, wqkv, preferred_element_type=jnp.float32)  # (N, 3D)

        # ---- per-head re-split: (N, D) -> (H, N, hd)  (tiny ~2 KB relayout)
        def heads(z):
            return z.reshape(n, num_heads, hd).transpose(1, 0, 2)

        q = heads(qkv[:, :dim]).astype(jnp.bfloat16)            # (H, N, hd)
        k = heads(qkv[:, dim:2 * dim]).astype(jnp.bfloat16)
        v = heads(qkv[:, 2 * dim:]).astype(jnp.bfloat16)

        # ---- scores (contract last dims; no explicit k.T) + f32 softmax ----
        s = jnp.einsum('hnd,hmd->hnm', q, k,
                       preferred_element_type=jnp.float32)      # (H, N, N)
        s = s - jnp.max(s, axis=-1, keepdims=True)
        e = jnp.exp(s)
        p = e / jnp.sum(e, axis=-1, keepdims=True)

        # ---- attention-weighted values, head-batched ------------------------
        out_h = jnp.einsum('hnm,hmd->hnd', p.astype(jnp.bfloat16), v,
                           preferred_element_type=jnp.float32)  # (H, N, hd)

        # ---- head merge (H,N,hd)->(N,D), then ONE K=D projection matmul ----
        merged = out_h.transpose(1, 0, 2).reshape(n, dim).astype(jnp.bfloat16)
        y = jnp.dot(merged, wproj, preferred_element_type=jnp.float32) + bias
        o_ref[r] = y.astype(o_ref.dtype)


def _rows_per_grid_step(batch: int) -> int:
    """Batch rows handled per grid step.

    Single-TensorCore chips (v5e/v6e/...): fold the whole batch into one grid
    step -- the B-sized grid is just a serial loop there (~0.35 us/step).
    Multi-TensorCore chips (v4/v5p/v7x): one row per step so the "parallel"
    grid axis spans both cores.  (If B == 1 on a multi-TC part, a further
    parallel split -- e.g. over head groups -- would be needed; not required
    at these shapes.)
    """
    try:
        kind = jax.devices()[0].device_kind.lower()
    except Exception:
        return batch
    single_tc = any(t in kind for t in ("lite", "v5e", "v6e", "v2", "v3"))
    return batch if single_tc else 1


def attention_forward(x, w_qkv, w_proj, b_proj, *, num_heads: int):
    """x: (B, N, D) f32; w_qkv: (D, 3D); w_proj: (D, D); b_proj: (1, D).

    w_qkv column order is (qkv, head, hd) -- the native nn.Linear(dim, 3*dim)
    ordering used by the torch module's rearrange.
    """
    b, n, d = x.shape
    hd = d // num_heads
    scale = hd ** (-0.5)

    # ---- host-side weight prep (once, plain XLA on small tensors) ----------
    # Fold the softmax scale into the q columns of Wqkv (free, exact).
    w_qkv_scaled = jnp.concatenate([w_qkv[:, :d] * scale, w_qkv[:, d:]], axis=1)
    w_qkv_bf16 = w_qkv_scaled.astype(jnp.bfloat16)               # (D, 3D)
    w_proj_bf16 = w_proj.astype(jnp.bfloat16)                    # (D, D)
    b_proj_f32 = b_proj.astype(jnp.float32).reshape(1, d)        # (1, D)
    x_bf16 = x.astype(jnp.bfloat16)

    # ---- grid shape: collapse batch on single-TC chips ----------------------
    rows = _rows_per_grid_step(b)
    if b % rows != 0:
        rows = 1
    grid_b = b // rows

    # ---- advisory cost estimate ---------------------------------------------
    flops = (2 * b * n * d * 3 * d                       # qkv projection
             + 2 * b * num_heads * n * n * hd * 2        # scores + attn @ v
             + 2 * b * n * d * d)                        # output projection
    bytes_accessed = (x_bf16.size * 2 + w_qkv_bf16.size * 2
                      + w_proj_bf16.size * 2 + b_proj_f32.size * 4
                      + b * n * d * 4)
    cost = pl.CostEstimate(flops=flops,
                           transcendentals=b * num_heads * n * n,
                           bytes_accessed=bytes_accessed)

    kernel = functools.partial(_attention_kernel,
                               num_heads=num_heads, rows=rows)

    return pl.pallas_call(
        kernel,
        out_shape=jax.ShapeDtypeStruct((b, n, d), jnp.float32),
        grid_spec=pltpu.PrefetchScalarGridSpec(
            num_scalar_prefetch=0,
            grid=(grid_b,),
            in_specs=[
                pl.BlockSpec((rows, n, d), lambda i: (i, 0, 0)),
                pl.BlockSpec((d, 3 * d), lambda i: (0, 0)),
                pl.BlockSpec((d, d), lambda i: (0, 0)),
                pl.BlockSpec((1, d), lambda i: (0, 0)),
            ],
            out_specs=pl.BlockSpec((rows, n, d), lambda i: (i, 0, 0)),
        ),
        compiler_params=pltpu.CompilerParams(
            dimension_semantics=("parallel",)),
        cost_estimate=cost,
    )(x_bf16, w_qkv_bf16, w_proj_bf16, b_proj_f32)


def _reference(x, w_qkv, w_proj, b_proj, num_heads):
    b, n, d = x.shape
    hd = d // num_heads
    scale = hd ** (-0.5)
    qkv = jnp.einsum('bnd,de->bne', x, w_qkv)            # (B, N, 3D)
    qkv = qkv.reshape(b, n, 3, num_heads, hd)
    q = qkv[:, :, 0].transpose(0, 2, 1, 3)               # (B, H, N, hd)
    k = qkv[:, :, 1].transpose(0, 2, 1, 3)
    v = qkv[:, :, 2].transpose(0, 2, 1, 3)
    dots = jnp.einsum('bhid,bhjd->bhij', q, k) * scale
    attn = jax.nn.softmax(dots, axis=-1)
    out = jnp.einsum('bhij,bhjd->bhid', attn, v)
    out = out.transpose(0, 2, 1, 3).reshape(b, n, d)
    return jnp.einsum('bnd,de->bne', out, w_proj) + b_proj[0]


if __name__ == "__main__":
    B, N, D, H = 2, 16, 64, 8   # dim=64, num_heads=8 -> head_dim=8

    key = jax.random.PRNGKey(0)
    kx, kqkv, kp, kb = jax.random.split(key, 4)

    x = jax.random.normal(kx, (B, N, D), dtype=jnp.float32)
    # deterministic synthetic parameters (Linear-like scaling)
    w_qkv = jax.random.normal(kqkv, (D, 3 * D), dtype=jnp.float32) * (1.0 / D ** 0.5)
    w_proj = jax.random.normal(kp, (D, D), dtype=jnp.float32) * (1.0 / D ** 0.5)
    b_proj = jax.random.normal(kb, (1, D), dtype=jnp.float32) * 0.02

    out = attention_forward(x, w_qkv, w_proj, b_proj, num_heads=H)
    out = jax.block_until_ready(out)

    ref = _reference(x, w_qkv, w_proj, b_proj, H)
    assert out.shape == (B, N, D)
    # bf16 MXU operands -> tolerance relaxed accordingly (values are O(1)).
    max_err = float(jnp.max(jnp.abs(out - ref)))
    assert max_err < 1e-1, f"mismatch vs reference, max abs err = {max_err}"

    print("KERNEL_OK")
</pallas_src>

<mosaic_0001>
module attributes {stable_mosaic.version = 11 : i64} {
  func.func @_attention_kernel(%arg0: i32, %arg1: memref<1x16x64xbf16, #tpu.memory_space<vmem>>, %arg2: memref<64x192xbf16, #tpu.memory_space<vmem>>, %arg3: memref<64x64xbf16, #tpu.memory_space<vmem>>, %arg4: memref<1x64xf32, #tpu.memory_space<vmem>>, %arg5: memref<1x16x64xf32, #tpu.memory_space<vmem>>) attributes {dimension_semantics = [#tpu.dimension_semantics<parallel>], iteration_bounds = array<i64: 2>, scalar_prefetch = 0 : i64, scratch_operands = 0 : i64, tpu.core_type = #tpu.core_type<tc>, window_params = [{transform_indices = @transform_0, window_bounds = array<i64: 1, 16, 64>}, {pipeline_mode = #tpu.pipeline_mode<synchronous>, transform_indices = @transform_1, window_bounds = array<i64: 64, 192>}, {pipeline_mode = #tpu.pipeline_mode<synchronous>, transform_indices = @transform_2, window_bounds = array<i64: 64, 64>}, {pipeline_mode = #tpu.pipeline_mode<synchronous>, transform_indices = @transform_3, window_bounds = array<i64: 1, 64>}, {transform_indices = @transform_4, window_bounds = array<i64: 1, 16, 64>}]} {
    %c0 = arith.constant 0 : index
    %c0_0 = arith.constant 0 : index
    %0 = vector.load %arg2[%c0, %c0_0] : memref<64x192xbf16, #tpu.memory_space<vmem>>, vector<64x192xbf16>
    %c0_1 = arith.constant 0 : index
    %c0_2 = arith.constant 0 : index
    %1 = vector.load %arg3[%c0_1, %c0_2] : memref<64x64xbf16, #tpu.memory_space<vmem>>, vector<64x64xbf16>
    %c0_3 = arith.constant 0 : index
    %c0_4 = arith.constant 0 : index
    %2 = vector.load %arg4[%c0_3, %c0_4] : memref<1x64xf32, #tpu.memory_space<vmem>>, vector<1x64xf32>
    %c0_5 = arith.constant 0 : index
    %c0_6 = arith.constant 0 : index
    %c0_7 = arith.constant 0 : index
    %3 = vector.load %arg1[%c0_5, %c0_6, %c0_7] : memref<1x16x64xbf16, #tpu.memory_space<vmem>>, vector<1x16x64xbf16>
    %4 = vector.shape_cast %3 : vector<1x16x64xbf16> to vector<16x64xbf16>
    %cst = arith.constant dense<0.000000e+00> : vector<16x192xf32>
    %5 = tpu.matmul %4, %0, %cst {dimension_numbers = #tpu.dot_dimension_numbers<[1], [0], [0], [1], [0, 0, 1, 1], [], []>} : vector<16x64xbf16>, vector<64x192xbf16>, vector<16x192xf32> -> vector<16x192xf32>
    %6 = vector.extract_strided_slice %5 {offsets = [0, 0], sizes = [16, 64], strides = [1, 1]} : vector<16x192xf32> to vector<16x64xf32>
    %7 = vector.shape_cast %6 : vector<16x64xf32> to vector<16x8x8xf32>
    %8 = tpu.transpose %7, [1, 0, 2] : vector<16x8x8xf32> -> vector<8x16x8xf32>
    %9 = arith.truncf %8 : vector<8x16x8xf32> to vector<8x16x8xbf16>
    %10 = vector.extract_strided_slice %5 {offsets = [0, 64], sizes = [16, 64], strides = [1, 1]} : vector<16x192xf32> to vector<16x64xf32>
    %11 = vector.shape_cast %10 : vector<16x64xf32> to vector<16x8x8xf32>
    %12 = tpu.transpose %11, [1, 0, 2] : vector<16x8x8xf32> -> vector<8x16x8xf32>
    %13 = arith.truncf %12 : vector<8x16x8xf32> to vector<8x16x8xbf16>
    %14 = vector.extract_strided_slice %5 {offsets = [0, 128], sizes = [16, 64], strides = [1, 1]} : vector<16x192xf32> to vector<16x64xf32>
    %15 = vector.shape_cast %14 : vector<16x64xf32> to vector<16x8x8xf32>
    %16 = tpu.transpose %15, [1, 0, 2] : vector<16x8x8xf32> -> vector<8x16x8xf32>
    %17 = arith.truncf %16 : vector<8x16x8xf32> to vector<8x16x8xbf16>
    "tpu.trace_start"() <{level = 10 : i32, message = "hnd,hmd->hnm"}> : () -> ()
    %cst_8 = arith.constant dense<0.000000e+00> : vector<8x16x16xf32>
    %18 = tpu.matmul %9, %13, %cst_8 {dimension_numbers = #tpu.dot_dimension_numbers<[2], [2], [1], [1], [0, 0, 0, 1, 1, 1], [0], [0]>} : vector<8x16x8xbf16>, vector<8x16x8xbf16>, vector<8x16x16xf32> -> vector<8x16x16xf32>
    "tpu.trace_stop"() : () -> ()
    %cst_9 = arith.constant dense<0xFF800000> : vector<8x16xf32>
    %19 = vector.multi_reduction <maximumf>, %18, %cst_9 [2] : vector<8x16x16xf32> to vector<8x16xf32>
    %20 = vector.shape_cast %19 : vector<8x16xf32> to vector<8x16x1xf32>
    %21 = vector.broadcast %20 : vector<8x16x1xf32> to vector<8x16x16xf32>
    %22 = arith.subf %18, %21 : vector<8x16x16xf32>
    %23 = math.exp %22 : vector<8x16x16xf32>
    %cst_10 = arith.constant dense<0.000000e+00> : vector<8x16xf32>
    %24 = vector.multi_reduction <add>, %23, %cst_10 [2] : vector<8x16x16xf32> to vector<8x16xf32>
    %25 = vector.shape_cast %24 : vector<8x16xf32> to vector<8x16x1xf32>
    %26 = vector.broadcast %25 : vector<8x16x1xf32> to vector<8x16x16xf32>
    %27 = arith.divf %23, %26 : vector<8x16x16xf32>
    %28 = arith.truncf %27 : vector<8x16x16xf32> to vector<8x16x16xbf16>
    "tpu.trace_start"() <{level = 10 : i32, message = "hnm,hmd->hnd"}> : () -> ()
    %cst_11 = arith.constant dense<0.000000e+00> : vector<8x16x8xf32>
    %29 = tpu.matmul %28, %17, %cst_11 {dimension_numbers = #tpu.dot_dimension_numbers<[2], [1], [1], [2], [0, 0, 0, 1, 1, 2], [0], [0]>} : vector<8x16x16xbf16>, vector<8x16x8xbf16>, vector<8x16x8xf32> -> vector<8x16x8xf32>
    "tpu.trace_stop"() : () -> ()
    %30 = tpu.transpose %29, [1, 0, 2] : vector<8x16x8xf32> -> vector<16x8x8xf32>
    %31 = vector.shape_cast %30 : vector<16x8x8xf32> to vector<16x64xf32>
    %32 = arith.truncf %31 : vector<16x64xf32> to vector<16x64xbf16>
    %cst_12 = arith.constant dense<0.000000e+00> : vector<16x64xf32>
    %33 = tpu.matmul %32, %1, %cst_12 {dimension_numbers = #tpu.dot_dimension_numbers<[1], [0], [0], [1], [0, 0, 1, 1], [], []>} : vector<16x64xbf16>, vector<64x64xbf16>, vector<16x64xf32> -> vector<16x64xf32>
    %34 = vector.broadcast %2 : vector<1x64xf32> to vector<16x64xf32>
    %35 = arith.addf %33, %34 : vector<16x64xf32>
    %c0_13 = arith.constant 0 : index
    %c0_14 = arith.constant 0 : index
    %c0_15 = arith.constant 0 : index
    %36 = vector.load %arg5[%c0_13, %c0_14, %c0_15] : memref<1x16x64xf32, #tpu.memory_space<vmem>>, vector<1x16x64xf32>
    %37 = vector.shape_cast %36 : vector<1x16x64xf32> to vector<16x64xf32>
    %38 = vector.shape_cast %35 : vector<16x64xf32> to vector<1x16x64xf32>
    tpu.vector_store %arg5[%c0_13, %c0_14, %c0_15], %38 {strides = array<i32>} : memref<1x16x64xf32, #tpu.memory_space<vmem>>, vector<1x16x64xf32>,
    return
  }
  func.func @transform_0(%arg0: i32) -> (i32, i32, i32) {
    %c0_i32 = arith.constant 0 : i32
    %c0_i32_0 = arith.constant 0 : i32
    %c0_i32_1 = arith.constant 0 : i32
    return %arg0, %c0_i32, %c0_i32_0 : i32, i32, i32
  }
  func.func @transform_1(%arg0: i32) -> (i32, i32) {
    %c0_i32 = arith.constant 0 : i32
    %c0_i32_0 = arith.constant 0 : i32
    %c0_i32_1 = arith.constant 0 : i32
    return %c0_i32, %c0_i32_0 : i32, i32
  }
  func.func @transform_2(%arg0: i32) -> (i32, i32) {
    %c0_i32 = arith.constant 0 : i32
    %c0_i32_0 = arith.constant 0 : i32
    %c0_i32_1 = arith.constant 0 : i32
    return %c0_i32, %c0_i32_0 : i32, i32
  }
  func.func @transform_3(%arg0: i32) -> (i32, i32) {
    %c0_i32 = arith.constant 0 : i32
    %c0_i32_0 = arith.constant 0 : i32
    %c0_i32_1 = arith.constant 0 : i32
    return %c0_i32, %c0_i32_0 : i32, i32
  }
  func.func @transform_4(%arg0: i32) -> (i32, i32, i32) {
    %c0_i32 = arith.constant 0 : i32
    %c0_i32_0 = arith.constant 0 : i32
    %c0_i32_1 = arith.constant 0 : i32
    return %arg0, %c0_i32, %c0_i32_0 : i32, i32, i32
  }
}

</mosaic_0001>

<llo_original>
// kernel: tpu_custom_call.1
$region0: #{tpu_custom_call.1}
  #allocation0 [shape = 'u32[]', space=smem, size = 0x4, offset = 0x4, fixed_abs, tag = 'smem constant byte address 0x4 - core index']
  #allocation1 [shape = 'u32[144,128]{1,0:T(1,128)}', space=vmem, size = 0x12000, scoped, tag = 'internal scratch']
  %s0 = inlined_call_operand.hbm [shape: bf16[2,16,64], index: 0, kind: input, shape index: {}]
  %s1 = inlined_call_operand.hbm [shape: bf16[64,192], index: 1, kind: input, shape index: {}]
  %s2 = inlined_call_operand.hbm [shape: bf16[64,64], index: 2, kind: input, shape index: {}]
  %s3 = inlined_call_operand.vmem [shape: f32[1,64], index: 3, kind: input, shape index: {}]
  %s4 = inlined_call_operand.hbm [shape: f32[2,16,64], index: 4, kind: output, shape index: {}]
  %s5 = sld [smem:[#allocation0]]
  $region61: #{tpu_custom_call.1} parent=0
    _
  %s7 = ssub.s32 1, %s5
  %s8 = scalar_select 0, %s7, %s5
  $region1: #{tpu_custom_call.1} parent=0
    #allocation2 [shape = 'u8[8192]{0}', space=vmem, size = 0x2000, scoped, tag = 'input window, operand 0']
    #allocation3 [shape = 's32[2]{0}', space=sflag, size = 0x8, scoped, tag = 'scoped memory for tpu_custom_call.1']
    #allocation4 [shape = 's32[2]{0}', space=sflag, size = 0x8, scoped, tag = 'scoped memory for tpu_custom_call.1']
    #allocation5 [shape = 'u8[32768]{0}', space=vmem, size = 0x8000, scoped, tag = 'input window, operand 1, single buffered']
    #allocation6 [shape = 's32[1]{0}', space=sflag, size = 0x4, scoped, tag = 'scoped memory for tpu_custom_call.1']
    #allocation7 [shape = 'u8[16384]{0}', space=vmem, size = 0x4000, scoped, tag = 'input window, operand 2, single buffered']
    #allocation8 [shape = 'u8[16384]{0}', space=vmem, size = 0x4000, scoped, tag = 'output window, operand 0']
    %9 = vsyncpa [#allocation3], 0
    %s10 = scalar_lea.sflag [#allocation3], 1
    %11 = vsyncpa %s10, 0
    %12 = vsyncpa [#allocation6], 0
    %13 = vsyncpa [#allocation4], 0
    %s14 = scalar_lea.sflag [#allocation4], 1
    %15 = vsyncpa %s14, 0
    loop: start=0, step=1, limit=4
    $region2: #{tpu_custom_call.1} parent=1 // loop_pre_header
      _
    $region3: #{tpu_custom_call.1} parent=1 // loop_header
      %s17 = sphi 0, %s21
      %p18 = scmp.ge.s32.totalorder %s17, 4
      %s27 = sphi 0, %s29
      %s30 = sphi 0, %s27
      %s31 = sphi 0, %s30
      %s47 = sphi 0, %s31
      %s51 = sphi 0, %s51
      %s53 = sphi 0, %s51
      %s54 = sphi 0, %s53
      %s68 = sphi 0, %s54
      %s72 = sphi 0, %s72
      %s74 = sphi 0, %s72
      %s75 = sphi 0, %s74
      %s89 = sphi 0, %s75
      %s93 = sphi 0, %s93
      %s95 = sphi 0, %s93
      %s96 = sphi 0, %s95
      %s110 = sphi 0, %s96
      %s116 = sphi 0, %s118
      %s119 = sphi 0, %s116
      %s120 = sphi 0, %s119
      %s136 = sphi 0, %s120
    $region4: #{tpu_custom_call.1} parent=1 // loop_header_branch
      %20 = sbr.rel (%p18) target = $region8
    $region5: #{tpu_custom_call.1} parent=1 // loop_body
      %s22 = ssub.s32 %s17, 1
      %s23 = ssub.s32 %s17, 2
      %s24 = sadd.s32 %s17, 1
      %s25 = ssub.s32 %s17, %s24
      %p26 = scmp.eq.s32.totalorder %s25, 0
      %s28 = sadd.s32 %s27, 1
      %s29 = scalar_select %p26, %s27, %s28
      %p32 = pneg %p26
      %p33 = scmp.eq.s32.totalorder %s17, 1
      %p34 = por %p32, %p33
      %p35 = scmp.ne.s32.totalorder %s27, %s30
      %p36 = scmp.eq.s32.totalorder %s17, 0
      %p37 = por %p35, %p36
      %p38 = scmp.ne.s32.totalorder %s27, %s30
      %p39 = scmp.eq.s32.totalorder %s22, 1
      %p40 = por %p38, %p39
      %p41 = scmp.ne.s32.totalorder %s30, %s31
      %p42 = scmp.eq.s32.totalorder %s22, 0
      %p43 = por %p41, %p42
      %p44 = scmp.ne.s32.totalorder %s30, %s31
      %p45 = scmp.eq.s32.totalorder %s23, 1
      %p46 = por %p44, %p45
      %p48 = scmp.ne.s32.totalorder %s31, %s47
      %p49 = scmp.eq.s32.totalorder %s23, 0
      %p50 = por %p48, %p49
      %s52 = sadd.s32 %s51, 1
      %p55 = scmp.eq.s32.totalorder %s17, 1
      %p56 = scmp.ne.s32.totalorder %s51, %s53
      %p57 = scmp.eq.s32.totalorder %s17, 0
      %p58 = por %p56, %p57
      %p59 = scmp.ne.s32.totalorder %s51, %s53
      %p60 = scmp.eq.s32.totalorder %s22, 1
      %p61 = por %p59, %p60
      %p62 = scmp.ne.s32.totalorder %s53, %s54
      %p63 = scmp.eq.s32.totalorder %s22, 0
      %p64 = por %p62, %p63
      %p65 = scmp.ne.s32.totalorder %s53, %s54
      %p66 = scmp.eq.s32.totalorder %s23, 1
      %p67 = por %p65, %p66
      %p69 = scmp.ne.s32.totalorder %s54, %s68
      %p70 = scmp.eq.s32.totalorder %s23, 0
      %p71 = por %p69, %p70
      %s73 = sadd.s32 %s72, 1
      %p76 = scmp.eq.s32.totalorder %s17, 1
      %p77 = scmp.ne.s32.totalorder %s72, %s74
      %p78 = scmp.eq.s32.totalorder %s17, 0
      %p79 = por %p77, %p78
      %p80 = scmp.ne.s32.totalorder %s72, %s74
      %p81 = scmp.eq.s32.totalorder %s22, 1
      %p82 = por %p80, %p81
      %p83 = scmp.ne.s32.totalorder %s74, %s75
      %p84 = scmp.eq.s32.totalorder %s22, 0
      %p85 = por %p83, %p84
      %p86 = scmp.ne.s32.totalorder %s74, %s75
      %p87 = scmp.eq.s32.totalorder %s23, 1
      %p88 = por %p86, %p87
      %p90 = scmp.ne.s32.totalorder %s75, %s89
      %p91 = scmp.eq.s32.totalorder %s23, 0
      %p92 = por %p90, %p91
      %s94 = sadd.s32 %s93, 1
      %p97 = scmp.eq.s32.totalorder %s17, 1
      %p98 = scmp.ne.s32.totalorder %s93, %s95
      %p99 = scmp.eq.s32.totalorder %s17, 0
      %p100 = por %p98, %p99
      %p101 = scmp.ne.s32.totalorder %s93, %s95
      %p102 = scmp.eq.s32.totalorder %s22, 1
      %p103 = por %p101, %p102
      %p104 = scmp.ne.s32.totalorder %s95, %s96
      %p105 = scmp.eq.s32.totalorder %s22, 0
      %p106 = por %p104, %p105
      %p107 = scmp.ne.s32.totalorder %s95, %s96
      %p108 = scmp.eq.s32.totalorder %s23, 1
      %p109 = por %p107, %p108
      %p111 = scmp.ne.s32.totalorder %s96, %s110
      %p112 = scmp.eq.s32.totalorder %s23, 0
      %p113 = por %p111, %p112
      %s114 = ssub.s32 %s17, %s24
      %p115 = scmp.eq.s32.totalorder %s114, 0
      %s117 = sadd.s32 %s116, 1
      %s118 = scalar_select %p115, %s116, %s117
      %p121 = pneg %p115
      %p122 = scmp.eq.s32.totalorder %s17, 1
      %p123 = por %p121, %p122
      %p124 = scmp.ne.s32.totalorder %s116, %s119
      %p125 = scmp.eq.s32.totalorder %s17, 0
      %p126 = por %p124, %p125
      %p127 = scmp.ne.s32.totalorder %s116, %s119
      %p128 = scmp.eq.s32.totalorder %s22, 1
      %p129 = por %p127, %p128
      %p130 = scmp.ne.s32.totalorder %s119, %s120
      %p131 = scmp.eq.s32.totalorder %s22, 0
      %p132 = por %p130, %p131
      %p133 = scmp.ne.s32.totalorder %s119, %s120
      %p134 = scmp.eq.s32.totalorder %s23, 1
      %p135 = por %p133, %p134
      %p137 = scmp.ne.s32.totalorder %s120, %s136
      %p138 = scmp.eq.s32.totalorder %s23, 0
      %p139 = por %p137, %p138
      %p140 = scmp.le.s32.totalorder 1, %s17
      %p141 = scmp.lt.s32.totalorder %s17, 3
      %p142 = pnand %p140, %p141
      %p143 = pneg %p142
      // Predicated region
      $region9: #{tpu_custom_call.1} parent=5 // pred_check
        _
      $region10: #{tpu_custom_call.1} parent=5 // pred_check_branch
        %145 = sbr.rel (%p142) target = $region12
      $region11: #{tpu_custom_call.1} parent=5 // pred_region
        %s146 = ssub.s32 %s17, 1
        // Predicated region
        $region13: #{tpu_custom_call.1} parent=11 // pred_check
          %p147 = pneg %p64
        $region14: #{tpu_custom_call.1} parent=11 // pred_check_branch
          %149 = sbr.rel (%p147) target = $region16
        $region15: #{tpu_custom_call.1} parent=11 // pred_region
          %s151 = ssub.s32 1024, 1024
          %152 = vsyncadd [#allocation6], %s151
          %s153 = sshll.u32 [#allocation5], 4
          %s154 = int_to_ptr.vmem [resolvable:$true] %s153
          %159 = dma.hbm_to_vmem [thread:$0]  %s1, 1024, %s154, [#allocation6], 128, 128, 8
        $region16: #{tpu_custom_call.1} parent=11 // pred_fallthru
          _
        // Predicated region
        $region17: #{tpu_custom_call.1} parent=11 // pred_check
          %p160 = pneg %p85
        $region18: #{tpu_custom_call.1} parent=11 // pred_check_branch
          %162 = sbr.rel (%p160) target = $region20
        $region19: #{tpu_custom_call.1} parent=11 // pred_region
          %s164 = ssub.s32 512, 512
          %165 = vsyncadd [#allocation6], %s164
          %s166 = sshll.u32 [#allocation7], 4
          %s167 = int_to_ptr.vmem [resolvable:$true] %s166
          %172 = dma.hbm_to_vmem [thread:$0]  %s2, 512, %s167, [#allocation6], 64, 64, 4
        $region20: #{tpu_custom_call.1} parent=11 // pred_fallthru
          _
        // Predicated region
        $region21: #{tpu_custom_call.1} parent=11 // pred_check
          %p173 = pneg %p106
        $region22: #{tpu_custom_call.1} parent=11 // pred_check_branch
          %175 = sbr.rel (%p173) target = $region24
        $region23: #{tpu_custom_call.1} parent=11 // pred_region
          _
        $region24: #{tpu_custom_call.1} parent=11 // pred_fallthru
          _
      $region12: #{tpu_custom_call.1} parent=5 // pred_fallthru
        _
      %p176 = scmp.lt.s32.totalorder %s17, 2
      // Predicated region
      $region25: #{tpu_custom_call.1} parent=5 // pred_check
        %p177 = pneg %p176
      $region26: #{tpu_custom_call.1} parent=5 // pred_check_branch
        %179 = sbr.rel (%p177) target = $region28
      $region27: #{tpu_custom_call.1} parent=5 // pred_region
        // Predicated region
        $region29: #{tpu_custom_call.1} parent=27 // pred_check
          %p180 = pneg %p37
        $region30: #{tpu_custom_call.1} parent=27 // pred_check_branch
          %182 = sbr.rel (%p180) target = $region32
        $region31: #{tpu_custom_call.1} parent=27 // pred_region
          %s183 = sand.u32 %s27, 1
          %s184 = scalar_lea.sflag [#allocation3], %s183
          %s185 = sand.u32 %s27, 1
          %s186 = smul.addr %s185, 8
          %s187 = scalar_lea.vmem [#allocation2], %s186
          %s189 = ssub.s32 128, 128
          %190 = vsyncadd %s184, %s189
          %s191 = smul.addr %s17, 2
          %s192 = smul.addr %s191, 64
          %s193 = scalar_lea.hbm %s0, %s192
          %s194 = sshll.u32 %s187, 4
          %s195 = int_to_ptr.vmem [resolvable:$true] %s194
          %200 = dma.hbm_to_vmem [thread:$0]  %s193, 128, %s195, %s184, 64, 64, 4
        $region32: #{tpu_custom_call.1} parent=27 // pred_fallthru
          _
      $region28: #{tpu_custom_call.1} parent=5 // pred_fallthru
        _
      %p201 = scmp.le.s32.totalorder 1, %s17
      %p202 = scmp.lt.s32.totalorder %s17, 3
      %p203 = pnand %p201, %p202
      %p204 = pneg %p203
      // Predicated region
      $region33: #{tpu_custom_call.1} parent=5 // pred_check
        _
      $region34: #{tpu_custom_call.1} parent=5 // pred_check_branch
        %206 = sbr.rel (%p203) target = $region36
      $region35: #{tpu_custom_call.1} parent=5 // pred_region
        %s207 = ssub.s32 %s17, 1
        %s208 = sand.u32 %s30, 1
        %s209 = scalar_lea.sflag [#allocation3], %s208
        %s210 = sand.u32 %s30, 1
        %s211 = smul.addr %s210, 8
        %s212 = scalar_lea.vmem [#allocation2], %s211
        // Predicated region
        $region37: #{tpu_custom_call.1} parent=35 // pred_check
          %p213 = pneg %p43
        $region38: #{tpu_custom_call.1} parent=35 // pred_check_branch
          %215 = sbr.rel (%p213) target = $region40
        $region39: #{tpu_custom_call.1} parent=35 // pred_region
          %216 = dma.done %s209, 128
        $region40: #{tpu_custom_call.1} parent=35 // pred_fallthru
          _
        // Predicated region
        $region41: #{tpu_custom_call.1} parent=35 // pred_check
          %p217 = pneg %p64
        $region42: #{tpu_custom_call.1} parent=35 // pred_check_branch
          %219 = sbr.rel (%p217) target = $region44
        $region43: #{tpu_custom_call.1} parent=35 // pred_region
          %220 = dma.done [#allocation6], 1024
        $region44: #{tpu_custom_call.1} parent=35 // pred_fallthru
          _
        // Predicated region
        $region45: #{tpu_custom_call.1} parent=35 // pred_check
          %p221 = pneg %p85
        $region46: #{tpu_custom_call.1} parent=35 // pred_check_branch
          %223 = sbr.rel (%p221) target = $region48
        $region47: #{tpu_custom_call.1} parent=35 // pred_region
          %224 = dma.done [#allocation6], 512
        $region48: #{tpu_custom_call.1} parent=35 // pred_fallthru
          _
        %s225 = sand.u32 %s30, 1
        %s226 = scalar_lea.sflag [#allocation3], %s225
        %s227 = sand.u32 %s30, 1
        %s228 = smul.addr %s227, 8
        %s229 = scalar_lea.vmem [#allocation2], %s228
        %p230 = pneg %p43
        %p231 = pneg %p40
        %p232 = pneg %p64
        %p233 = pneg %p61
        %p234 = pneg %p85
        %p235 = pneg %p82
        %p236 = pneg %p106
        %p237 = pneg %p103
        %p238 = pneg %p132
        %p239 = pneg %p129
        %s240 = sand.u32 %s119, 1
        %s241 = scalar_lea.sflag [#allocation4], %s240
        %s242 = sand.u32 %s119, 1
        %s243 = smul.addr %s242, 16
        %s244 = scalar_lea.vmem [#allocation8], %s243
        %v246 = vld [vmem:[#allocation5] sm:$0xff]
        %v247 = vld [vmem:[#allocation5 + $0x8] sm:$0xff]
        %v248 = vld [vmem:[#allocation5 + $0x10] sm:$0xff]
        %v249 = vld [vmem:[#allocation5 + $0x18] sm:$0xff]
        %v250 = vld [vmem:[#allocation5 + $0x20] sm:$0xff]
        %v251 = vld [vmem:[#allocation5 + $0x28] sm:$0xff]
        %v252 = vld [vmem:[#allocation5 + $0x30] sm:$0xff]
        %v253 = vld [vmem:[#allocation5 + $0x38] sm:$0xff]
        %v254 = vld [vmem:[#allocation7] sm:$0xf]
        %v255 = vld [vmem:[#allocation7 + $0x4] sm:$0xf]
        %v256 = vld [vmem:[#allocation7 + $0x8] sm:$0xf]
        %v257 = vld [vmem:[#allocation7 + $0xc] sm:$0xf]
        %v258 = vld [vmem:[#allocation7 + $0x10] sm:$0xf]
        %v259 = vld [vmem:[#allocation7 + $0x14] sm:$0xf]
        %v260 = vld [vmem:[#allocation7 + $0x18] sm:$0xf]
        %v261 = vld [vmem:[#allocation7 + $0x1c] sm:$0xf]
        %v262 = vld [vmem:[%s3] sm:$0x1]
        %v263 = vld [vmem:[%s212] sm:$0xf]
        %v264 = vld [vmem:[%s212 + $0x4] sm:$0xf]
        %v267 = vunpack.c.l.b16 %v263
        %v268 = vunpack.c.l.b16 %v264
        %v269 = vpack.c.b16 %v268, %v267
        %v278 = vunpack.c.l.b16 %v246
        %v279 = vunpack.c.h.b16 %v246
        %v280 = vunpack.c.l.b16 %v247
        %v281 = vunpack.c.h.b16 %v247
        %v282 = vunpack.c.l.b16 %v248
        %v283 = vunpack.c.h.b16 %v248
        %v284 = vunpack.c.l.b16 %v249
        %v285 = vunpack.c.h.b16 %v249
        %v286 = vunpack.c.l.b16 %v250
        %v287 = vunpack.c.h.b16 %v250
        %v288 = vunpack.c.l.b16 %v251
        %v289 = vunpack.c.h.b16 %v251
        %v290 = vunpack.c.l.b16 %v252
        %v291 = vunpack.c.h.b16 %v252
        %v292 = vunpack.c.l.b16 %v253
        %v293 = vunpack.c.h.b16 %v253
        %v294 = vpack.c.b16 %v280, %v278
        %v295 = vpack.c.b16 %v281, %v279
        %v296 = vpack.c.b16 %v284, %v282
        %v297 = vpack.c.b16 %v285, %v283
        %v298 = vpack.c.b16 %v288, %v286
        %v299 = vpack.c.b16 %v289, %v287
        %v300 = vpack.c.b16 %v292, %v290
        %v301 = vpack.c.b16 %v293, %v291
        %vm310 = vcmask 523264
        %v312 = vsel %vm310, %v269, 0
        %314 = vmatprep.subr.bf16.mxu0 0
        %315 = vmatpush1.bf16.msra.mxu0 0
        %316 = vmatprep.subr.bf16.mxu0 0
        %317 = vmatpush1.bf16.msra.mxu0 0
        %318 = vmatprep.subr.bf16.mxu0 0
        %319 = vmatpush1.bf16.msra.mxu0 0
        %320 = vmatprep.subr.bf16.mxu0 0
        %321 = vmatpush1.bf16.msra.mxu0 0
        %322 = vmatprep.subr.bf16.mxu0 %v301
        %323 = vmatpush1.bf16.msra.mxu0 %v300
        %324 = vmatprep.subr.bf16.mxu0 %v299
        %325 = vmatpush1.bf16.msra.mxu0 %v298
        %326 = vmatprep.subr.bf16.mxu0 %v297
        %327 = vmatpush1.bf16.msra.mxu0 %v296
        %328 = vmatprep.subr.bf16.mxu0 %v295
        %329 = vmatpush1.bf16.msra.mxu0 %v294
        %330 = vmatprep.subr.bf16.mxu0 0
        %331 = vmatpush2.bf16.msra.mxu0 0
        %332 = vmatprep.subr.bf16.mxu0 0
        %333 = vmatpush2.bf16.msra.mxu0 0
        %334 = vmatprep.subr.bf16.mxu0 0
        %335 = vmatpush2.bf16.msra.mxu0 0
        %336 = vmatprep.subr.bf16.mxu0 0
        %337 = vmatpush2.bf16.msra.mxu0 0
        %338 = vmatprep.subr.bf16.mxu0 0
        %339 = vmatpush2.bf16.msra.mxu0 0
        %340 = vmatprep.subr.bf16.mxu0 0
        %341 = vmatpush2.bf16.msra.mxu0 0
        %342 = vmatprep.subr.bf16.mxu0 0
        %343 = vmatpush2.bf16.msra.mxu0 0
        %344 = vmatprep.subr.bf16.mxu0 0
        %345 = vmatpush2.bf16.msra.mxu0 0
        %346 = vmatprep.mubr.bf16.mxu0 0
        %347 = vmatmul.mubr.bf16.gmra.mxu0 %v312
        %v348 = vpop.f32.mrf.mxu0
        %v349 = vadd.f32 0.0, %v348
        %v350 = vpop.f32.mrf.mxu0
        %v351 = vadd.f32 0.0, %v350
        %v352 = vpop.f32.mrf.mxu0
        %v353 = vadd.f32 0.0, %v352
        %v354 = vpop.f32.mrf.mxu0
        %v355 = vadd.f32 0.0, %v354
        %356 = vdwg.mxu0
        %359 = vrot.lane.b32.xlu0 %v349, 120
        %v360 = vpop.permute.xlu0 %359
        %361 = vrot.lane.b32.xlu0 %v353, 120
        %v362 = vpop.permute.xlu0 %361
        %365 = vrot.lane.b32.xlu0 %v349, 112
        %v366 = vpop.permute.xlu0 %365
        %367 = vrot.lane.b32.xlu0 %v353, 112
        %v368 = vpop.permute.xlu0 %367
        %371 = vrot.lane.b32.xlu0 %v349, 104
        %v372 = vpop.permute.xlu0 %371
        %373 = vrot.lane.b32.xlu0 %v353, 104
        %v374 = vpop.permute.xlu0 %373
        %377 = vrot.lane.b32.xlu0 %v349, 96
        %v378 = vpop.permute.xlu0 %377
        %379 = vrot.lane.b32.xlu0 %v353, 96
        %v380 = vpop.permute.xlu0 %379
        %383 = vrot.lane.b32.xlu0 %v349, 88
        %v384 = vpop.permute.xlu0 %383
        %385 = vrot.lane.b32.xlu0 %v353, 88
        %v386 = vpop.permute.xlu0 %385
        %389 = vrot.lane.b32.xlu0 %v349, 80
        %v390 = vpop.permute.xlu0 %389
        %391 = vrot.lane.b32.xlu0 %v353, 80
        %v392 = vpop.permute.xlu0 %391
        %395 = vrot.lane.b32.xlu0 %v349, 72
        %v396 = vpop.permute.xlu0 %395
        %397 = vrot.lane.b32.xlu0 %v353, 72
        %v398 = vpop.permute.xlu0 %397
        %v401 = vcombine.low %v349, %v366
        %v402 = vcombine.high %v349, %v366
        %v404 = vunpack.c.l.s4 1983009808
        %v405 = vunpack.c.0.s8 %v404
        %v406 = vlaneseq
        %v407 = vshrl.u32 %v406, 7
        %v408 = vsub.s32 %v405, %v407
        %v409 = vrot.slane %v401, %v408
        %v411 = vunpack.c.l.s4 1983009808
        %v412 = vunpack.c.0.s8 %v411
        %v413 = vlaneseq
        %v414 = vshrl.u32 %v413, 7
        %v415 = vsub.s32 %v412, %v414
        %v416 = vrot.slane %v402, %v415
        %v417 = vcombine.low %v360, %v372
        %v418 = vcombine.high %v360, %v372
        %v420 = vunpack.c.l.s4 1983009808
        %v421 = vunpack.c.0.s8 %v420
        %v422 = vlaneseq
        %v423 = vshrl.u32 %v422, 7
        %v424 = vsub.s32 %v421, %v423
        %v425 = vrot.slane %v417, %v424
        %v427 = vunpack.c.l.s4 1983009808
        %v428 = vunpack.c.0.s8 %v427
        %v429 = vlaneseq
        %v430 = vshrl.u32 %v429, 7
        %v431 = vsub.s32 %v428, %v430
        %v432 = vrot.slane %v418, %v431
        %v433 = vcombine.low %v378, %v390
        %v434 = vcombine.high %v378, %v390
        %v436 = vunpack.c.l.s4 1983009808
        %v437 = vunpack.c.0.s8 %v436
        %v438 = vlaneseq
        %v439 = vshrl.u32 %v438, 7
        %v440 = vsub.s32 %v437, %v439
        %v441 = vrot.slane %v433, %v440
        %v443 = vunpack.c.l.s4 1983009808
        %v444 = vunpack.c.0.s8 %v443
        %v445 = vlaneseq
        %v446 = vshrl.u32 %v445, 7
        %v447 = vsub.s32 %v444, %v446
        %v448 = vrot.slane %v434, %v447
        %v449 = vcombine.low %v384, %v396
        %v450 = vcombine.high %v384, %v396
        %v452 = vunpack.c.l.s4 1983009808
        %v453 = vunpack.c.0.s8 %v452
        %v454 = vlaneseq
        %v455 = vshrl.u32 %v454, 7
        %v456 = vsub.s32 %v453, %v455
        %v457 = vrot.slane %v449, %v456
        %v459 = vunpack.c.l.s4 1983009808
        %v460 = vunpack.c.0.s8 %v459
        %v461 = vlaneseq
        %v462 = vshrl.u32 %v461, 7
        %v463 = vsub.s32 %v460, %v462
        %v464 = vrot.slane %v450, %v463
        %v465 = vcombine.low %v409, %v425
        %v466 = vcombine.high %v409, %v425
        %v468 = vunpack.c.l.s4 1934713408
        %v469 = vunpack.c.0.s8 %v468
        %v470 = vlaneseq
        %v471 = vshrl.u32 %v470, 7
        %v472 = vsub.s32 %v469, %v471
        %v473 = vrot.slane %v465, %v472
        %v475 = vunpack.c.l.s4 1934713408
        %v476 = vunpack.c.0.s8 %v475
        %v477 = vlaneseq
        %v478 = vshrl.u32 %v477, 7
        %v479 = vsub.s32 %v476, %v478
        %v480 = vrot.slane %v466, %v479
        %v481 = vcombine.low %v416, %v432
        %v482 = vcombine.high %v416, %v432
        %v484 = vunpack.c.l.s4 1934713408
        %v485 = vunpack.c.0.s8 %v484
        %v486 = vlaneseq
        %v487 = vshrl.u32 %v486, 7
        %v488 = vsub.s32 %v485, %v487
        %v489 = vrot.slane %v481, %v488
        %v491 = vunpack.c.l.s4 1934713408
        %v492 = vunpack.c.0.s8 %v491
        %v493 = vlaneseq
        %v494 = vshrl.u32 %v493, 7
        %v495 = vsub.s32 %v492, %v494
        %v496 = vrot.slane %v482, %v495
        %v497 = vcombine.low %v441, %v457
        %v498 = vcombine.high %v441, %v457
        %v500 = vunpack.c.l.s4 1934713408
        %v501 = vunpack.c.0.s8 %v500
        %v502 = vlaneseq
        %v503 = vshrl.u32 %v502, 7
        %v504 = vsub.s32 %v501, %v503
        %v505 = vrot.slane %v497, %v504
        %v507 = vunpack.c.l.s4 1934713408
        %v508 = vunpack.c.0.s8 %v507
        %v509 = vlaneseq
        %v510 = vshrl.u32 %v509, 7
        %v511 = vsub.s32 %v508, %v510
        %v512 = vrot.slane %v498, %v511
        %v513 = vcombine.low %v448, %v464
        %v514 = vcombine.high %v448, %v464
        %v516 = vunpack.c.l.s4 1934713408
        %v517 = vunpack.c.0.s8 %v516
        %v518 = vlaneseq
        %v519 = vshrl.u32 %v518, 7
        %v520 = vsub.s32 %v517, %v519
        %v521 = vrot.slane %v513, %v520
        %v523 = vunpack.c.l.s4 1934713408
        %v524 = vunpack.c.0.s8 %v523
        %v525 = vlaneseq
        %v526 = vshrl.u32 %v525, 7
        %v527 = vsub.s32 %v524, %v526
        %v528 = vrot.slane %v514, %v527
        %v529 = vcombine.low %v473, %v505
        %v530 = vcombine.high %v473, %v505
        %v531 = vcombine.low %v480, %v512
        %v532 = vcombine.high %v480, %v512
        %v533 = vcombine.low %v489, %v521
        %v534 = vcombine.high %v489, %v521
        %v535 = vcombine.low %v496, %v528
        %v536 = vcombine.high %v496, %v528
        %v537 = vcombine.low %v353, %v368
        %v538 = vcombine.high %v353, %v368
        %v540 = vunpack.c.l.s4 1983009808
        %v541 = vunpack.c.0.s8 %v540
        %v542 = vlaneseq
        %v543 = vshrl.u32 %v542, 7
        %v544 = vsub.s32 %v541, %v543
        %v545 = vrot.slane %v537, %v544
        %v547 = vunpack.c.l.s4 1983009808
        %v548 = vunpack.c.0.s8 %v547
        %v549 = vlaneseq
        %v550 = vshrl.u32 %v549, 7
        %v551 = vsub.s32 %v548, %v550
        %v552 = vrot.slane %v538, %v551
        %v553 = vcombine.low %v362, %v374
        %v554 = vcombine.high %v362, %v374
        %v556 = vunpack.c.l.s4 1983009808
        %v557 = vunpack.c.0.s8 %v556
        %v558 = vlaneseq
        %v559 = vshrl.u32 %v558, 7
        %v560 = vsub.s32 %v557, %v559
        %v561 = vrot.slane %v553, %v560
        %v563 = vunpack.c.l.s4 1983009808
        %v564 = vunpack.c.0.s8 %v563
        %v565 = vlaneseq
        %v566 = vshrl.u32 %v565, 7
        %v567 = vsub.s32 %v564, %v566
        %v568 = vrot.slane %v554, %v567
        %v569 = vcombine.low %v380, %v392
        %v570 = vcombine.high %v380, %v392
        %v572 = vunpack.c.l.s4 1983009808
        %v573 = vunpack.c.0.s8 %v572
        %v574 = vlaneseq
        %v575 = vshrl.u32 %v574, 7
        %v576 = vsub.s32 %v573, %v575
        %v577 = vrot.slane %v569, %v576
        %v579 = vunpack.c.l.s4 1983009808
        %v580 = vunpack.c.0.s8 %v579
        %v581 = vlaneseq
        %v582 = vshrl.u32 %v581, 7
        %v583 = vsub.s32 %v580, %v582
        %v584 = vrot.slane %v570, %v583
        %v585 = vcombine.low %v386, %v398
        %v586 = vcombine.high %v386, %v398
        %v588 = vunpack.c.l.s4 1983009808
        %v589 = vunpack.c.0.s8 %v588
        %v590 = vlaneseq
        %v591 = vshrl.u32 %v590, 7
        %v592 = vsub.s32 %v589, %v591
        %v593 = vrot.slane %v585, %v592
        %v595 = vunpack.c.l.s4 1983009808
        %v596 = vunpack.c.0.s8 %v595
        %v597 = vlaneseq
        %v598 = vshrl.u32 %v597, 7
        %v599 = vsub.s32 %v596, %v598
        %v600 = vrot.slane %v586, %v599
        %v601 = vcombine.low %v545, %v561
        %v602 = vcombine.high %v545, %v561
        %v604 = vunpack.c.l.s4 1934713408
        %v605 = vunpack.c.0.s8 %v604
        %v606 = vlaneseq
        %v607 = vshrl.u32 %v606, 7
        %v608 = vsub.s32 %v605, %v607
        %v609 = vrot.slane %v601, %v608
        %v611 = vunpack.c.l.s4 1934713408
        %v612 = vunpack.c.0.s8 %v611
        %v613 = vlaneseq
        %v614 = vshrl.u32 %v613, 7
        %v615 = vsub.s32 %v612, %v614
        %v616 = vrot.slane %v602, %v615
        %v617 = vcombine.low %v552, %v568
        %v618 = vcombine.high %v552, %v568
        %v620 = vunpack.c.l.s4 1934713408
        %v621 = vunpack.c.0.s8 %v620
        %v622 = vlaneseq
        %v623 = vshrl.u32 %v622, 7
        %v624 = vsub.s32 %v621, %v623
        %v625 = vrot.slane %v617, %v624
        %v627 = vunpack.c.l.s4 1934713408
        %v628 = vunpack.c.0.s8 %v627
        %v629 = vlaneseq
        %v630 = vshrl.u32 %v629, 7
        %v631 = vsub.s32 %v628, %v630
        %v632 = vrot.slane %v618, %v631
        %v633 = vcombine.low %v577, %v593
        %v634 = vcombine.high %v577, %v593
        %v636 = vunpack.c.l.s4 1934713408
        %v637 = vunpack.c.0.s8 %v636
        %v638 = vlaneseq
        %v639 = vshrl.u32 %v638, 7
        %v640 = vsub.s32 %v637, %v639
        %v641 = vrot.slane %v633, %v640
        %v643 = vunpack.c.l.s4 1934713408
        %v644 = vunpack.c.0.s8 %v643
        %v645 = vlaneseq
        %v646 = vshrl.u32 %v645, 7
        %v647 = vsub.s32 %v644, %v646
        %v648 = vrot.slane %v634, %v647
        %v649 = vcombine.low %v584, %v600
        %v650 = vcombine.high %v584, %v600
        %v652 = vunpack.c.l.s4 1934713408
        %v653 = vunpack.c.0.s8 %v652
        %v654 = vlaneseq
        %v655 = vshrl.u32 %v654, 7
        %v656 = vsub.s32 %v653, %v655
        %v657 = vrot.slane %v649, %v656
        %v659 = vunpack.c.l.s4 1934713408
        %v660 = vunpack.c.0.s8 %v659
        %v661 = vlaneseq
        %v662 = vshrl.u32 %v661, 7
        %v663 = vsub.s32 %v660, %v662
        %v664 = vrot.slane %v650, %v663
        %v665 = vcombine.low %v609, %v641
        %v666 = vcombine.high %v609, %v641
        %v667 = vcombine.low %v616, %v648
        %v668 = vcombine.high %v616, %v648
        %v669 = vcombine.low %v625, %v657
        %v670 = vcombine.high %v625, %v657
        %v671 = vcombine.low %v632, %v664
        %v672 = vcombine.high %v632, %v664
        %v673 = vcombine.low %v529, %v531
        %v674 = vcombine.high %v529, %v531
        %v676 = vunpack.c.l.s4 1983009808
        %v677 = vunpack.c.0.s8 %v676
        %v678 = vlaneseq
        %v679 = vshrl.u32 %v678, 7
        %v680 = vsub.s32 %v677, %v679
        %v681 = vrot.slane %v673, %v680
        %v683 = vunpack.c.l.s4 1983009808
        %v684 = vunpack.c.0.s8 %v683
        %v685 = vlaneseq
        %v686 = vshrl.u32 %v685, 7
        %v687 = vsub.s32 %v684, %v686
        %v688 = vrot.slane %v674, %v687
        %v689 = vcombine.low %v530, %v532
        %v690 = vcombine.high %v530, %v532
        %v692 = vunpack.c.l.s4 1983009808
        %v693 = vunpack.c.0.s8 %v692
        %v694 = vlaneseq
        %v695 = vshrl.u32 %v694, 7
        %v696 = vsub.s32 %v693, %v695
        %v697 = vrot.slane %v689, %v696
        %v699 = vunpack.c.l.s4 1983009808
        %v700 = vunpack.c.0.s8 %v699
        %v701 = vlaneseq
        %v702 = vshrl.u32 %v701, 7
        %v703 = vsub.s32 %v700, %v702
        %v704 = vrot.slane %v690, %v703
        %v705 = vcombine.low %v533, %v535
        %v706 = vcombine.high %v533, %v535
        %v708 = vunpack.c.l.s4 1983009808
        %v709 = vunpack.c.0.s8 %v708
        %v710 = vlaneseq
        %v711 = vshrl.u32 %v710, 7
        %v712 = vsub.s32 %v709, %v711
        %v713 = vrot.slane %v705, %v712
        %v715 = vunpack.c.l.s4 1983009808
        %v716 = vunpack.c.0.s8 %v715
        %v717 = vlaneseq
        %v718 = vshrl.u32 %v717, 7
        %v719 = vsub.s32 %v716, %v718
        %v720 = vrot.slane %v706, %v719
        %v721 = vcombine.low %v534, %v536
        %v722 = vcombine.high %v534, %v536
        %v724 = vunpack.c.l.s4 1983009808
        %v725 = vunpack.c.0.s8 %v724
        %v726 = vlaneseq
        %v727 = vshrl.u32 %v726, 7
        %v728 = vsub.s32 %v725, %v727
        %v729 = vrot.slane %v721, %v728
        %v731 = vunpack.c.l.s4 1983009808
        %v732 = vunpack.c.0.s8 %v731
        %v733 = vlaneseq
        %v734 = vshrl.u32 %v733, 7
        %v735 = vsub.s32 %v732, %v734
        %v736 = vrot.slane %v722, %v735
        %v737 = vcombine.low %v681, %v697
        %v738 = vcombine.high %v681, %v697
        %v740 = vunpack.c.l.s4 1934713408
        %v741 = vunpack.c.0.s8 %v740
        %v742 = vlaneseq
        %v743 = vshrl.u32 %v742, 7
        %v744 = vsub.s32 %v741, %v743
        %v745 = vrot.slane %v737, %v744
        %v747 = vunpack.c.l.s4 1934713408
        %v748 = vunpack.c.0.s8 %v747
        %v749 = vlaneseq
        %v750 = vshrl.u32 %v749, 7
        %v751 = vsub.s32 %v748, %v750
        %v752 = vrot.slane %v738, %v751
        %v753 = vcombine.low %v688, %v704
        %v754 = vcombine.high %v688, %v704
        %v756 = vunpack.c.l.s4 1934713408
        %v757 = vunpack.c.0.s8 %v756
        %v758 = vlaneseq
        %v759 = vshrl.u32 %v758, 7
        %v760 = vsub.s32 %v757, %v759
        %v761 = vrot.slane %v753, %v760
        %v763 = vunpack.c.l.s4 1934713408
        %v764 = vunpack.c.0.s8 %v763
        %v765 = vlaneseq
        %v766 = vshrl.u32 %v765, 7
        %v767 = vsub.s32 %v764, %v766
        %v768 = vrot.slane %v754, %v767
        %v769 = vcombine.low %v713, %v729
        %v770 = vcombine.high %v713, %v729
        %v772 = vunpack.c.l.s4 1934713408
        %v773 = vunpack.c.0.s8 %v772
        %v774 = vlaneseq
        %v775 = vshrl.u32 %v774, 7
        %v776 = vsub.s32 %v773, %v775
        %v777 = vrot.slane %v769, %v776
        %v779 = vunpack.c.l.s4 1934713408
        %v780 = vunpack.c.0.s8 %v779
        %v781 = vlaneseq
        %v782 = vshrl.u32 %v781, 7
        %v783 = vsub.s32 %v780, %v782
        %v784 = vrot.slane %v770, %v783
        %v785 = vcombine.low %v720, %v736
        %v786 = vcombine.high %v720, %v736
        %v788 = vunpack.c.l.s4 1934713408
        %v789 = vunpack.c.0.s8 %v788
        %v790 = vlaneseq
        %v791 = vshrl.u32 %v790, 7
        %v792 = vsub.s32 %v789, %v791
        %v793 = vrot.slane %v785, %v792
        %v795 = vunpack.c.l.s4 1934713408
        %v796 = vunpack.c.0.s8 %v795
        %v797 = vlaneseq
        %v798 = vshrl.u32 %v797, 7
        %v799 = vsub.s32 %v796, %v798
        %v800 = vrot.slane %v786, %v799
        %v801 = vcombine.low %v745, %v777
        %v802 = vcombine.high %v745, %v777
        %v803 = vcombine.low %v752, %v784
        %v804 = vcombine.high %v752, %v784
        %v805 = vcombine.low %v761, %v793
        %v806 = vcombine.high %v761, %v793
        %v807 = vcombine.low %v768, %v800
        %v808 = vcombine.high %v768, %v800
        %v809 = vcombine.low %v665, %v667
        %v810 = vcombine.high %v665, %v667
        %v812 = vunpack.c.l.s4 1983009808
        %v813 = vunpack.c.0.s8 %v812
        %v814 = vlaneseq
        %v815 = vshrl.u32 %v814, 7
        %v816 = vsub.s32 %v813, %v815
        %v817 = vrot.slane %v809, %v816
        %v819 = vunpack.c.l.s4 1983009808
        %v820 = vunpack.c.0.s8 %v819
        %v821 = vlaneseq
        %v822 = vshrl.u32 %v821, 7
        %v823 = vsub.s32 %v820, %v822
        %v824 = vrot.slane %v810, %v823
        %v825 = vcombine.low %v666, %v668
        %v826 = vcombine.high %v666, %v668
        %v828 = vunpack.c.l.s4 1983009808
        %v829 = vunpack.c.0.s8 %v828
        %v830 = vlaneseq
        %v831 = vshrl.u32 %v830, 7
        %v832 = vsub.s32 %v829, %v831
        %v833 = vrot.slane %v825, %v832
        %v835 = vunpack.c.l.s4 1983009808
        %v836 = vunpack.c.0.s8 %v835
        %v837 = vlaneseq
        %v838 = vshrl.u32 %v837, 7
        %v839 = vsub.s32 %v836, %v838
        %v840 = vrot.slane %v826, %v839
        %v841 = vcombine.low %v669, %v671
        %v842 = vcombine.high %v669, %v671
        %v844 = vunpack.c.l.s4 1983009808
        %v845 = vunpack.c.0.s8 %v844
        %v846 = vlaneseq
        %v847 = vshrl.u32 %v846, 7
        %v848 = vsub.s32 %v845, %v847
        %v849 = vrot.slane %v841, %v848
        %v851 = vunpack.c.l.s4 1983009808
        %v852 = vunpack.c.0.s8 %v851
        %v853 = vlaneseq
        %v854 = vshrl.u32 %v853, 7
        %v855 = vsub.s32 %v852, %v854
        %v856 = vrot.slane %v842, %v855
        %v857 = vcombine.low %v670, %v672
        %v858 = vcombine.high %v670, %v672
        %v860 = vunpack.c.l.s4 1983009808
        %v861 = vunpack.c.0.s8 %v860
        %v862 = vlaneseq
        %v863 = vshrl.u32 %v862, 7
        %v864 = vsub.s32 %v861, %v863
        %v865 = vrot.slane %v857, %v864
        %v867 = vunpack.c.l.s4 1983009808
        %v868 = vunpack.c.0.s8 %v867
        %v869 = vlaneseq
        %v870 = vshrl.u32 %v869, 7
        %v871 = vsub.s32 %v868, %v870
        %v872 = vrot.slane %v858, %v871
        %v873 = vcombine.low %v817, %v833
        %v874 = vcombine.high %v817, %v833
        %v876 = vunpack.c.l.s4 1934713408
        %v877 = vunpack.c.0.s8 %v876
        %v878 = vlaneseq
        %v879 = vshrl.u32 %v878, 7
        %v880 = vsub.s32 %v877, %v879
        %v881 = vrot.slane %v873, %v880
        %v883 = vunpack.c.l.s4 1934713408
        %v884 = vunpack.c.0.s8 %v883
        %v885 = vlaneseq
        %v886 = vshrl.u32 %v885, 7
        %v887 = vsub.s32 %v884, %v886
        %v888 = vrot.slane %v874, %v887
        %v889 = vcombine.low %v824, %v840
        %v890 = vcombine.high %v824, %v840
        %v892 = vunpack.c.l.s4 1934713408
        %v893 = vunpack.c.0.s8 %v892
        %v894 = vlaneseq
        %v895 = vshrl.u32 %v894, 7
        %v896 = vsub.s32 %v893, %v895
        %v897 = vrot.slane %v889, %v896
        %v899 = vunpack.c.l.s4 1934713408
        %v900 = vunpack.c.0.s8 %v899
        %v901 = vlaneseq
        %v902 = vshrl.u32 %v901, 7
        %v903 = vsub.s32 %v900, %v902
        %v904 = vrot.slane %v890, %v903
        %v905 = vcombine.low %v849, %v865
        %v906 = vcombine.high %v849, %v865
        %v908 = vunpack.c.l.s4 1934713408
        %v909 = vunpack.c.0.s8 %v908
        %v910 = vlaneseq
        %v911 = vshrl.u32 %v910, 7
        %v912 = vsub.s32 %v909, %v911
        %v913 = vrot.slane %v905, %v912
        %v915 = vunpack.c.l.s4 1934713408
        %v916 = vunpack.c.0.s8 %v915
        %v917 = vlaneseq
        %v918 = vshrl.u32 %v917, 7
        %v919 = vsub.s32 %v916, %v918
        %v920 = vrot.slane %v906, %v919
        %v921 = vcombine.low %v856, %v872
        %v922 = vcombine.high %v856, %v872
        %v924 = vunpack.c.l.s4 1934713408
        %v925 = vunpack.c.0.s8 %v924
        %v926 = vlaneseq
        %v927 = vshrl.u32 %v926, 7
        %v928 = vsub.s32 %v925, %v927
        %v929 = vrot.slane %v921, %v928
        %v931 = vunpack.c.l.s4 1934713408
        %v932 = vunpack.c.0.s8 %v931
        %v933 = vlaneseq
        %v934 = vshrl.u32 %v933, 7
        %v935 = vsub.s32 %v932, %v934
        %v936 = vrot.slane %v922, %v935
        %v937 = vcombine.low %v881, %v913
        %v938 = vcombine.high %v881, %v913
        %v939 = vcombine.low %v888, %v920
        %v940 = vcombine.high %v888, %v920
        %v941 = vcombine.low %v897, %v929
        %v942 = vcombine.high %v897, %v929
        %v943 = vcombine.low %v904, %v936
        %v944 = vcombine.high %v904, %v936
        %v945 = vpack.c.bf16 %v937, %v801
        %v946 = vpack.c.bf16 %v938, %v802
        %v947 = vpack.c.bf16 %v939, %v803
        %v948 = vpack.c.bf16 %v940, %v804
        %v949 = vpack.c.bf16 %v941, %v805
        %v950 = vpack.c.bf16 %v942, %v806
        %v951 = vpack.c.bf16 %v943, %v807
        %v952 = vpack.c.bf16 %v944, %v808
        %953 = vrot.lane.b32.xlu0 %v349, 64
        %v954 = vpop.permute.xlu0 %953
        %955 = vrot.lane.b32.xlu0 %v353, 64
        %v956 = vpop.permute.xlu0 %955
        %957 = vrot.lane.b32.xlu0 %v360, 64
        %v958 = vpop.permute.xlu0 %957
        %959 = vrot.lane.b32.xlu0 %v362, 64
        %v960 = vpop.permute.xlu0 %959
        %961 = vrot.lane.b32.xlu0 %v366, 64
        %v962 = vpop.permute.xlu0 %961
        %963 = vrot.lane.b32.xlu0 %v368, 64
        %v964 = vpop.permute.xlu0 %963
        %965 = vrot.lane.b32.xlu0 %v372, 64
        %v966 = vpop.permute.xlu0 %965
        %967 = vrot.lane.b32.xlu0 %v374, 64
        %v968 = vpop.permute.xlu0 %967
        %969 = vrot.lane.b32.xlu0 %v378, 64
        %v970 = vpop.permute.xlu0 %969
        %971 = vrot.lane.b32.xlu0 %v380, 64
        %v972 = vpop.permute.xlu0 %971
        %973 = vrot.lane.b32.xlu0 %v384, 64
        %v974 = vpop.permute.xlu0 %973
        %975 = vrot.lane.b32.xlu0 %v386, 64
        %v976 = vpop.permute.xlu0 %975
        %977 = vrot.lane.b32.xlu0 %v390, 64
        %v978 = vpop.permute.xlu0 %977
        %979 = vrot.lane.b32.xlu0 %v392, 64
        %v980 = vpop.permute.xlu0 %979
        %981 = vrot.lane.b32.xlu0 %v396, 64
        %v982 = vpop.permute.xlu0 %981
        %983 = vrot.lane.b32.xlu0 %v398, 64
        %v984 = vpop.permute.xlu0 %983
        %v1001 = vcombine.low %v954, %v962
        %v1002 = vcombine.high %v954, %v962
        %v1004 = vunpack.c.l.s4 1983009808
        %v1005 = vunpack.c.0.s8 %v1004
        %v1006 = vlaneseq
        %v1007 = vshrl.u32 %v1006, 7
        %v1008 = vsub.s32 %v1005, %v1007
        %v1009 = vrot.slane %v1001, %v1008
        %v1011 = vunpack.c.l.s4 1983009808
        %v1012 = vunpack.c.0.s8 %v1011
        %v1013 = vlaneseq
        %v1014 = vshrl.u32 %v1013, 7
        %v1015 = vsub.s32 %v1012, %v1014
        %v1016 = vrot.slane %v1002, %v1015
        %v1017 = vcombine.low %v958, %v966
        %v1018 = vcombine.high %v958, %v966
        %v1020 = vunpack.c.l.s4 1983009808
        %v1021 = vunpack.c.0.s8 %v1020
        %v1022 = vlaneseq
        %v1023 = vshrl.u32 %v1022, 7
        %v1024 = vsub.s32 %v1021, %v1023
        %v1025 = vrot.slane %v1017, %v1024
        %v1027 = vunpack.c.l.s4 1983009808
        %v1028 = vunpack.c.0.s8 %v1027
        %v1029 = vlaneseq
        %v1030 = vshrl.u32 %v1029, 7
        %v1031 = vsub.s32 %v1028, %v1030
        %v1032 = vrot.slane %v1018, %v1031
        %v1033 = vcombine.low %v970, %v978
        %v1034 = vcombine.high %v970, %v978
        %v1036 = vunpack.c.l.s4 1983009808
        %v1037 = vunpack.c.0.s8 %v1036
        %v1038 = vlaneseq
        %v1039 = vshrl.u32 %v1038, 7
        %v1040 = vsub.s32 %v1037, %v1039
        %v1041 = vrot.slane %v1033, %v1040
        %v1043 = vunpack.c.l.s4 1983009808
        %v1044 = vunpack.c.0.s8 %v1043
        %v1045 = vlaneseq
        %v1046 = vshrl.u32 %v1045, 7
        %v1047 = vsub.s32 %v1044, %v1046
        %v1048 = vrot.slane %v1034, %v1047
        %v1049 = vcombine.low %v974, %v982
        %v1050 = vcombine.high %v974, %v982
        %v1052 = vunpack.c.l.s4 1983009808
        %v1053 = vunpack.c.0.s8 %v1052
        %v1054 = vlaneseq
        %v1055 = vshrl.u32 %v1054, 7
        %v1056 = vsub.s32 %v1053, %v1055
        %v1057 = vrot.slane %v1049, %v1056
        %v1059 = vunpack.c.l.s4 1983009808
        %v1060 = vunpack.c.0.s8 %v1059
        %v1061 = vlaneseq
        %v1062 = vshrl.u32 %v1061, 7
        %v1063 = vsub.s32 %v1060, %v1062
        %v1064 = vrot.slane %v1050, %v1063
        %v1065 = vcombine.low %v1009, %v1025
        %v1066 = vcombine.high %v1009, %v1025
        %v1068 = vunpack.c.l.s4 1934713408
        %v1069 = vunpack.c.0.s8 %v1068
        %v1070 = vlaneseq
        %v1071 = vshrl.u32 %v1070, 7
        %v1072 = vsub.s32 %v1069, %v1071
        %v1073 = vrot.slane %v1065, %v1072
        %v1075 = vunpack.c.l.s4 1934713408
        %v1076 = vunpack.c.0.s8 %v1075
        %v1077 = vlaneseq
        %v1078 = vshrl.u32 %v1077, 7
        %v1079 = vsub.s32 %v1076, %v1078
        %v1080 = vrot.slane %v1066, %v1079
        %v1081 = vcombine.low %v1016, %v1032
        %v1082 = vcombine.high %v1016, %v1032
        %v1084 = vunpack.c.l.s4 1934713408
        %v1085 = vunpack.c.0.s8 %v1084
        %v1086 = vlaneseq
        %v1087 = vshrl.u32 %v1086, 7
        %v1088 = vsub.s32 %v1085, %v1087
        %v1089 = vrot.slane %v1081, %v1088
        %v1091 = vunpack.c.l.s4 1934713408
        %v1092 = vunpack.c.0.s8 %v1091
        %v1093 = vlaneseq
        %v1094 = vshrl.u32 %v1093, 7
        %v1095 = vsub.s32 %v1092, %v1094
        %v1096 = vrot.slane %v1082, %v1095
        %v1097 = vcombine.low %v1041, %v1057
        %v1098 = vcombine.high %v1041, %v1057
        %v1100 = vunpack.c.l.s4 1934713408
        %v1101 = vunpack.c.0.s8 %v1100
        %v1102 = vlaneseq
        %v1103 = vshrl.u32 %v1102, 7
        %v1104 = vsub.s32 %v1101, %v1103
        %v1105 = vrot.slane %v1097, %v1104
        %v1107 = vunpack.c.l.s4 1934713408
        %v1108 = vunpack.c.0.s8 %v1107
        %v1109 = vlaneseq
        %v1110 = vshrl.u32 %v1109, 7
        %v1111 = vsub.s32 %v1108, %v1110
        %v1112 = vrot.slane %v1098, %v1111
        %v1113 = vcombine.low %v1048, %v1064
        %v1114 = vcombine.high %v1048, %v1064
        %v1116 = vunpack.c.l.s4 1934713408
        %v1117 = vunpack.c.0.s8 %v1116
        %v1118 = vlaneseq
        %v1119 = vshrl.u32 %v1118, 7
        %v1120 = vsub.s32 %v1117, %v1119
        %v1121 = vrot.slane %v1113, %v1120
        %v1123 = vunpack.c.l.s4 1934713408
        %v1124 = vunpack.c.0.s8 %v1123
        %v1125 = vlaneseq
        %v1126 = vshrl.u32 %v1125, 7
        %v1127 = vsub.s32 %v1124, %v1126
        %v1128 = vrot.slane %v1114, %v1127
        %v1129 = vcombine.low %v1073, %v1105
        %v1130 = vcombine.high %v1073, %v1105
        %v1131 = vcombine.low %v1080, %v1112
        %v1132 = vcombine.high %v1080, %v1112
        %v1133 = vcombine.low %v1089, %v1121
        %v1134 = vcombine.high %v1089, %v1121
        %v1135 = vcombine.low %v1096, %v1128
        %v1136 = vcombine.high %v1096, %v1128
        %v1137 = vcombine.low %v956, %v964
        %v1138 = vcombine.high %v956, %v964
        %v1140 = vunpack.c.l.s4 1983009808
        %v1141 = vunpack.c.0.s8 %v1140
        %v1142 = vlaneseq
        %v1143 = vshrl.u32 %v1142, 7
        %v1144 = vsub.s32 %v1141, %v1143
        %v1145 = vrot.slane %v1137, %v1144
        %v1147 = vunpack.c.l.s4 1983009808
        %v1148 = vunpack.c.0.s8 %v1147
        %v1149 = vlaneseq
        %v1150 = vshrl.u32 %v1149, 7
        %v1151 = vsub.s32 %v1148, %v1150
        %v1152 = vrot.slane %v1138, %v1151
        %v1153 = vcombine.low %v960, %v968
        %v1154 = vcombine.high %v960, %v968
        %v1156 = vunpack.c.l.s4 1983009808
        %v1157 = vunpack.c.0.s8 %v1156
        %v1158 = vlaneseq
        %v1159 = vshrl.u32 %v1158, 7
        %v1160 = vsub.s32 %v1157, %v1159
        %v1161 = vrot.slane %v1153, %v1160
        %v1163 = vunpack.c.l.s4 1983009808
        %v1164 = vunpack.c.0.s8 %v1163
        %v1165 = vlaneseq
        %v1166 = vshrl.u32 %v1165, 7
        %v1167 = vsub.s32 %v1164, %v1166
        %v1168 = vrot.slane %v1154, %v1167
        %v1169 = vcombine.low %v972, %v980
        %v1170 = vcombine.high %v972, %v980
        %v1172 = vunpack.c.l.s4 1983009808
        %v1173 = vunpack.c.0.s8 %v1172
        %v1174 = vlaneseq
        %v1175 = vshrl.u32 %v1174, 7
        %v1176 = vsub.s32 %v1173, %v1175
        %v1177 = vrot.slane %v1169, %v1176
        %v1179 = vunpack.c.l.s4 1983009808
        %v1180 = vunpack.c.0.s8 %v1179
        %v1181 = vlaneseq
        %v1182 = vshrl.u32 %v1181, 7
        %v1183 = vsub.s32 %v1180, %v1182
        %v1184 = vrot.slane %v1170, %v1183
        %v1185 = vcombine.low %v976, %v984
        %v1186 = vcombine.high %v976, %v984
        %v1188 = vunpack.c.l.s4 1983009808
        %v1189 = vunpack.c.0.s8 %v1188
        %v1190 = vlaneseq
        %v1191 = vshrl.u32 %v1190, 7
        %v1192 = vsub.s32 %v1189, %v1191
        %v1193 = vrot.slane %v1185, %v1192
        %v1195 = vunpack.c.l.s4 1983009808
        %v1196 = vunpack.c.0.s8 %v1195
        %v1197 = vlaneseq
        %v1198 = vshrl.u32 %v1197, 7
        %v1199 = vsub.s32 %v1196, %v1198
        %v1200 = vrot.slane %v1186, %v1199
        %v1201 = vcombine.low %v1145, %v1161
        %v1202 = vcombine.high %v1145, %v1161
        %v1204 = vunpack.c.l.s4 1934713408
        %v1205 = vunpack.c.0.s8 %v1204
        %v1206 = vlaneseq
        %v1207 = vshrl.u32 %v1206, 7
        %v1208 = vsub.s32 %v1205, %v1207
        %v1209 = vrot.slane %v1201, %v1208
        %v1211 = vunpack.c.l.s4 1934713408
        %v1212 = vunpack.c.0.s8 %v1211
        %v1213 = vlaneseq
        %v1214 = vshrl.u32 %v1213, 7
        %v1215 = vsub.s32 %v1212, %v1214
        %v1216 = vrot.slane %v1202, %v1215
        %v1217 = vcombine.low %v1152, %v1168
        %v1218 = vcombine.high %v1152, %v1168
        %v1220 = vunpack.c.l.s4 1934713408
        %v1221 = vunpack.c.0.s8 %v1220
        %v1222 = vlaneseq
        %v1223 = vshrl.u32 %v1222, 7
        %v1224 = vsub.s32 %v1221, %v1223
        %v1225 = vrot.slane %v1217, %v1224
        %v1227 = vunpack.c.l.s4 1934713408
        %v1228 = vunpack.c.0.s8 %v1227
        %v1229 = vlaneseq
        %v1230 = vshrl.u32 %v1229, 7
        %v1231 = vsub.s32 %v1228, %v1230
        %v1232 = vrot.slane %v1218, %v1231
        %v1233 = vcombine.low %v1177, %v1193
        %v1234 = vcombine.high %v1177, %v1193
        %v1236 = vunpack.c.l.s4 1934713408
        %v1237 = vunpack.c.0.s8 %v1236
        %v1238 = vlaneseq
        %v1239 = vshrl.u32 %v1238, 7
        %v1240 = vsub.s32 %v1237, %v1239
        %v1241 = vrot.slane %v1233, %v1240
        %v1243 = vunpack.c.l.s4 1934713408
        %v1244 = vunpack.c.0.s8 %v1243
        %v1245 = vlaneseq
        %v1246 = vshrl.u32 %v1245, 7
        %v1247 = vsub.s32 %v1244, %v1246
        %v1248 = vrot.slane %v1234, %v1247
        %v1249 = vcombine.low %v1184, %v1200
        %v1250 = vcombine.high %v1184, %v1200
        %v1252 = vunpack.c.l.s4 1934713408
        %v1253 = vunpack.c.0.s8 %v1252
        %v1254 = vlaneseq
        %v1255 = vshrl.u32 %v1254, 7
        %v1256 = vsub.s32 %v1253, %v1255
        %v1257 = vrot.slane %v1249, %v1256
        %v1259 = vunpack.c.l.s4 1934713408
        %v1260 = vunpack.c.0.s8 %v1259
        %v1261 = vlaneseq
        %v1262 = vshrl.u32 %v1261, 7
        %v1263 = vsub.s32 %v1260, %v1262
        %v1264 = vrot.slane %v1250, %v1263
        %v1265 = vcombine.low %v1209, %v1241
        %v1266 = vcombine.high %v1209, %v1241
        %v1267 = vcombine.low %v1216, %v1248
        %v1268 = vcombine.high %v1216, %v1248
        %v1269 = vcombine.low %v1225, %v1257
        %v1270 = vcombine.high %v1225, %v1257
        %v1271 = vcombine.low %v1232, %v1264
        %v1272 = vcombine.high %v1232, %v1264
        %v1273 = vcombine.low %v1129, %v1131
        %v1274 = vcombine.high %v1129, %v1131
        %v1276 = vunpack.c.l.s4 1983009808
        %v1277 = vunpack.c.0.s8 %v1276
        %v1278 = vlaneseq
        %v1279 = vshrl.u32 %v1278, 7
        %v1280 = vsub.s32 %v1277, %v1279
        %v1281 = vrot.slane %v1273, %v1280
        %v1283 = vunpack.c.l.s4 1983009808
        %v1284 = vunpack.c.0.s8 %v1283
        %v1285 = vlaneseq
        %v1286 = vshrl.u32 %v1285, 7
        %v1287 = vsub.s32 %v1284, %v1286
        %v1288 = vrot.slane %v1274, %v1287
        %v1289 = vcombine.low %v1130, %v1132
        %v1290 = vcombine.high %v1130, %v1132
        %v1292 = vunpack.c.l.s4 1983009808
        %v1293 = vunpack.c.0.s8 %v1292
        %v1294 = vlaneseq
        %v1295 = vshrl.u32 %v1294, 7
        %v1296 = vsub.s32 %v1293, %v1295
        %v1297 = vrot.slane %v1289, %v1296
        %v1299 = vunpack.c.l.s4 1983009808
        %v1300 = vunpack.c.0.s8 %v1299
        %v1301 = vlaneseq
        %v1302 = vshrl.u32 %v1301, 7
        %v1303 = vsub.s32 %v1300, %v1302
        %v1304 = vrot.slane %v1290, %v1303
        %v1305 = vcombine.low %v1133, %v1135
        %v1306 = vcombine.high %v1133, %v1135
        %v1308 = vunpack.c.l.s4 1983009808
        %v1309 = vunpack.c.0.s8 %v1308
        %v1310 = vlaneseq
        %v1311 = vshrl.u32 %v1310, 7
        %v1312 = vsub.s32 %v1309, %v1311
        %v1313 = vrot.slane %v1305, %v1312
        %v1315 = vunpack.c.l.s4 1983009808
        %v1316 = vunpack.c.0.s8 %v1315
        %v1317 = vlaneseq
        %v1318 = vshrl.u32 %v1317, 7
        %v1319 = vsub.s32 %v1316, %v1318
        %v1320 = vrot.slane %v1306, %v1319
        %v1321 = vcombine.low %v1134, %v1136
        %v1322 = vcombine.high %v1134, %v1136
        %v1324 = vunpack.c.l.s4 1983009808
        %v1325 = vunpack.c.0.s8 %v1324
        %v1326 = vlaneseq
        %v1327 = vshrl.u32 %v1326, 7
        %v1328 = vsub.s32 %v1325, %v1327
        %v1329 = vrot.slane %v1321, %v1328
        %v1331 = vunpack.c.l.s4 1983009808
        %v1332 = vunpack.c.0.s8 %v1331
        %v1333 = vlaneseq
        %v1334 = vshrl.u32 %v1333, 7
        %v1335 = vsub.s32 %v1332, %v1334
        %v1336 = vrot.slane %v1322, %v1335
        %v1337 = vcombine.low %v1281, %v1297
        %v1338 = vcombine.high %v1281, %v1297
        %v1340 = vunpack.c.l.s4 1934713408
        %v1341 = vunpack.c.0.s8 %v1340
        %v1342 = vlaneseq
        %v1343 = vshrl.u32 %v1342, 7
        %v1344 = vsub.s32 %v1341, %v1343
        %v1345 = vrot.slane %v1337, %v1344
        %v1347 = vunpack.c.l.s4 1934713408
        %v1348 = vunpack.c.0.s8 %v1347
        %v1349 = vlaneseq
        %v1350 = vshrl.u32 %v1349, 7
        %v1351 = vsub.s32 %v1348, %v1350
        %v1352 = vrot.slane %v1338, %v1351
        %v1353 = vcombine.low %v1288, %v1304
        %v1354 = vcombine.high %v1288, %v1304
        %v1356 = vunpack.c.l.s4 1934713408
        %v1357 = vunpack.c.0.s8 %v1356
        %v1358 = vlaneseq
        %v1359 = vshrl.u32 %v1358, 7
        %v1360 = vsub.s32 %v1357, %v1359
        %v1361 = vrot.slane %v1353, %v1360
        %v1363 = vunpack.c.l.s4 1934713408
        %v1364 = vunpack.c.0.s8 %v1363
        %v1365 = vlaneseq
        %v1366 = vshrl.u32 %v1365, 7
        %v1367 = vsub.s32 %v1364, %v1366
        %v1368 = vrot.slane %v1354, %v1367
        %v1369 = vcombine.low %v1313, %v1329
        %v1370 = vcombine.high %v1313, %v1329
        %v1372 = vunpack.c.l.s4 1934713408
        %v1373 = vunpack.c.0.s8 %v1372
        %v1374 = vlaneseq
        %v1375 = vshrl.u32 %v1374, 7
        %v1376 = vsub.s32 %v1373, %v1375
        %v1377 = vrot.slane %v1369, %v1376
        %v1379 = vunpack.c.l.s4 1934713408
        %v1380 = vunpack.c.0.s8 %v1379
        %v1381 = vlaneseq
        %v1382 = vshrl.u32 %v1381, 7
        %v1383 = vsub.s32 %v1380, %v1382
        %v1384 = vrot.slane %v1370, %v1383
        %v1385 = vcombine.low %v1320, %v1336
        %v1386 = vcombine.high %v1320, %v1336
        %v1388 = vunpack.c.l.s4 1934713408
        %v1389 = vunpack.c.0.s8 %v1388
        %v1390 = vlaneseq
        %v1391 = vshrl.u32 %v1390, 7
        %v1392 = vsub.s32 %v1389, %v1391
        %v1393 = vrot.slane %v1385, %v1392
        %v1395 = vunpack.c.l.s4 1934713408
        %v1396 = vunpack.c.0.s8 %v1395
        %v1397 = vlaneseq
        %v1398 = vshrl.u32 %v1397, 7
        %v1399 = vsub.s32 %v1396, %v1398
        %v1400 = vrot.slane %v1386, %v1399
        %v1401 = vcombine.low %v1345, %v1377
        %v1402 = vcombine.high %v1345, %v1377
        %v1403 = vcombine.low %v1352, %v1384
        %v1404 = vcombine.high %v1352, %v1384
        %v1405 = vcombine.low %v1361, %v1393
        %v1406 = vcombine.high %v1361, %v1393
        %v1407 = vcombine.low %v1368, %v1400
        %v1408 = vcombine.high %v1368, %v1400
        %v1409 = vcombine.low %v1265, %v1267
        %v1410 = vcombine.high %v1265, %v1267
        %v1412 = vunpack.c.l.s4 1983009808
        %v1413 = vunpack.c.0.s8 %v1412
        %v1414 = vlaneseq
        %v1415 = vshrl.u32 %v1414, 7
        %v1416 = vsub.s32 %v1413, %v1415
        %v1417 = vrot.slane %v1409, %v1416
        %v1419 = vunpack.c.l.s4 1983009808
        %v1420 = vunpack.c.0.s8 %v1419
        %v1421 = vlaneseq
        %v1422 = vshrl.u32 %v1421, 7
        %v1423 = vsub.s32 %v1420, %v1422
        %v1424 = vrot.slane %v1410, %v1423
        %v1425 = vcombine.low %v1266, %v1268
        %v1426 = vcombine.high %v1266, %v1268
        %v1428 = vunpack.c.l.s4 1983009808
        %v1429 = vunpack.c.0.s8 %v1428
        %v1430 = vlaneseq
        %v1431 = vshrl.u32 %v1430, 7
        %v1432 = vsub.s32 %v1429, %v1431
        %v1433 = vrot.slane %v1425, %v1432
        %v1435 = vunpack.c.l.s4 1983009808
        %v1436 = vunpack.c.0.s8 %v1435
        %v1437 = vlaneseq
        %v1438 = vshrl.u32 %v1437, 7
        %v1439 = vsub.s32 %v1436, %v1438
        %v1440 = vrot.slane %v1426, %v1439
        %v1441 = vcombine.low %v1269, %v1271
        %v1442 = vcombine.high %v1269, %v1271
        %v1444 = vunpack.c.l.s4 1983009808
        %v1445 = vunpack.c.0.s8 %v1444
        %v1446 = vlaneseq
        %v1447 = vshrl.u32 %v1446, 7
        %v1448 = vsub.s32 %v1445, %v1447
        %v1449 = vrot.slane %v1441, %v1448
        %v1451 = vunpack.c.l.s4 1983009808
        %v1452 = vunpack.c.0.s8 %v1451
        %v1453 = vlaneseq
        %v1454 = vshrl.u32 %v1453, 7
        %v1455 = vsub.s32 %v1452, %v1454
        %v1456 = vrot.slane %v1442, %v1455
        %v1457 = vcombine.low %v1270, %v1272
        %v1458 = vcombine.high %v1270, %v1272
        %v1460 = vunpack.c.l.s4 1983009808
        %v1461 = vunpack.c.0.s8 %v1460
        %v1462 = vlaneseq
        %v1463 = vshrl.u32 %v1462, 7
        %v1464 = vsub.s32 %v1461, %v1463
        %v1465 = vrot.slane %v1457, %v1464
        %v1467 = vunpack.c.l.s4 1983009808
        %v1468 = vunpack.c.0.s8 %v1467
        %v1469 = vlaneseq
        %v1470 = vshrl.u32 %v1469, 7
        %v1471 = vsub.s32 %v1468, %v1470
        %v1472 = vrot.slane %v1458, %v1471
        %v1473 = vcombine.low %v1417, %v1433
        %v1474 = vcombine.high %v1417, %v1433
        %v1476 = vunpack.c.l.s4 1934713408
        %v1477 = vunpack.c.0.s8 %v1476
        %v1478 = vlaneseq
        %v1479 = vshrl.u32 %v1478, 7
        %v1480 = vsub.s32 %v1477, %v1479
        %v1481 = vrot.slane %v1473, %v1480
        %v1483 = vunpack.c.l.s4 1934713408
        %v1484 = vunpack.c.0.s8 %v1483
        %v1485 = vlaneseq
        %v1486 = vshrl.u32 %v1485, 7
        %v1487 = vsub.s32 %v1484, %v1486
        %v1488 = vrot.slane %v1474, %v1487
        %v1489 = vcombine.low %v1424, %v1440
        %v1490 = vcombine.high %v1424, %v1440
        %v1492 = vunpack.c.l.s4 1934713408
        %v1493 = vunpack.c.0.s8 %v1492
        %v1494 = vlaneseq
        %v1495 = vshrl.u32 %v1494, 7
        %v1496 = vsub.s32 %v1493, %v1495
        %v1497 = vrot.slane %v1489, %v1496
        %v1499 = vunpack.c.l.s4 1934713408
        %v1500 = vunpack.c.0.s8 %v1499
        %v1501 = vlaneseq
        %v1502 = vshrl.u32 %v1501, 7
        %v1503 = vsub.s32 %v1500, %v1502
        %v1504 = vrot.slane %v1490, %v1503
        %v1505 = vcombine.low %v1449, %v1465
        %v1506 = vcombine.high %v1449, %v1465
        %v1508 = vunpack.c.l.s4 1934713408
        %v1509 = vunpack.c.0.s8 %v1508
        %v1510 = vlaneseq
        %v1511 = vshrl.u32 %v1510, 7
        %v1512 = vsub.s32 %v1509, %v1511
        %v1513 = vrot.slane %v1505, %v1512
        %v1515 = vunpack.c.l.s4 1934713408
        %v1516 = vunpack.c.0.s8 %v1515
        %v1517 = vlaneseq
        %v1518 = vshrl.u32 %v1517, 7
        %v1519 = vsub.s32 %v1516, %v1518
        %v1520 = vrot.slane %v1506, %v1519
        %v1521 = vcombine.low %v1456, %v1472
        %v1522 = vcombine.high %v1456, %v1472
        %v1524 = vunpack.c.l.s4 1934713408
        %v1525 = vunpack.c.0.s8 %v1524
        %v1526 = vlaneseq
        %v1527 = vshrl.u32 %v1526, 7
        %v1528 = vsub.s32 %v1525, %v1527
        %v1529 = vrot.slane %v1521, %v1528
        %v1531 = vunpack.c.l.s4 1934713408
        %v1532 = vunpack.c.0.s8 %v1531
        %v1533 = vlaneseq
        %v1534 = vshrl.u32 %v1533, 7
        %v1535 = vsub.s32 %v1532, %v1534
        %v1536 = vrot.slane %v1522, %v1535
        %v1537 = vcombine.low %v1481, %v1513
        %v1538 = vcombine.high %v1481, %v1513
        %v1539 = vcombine.low %v1488, %v1520
        %v1540 = vcombine.high %v1488, %v1520
        %v1541 = vcombine.low %v1497, %v1529
        %v1542 = vcombine.high %v1497, %v1529
        %v1543 = vcombine.low %v1504, %v1536
        %v1544 = vcombine.high %v1504, %v1536
        %v1545 = vpack.c.bf16 %v1537, %v1401
        %v1546 = vpack.c.bf16 %v1538, %v1402
        %v1547 = vpack.c.bf16 %v1539, %v1403
        %v1548 = vpack.c.bf16 %v1540, %v1404
        %v1549 = vpack.c.bf16 %v1541, %v1405
        %v1550 = vpack.c.bf16 %v1542, %v1406
        %v1551 = vpack.c.bf16 %v1543, %v1407
        %v1552 = vpack.c.bf16 %v1544, %v1408
        %1555 = vrot.lane.b32.xlu0 %v351, 120
        %v1556 = vpop.permute.xlu0 %1555
        %1557 = vrot.lane.b32.xlu0 %v355, 120
        %v1558 = vpop.permute.xlu0 %1557
        %1561 = vrot.lane.b32.xlu0 %v351, 112
        %v1562 = vpop.permute.xlu0 %1561
        %1563 = vrot.lane.b32.xlu0 %v355, 112
        %v1564 = vpop.permute.xlu0 %1563
        %1567 = vrot.lane.b32.xlu0 %v351, 104
        %v1568 = vpop.permute.xlu0 %1567
        %1569 = vrot.lane.b32.xlu0 %v355, 104
        %v1570 = vpop.permute.xlu0 %1569
        %1573 = vrot.lane.b32.xlu0 %v351, 96
        %v1574 = vpop.permute.xlu0 %1573
        %1575 = vrot.lane.b32.xlu0 %v355, 96
        %v1576 = vpop.permute.xlu0 %1575
        %1579 = vrot.lane.b32.xlu0 %v351, 88
        %v1580 = vpop.permute.xlu0 %1579
        %1581 = vrot.lane.b32.xlu0 %v355, 88
        %v1582 = vpop.permute.xlu0 %1581
        %1585 = vrot.lane.b32.xlu0 %v351, 80
        %v1586 = vpop.permute.xlu0 %1585
        %1587 = vrot.lane.b32.xlu0 %v355, 80
        %v1588 = vpop.permute.xlu0 %1587
        %1591 = vrot.lane.b32.xlu0 %v351, 72
        %v1592 = vpop.permute.xlu0 %1591
        %1593 = vrot.lane.b32.xlu0 %v355, 72
        %v1594 = vpop.permute.xlu0 %1593
        %v1597 = vcombine.low %v351, %v1562
        %v1598 = vcombine.high %v351, %v1562
        %v1600 = vunpack.c.l.s4 1983009808
        %v1601 = vunpack.c.0.s8 %v1600
        %v1602 = vlaneseq
        %v1603 = vshrl.u32 %v1602, 7
        %v1604 = vsub.s32 %v1601, %v1603
        %v1605 = vrot.slane %v1597, %v1604
        %v1607 = vunpack.c.l.s4 1983009808
        %v1608 = vunpack.c.0.s8 %v1607
        %v1609 = vlaneseq
        %v1610 = vshrl.u32 %v1609, 7
        %v1611 = vsub.s32 %v1608, %v1610
        %v1612 = vrot.slane %v1598, %v1611
        %v1613 = vcombine.low %v1556, %v1568
        %v1614 = vcombine.high %v1556, %v1568
        %v1616 = vunpack.c.l.s4 1983009808
        %v1617 = vunpack.c.0.s8 %v1616
        %v1618 = vlaneseq
        %v1619 = vshrl.u32 %v1618, 7
        %v1620 = vsub.s32 %v1617, %v1619
        %v1621 = vrot.slane %v1613, %v1620
        %v1623 = vunpack.c.l.s4 1983009808
        %v1624 = vunpack.c.0.s8 %v1623
        %v1625 = vlaneseq
        %v1626 = vshrl.u32 %v1625, 7
        %v1627 = vsub.s32 %v1624, %v1626
        %v1628 = vrot.slane %v1614, %v1627
        %v1629 = vcombine.low %v1574, %v1586
        %v1630 = vcombine.high %v1574, %v1586
        %v1632 = vunpack.c.l.s4 1983009808
        %v1633 = vunpack.c.0.s8 %v1632
        %v1634 = vlaneseq
        %v1635 = vshrl.u32 %v1634, 7
        %v1636 = vsub.s32 %v1633, %v1635
        %v1637 = vrot.slane %v1629, %v1636
        %v1639 = vunpack.c.l.s4 1983009808
        %v1640 = vunpack.c.0.s8 %v1639
        %v1641 = vlaneseq
        %v1642 = vshrl.u32 %v1641, 7
        %v1643 = vsub.s32 %v1640, %v1642
        %v1644 = vrot.slane %v1630, %v1643
        %v1645 = vcombine.low %v1580, %v1592
        %v1646 = vcombine.high %v1580, %v1592
        %v1648 = vunpack.c.l.s4 1983009808
        %v1649 = vunpack.c.0.s8 %v1648
        %v1650 = vlaneseq
        %v1651 = vshrl.u32 %v1650, 7
        %v1652 = vsub.s32 %v1649, %v1651
        %v1653 = vrot.slane %v1645, %v1652
        %v1655 = vunpack.c.l.s4 1983009808
        %v1656 = vunpack.c.0.s8 %v1655
        %v1657 = vlaneseq
        %v1658 = vshrl.u32 %v1657, 7
        %v1659 = vsub.s32 %v1656, %v1658
        %v1660 = vrot.slane %v1646, %v1659
        %v1661 = vcombine.low %v1605, %v1621
        %v1662 = vcombine.high %v1605, %v1621
        %v1664 = vunpack.c.l.s4 1934713408
        %v1665 = vunpack.c.0.s8 %v1664
        %v1666 = vlaneseq
        %v1667 = vshrl.u32 %v1666, 7
        %v1668 = vsub.s32 %v1665, %v1667
        %v1669 = vrot.slane %v1661, %v1668
        %v1671 = vunpack.c.l.s4 1934713408
        %v1672 = vunpack.c.0.s8 %v1671
        %v1673 = vlaneseq
        %v1674 = vshrl.u32 %v1673, 7
        %v1675 = vsub.s32 %v1672, %v1674
        %v1676 = vrot.slane %v1662, %v1675
        %v1677 = vcombine.low %v1612, %v1628
        %v1678 = vcombine.high %v1612, %v1628
        %v1680 = vunpack.c.l.s4 1934713408
        %v1681 = vunpack.c.0.s8 %v1680
        %v1682 = vlaneseq
        %v1683 = vshrl.u32 %v1682, 7
        %v1684 = vsub.s32 %v1681, %v1683
        %v1685 = vrot.slane %v1677, %v1684
        %v1687 = vunpack.c.l.s4 1934713408
        %v1688 = vunpack.c.0.s8 %v1687
        %v1689 = vlaneseq
        %v1690 = vshrl.u32 %v1689, 7
        %v1691 = vsub.s32 %v1688, %v1690
        %v1692 = vrot.slane %v1678, %v1691
        %v1693 = vcombine.low %v1637, %v1653
        %v1694 = vcombine.high %v1637, %v1653
        %v1696 = vunpack.c.l.s4 1934713408
        %v1697 = vunpack.c.0.s8 %v1696
        %v1698 = vlaneseq
        %v1699 = vshrl.u32 %v1698, 7
        %v1700 = vsub.s32 %v1697, %v1699
        %v1701 = vrot.slane %v1693, %v1700
        %v1703 = vunpack.c.l.s4 1934713408
        %v1704 = vunpack.c.0.s8 %v1703
        %v1705 = vlaneseq
        %v1706 = vshrl.u32 %v1705, 7
        %v1707 = vsub.s32 %v1704, %v1706
        %v1708 = vrot.slane %v1694, %v1707
        %v1709 = vcombine.low %v1644, %v1660
        %v1710 = vcombine.high %v1644, %v1660
        %v1712 = vunpack.c.l.s4 1934713408
        %v1713 = vunpack.c.0.s8 %v1712
        %v1714 = vlaneseq
        %v1715 = vshrl.u32 %v1714, 7
        %v1716 = vsub.s32 %v1713, %v1715
        %v1717 = vrot.slane %v1709, %v1716
        %v1719 = vunpack.c.l.s4 1934713408
        %v1720 = vunpack.c.0.s8 %v1719
        %v1721 = vlaneseq
        %v1722 = vshrl.u32 %v1721, 7
        %v1723 = vsub.s32 %v1720, %v1722
        %v1724 = vrot.slane %v1710, %v1723
        %v1725 = vcombine.low %v1669, %v1701
        %v1726 = vcombine.high %v1669, %v1701
        %v1727 = vcombine.low %v1676, %v1708
        %v1728 = vcombine.high %v1676, %v1708
        %v1729 = vcombine.low %v1685, %v1717
        %v1730 = vcombine.high %v1685, %v1717
        %v1731 = vcombine.low %v1692, %v1724
        %v1732 = vcombine.high %v1692, %v1724
        %v1733 = vcombine.low %v355, %v1564
        %v1734 = vcombine.high %v355, %v1564
        %v1736 = vunpack.c.l.s4 1983009808
        %v1737 = vunpack.c.0.s8 %v1736
        %v1738 = vlaneseq
        %v1739 = vshrl.u32 %v1738, 7
        %v1740 = vsub.s32 %v1737, %v1739
        %v1741 = vrot.slane %v1733, %v1740
        %v1743 = vunpack.c.l.s4 1983009808
        %v1744 = vunpack.c.0.s8 %v1743
        %v1745 = vlaneseq
        %v1746 = vshrl.u32 %v1745, 7
        %v1747 = vsub.s32 %v1744, %v1746
        %v1748 = vrot.slane %v1734, %v1747
        %v1749 = vcombine.low %v1558, %v1570
        %v1750 = vcombine.high %v1558, %v1570
        %v1752 = vunpack.c.l.s4 1983009808
        %v1753 = vunpack.c.0.s8 %v1752
        %v1754 = vlaneseq
        %v1755 = vshrl.u32 %v1754, 7
        %v1756 = vsub.s32 %v1753, %v1755
        %v1757 = vrot.slane %v1749, %v1756
        %v1759 = vunpack.c.l.s4 1983009808
        %v1760 = vunpack.c.0.s8 %v1759
        %v1761 = vlaneseq
        %v1762 = vshrl.u32 %v1761, 7
        %v1763 = vsub.s32 %v1760, %v1762
        %v1764 = vrot.slane %v1750, %v1763
        %v1765 = vcombine.low %v1576, %v1588
        %v1766 = vcombine.high %v1576, %v1588
        %v1768 = vunpack.c.l.s4 1983009808
        %v1769 = vunpack.c.0.s8 %v1768
        %v1770 = vlaneseq
        %v1771 = vshrl.u32 %v1770, 7
        %v1772 = vsub.s32 %v1769, %v1771
        %v1773 = vrot.slane %v1765, %v1772
        %v1775 = vunpack.c.l.s4 1983009808
        %v1776 = vunpack.c.0.s8 %v1775
        %v1777 = vlaneseq
        %v1778 = vshrl.u32 %v1777, 7
        %v1779 = vsub.s32 %v1776, %v1778
        %v1780 = vrot.slane %v1766, %v1779
        %v1781 = vcombine.low %v1582, %v1594
        %v1782 = vcombine.high %v1582, %v1594
        %v1784 = vunpack.c.l.s4 1983009808
        %v1785 = vunpack.c.0.s8 %v1784
        %v1786 = vlaneseq
        %v1787 = vshrl.u32 %v1786, 7
        %v1788 = vsub.s32 %v1785, %v1787
        %v1789 = vrot.slane %v1781, %v1788
        %v1791 = vunpack.c.l.s4 1983009808
        %v1792 = vunpack.c.0.s8 %v1791
        %v1793 = vlaneseq
        %v1794 = vshrl.u32 %v1793, 7
        %v1795 = vsub.s32 %v1792, %v1794
        %v1796 = vrot.slane %v1782, %v1795
        %v1797 = vcombine.low %v1741, %v1757
        %v1798 = vcombine.high %v1741, %v1757
        %v1800 = vunpack.c.l.s4 1934713408
        %v1801 = vunpack.c.0.s8 %v1800
        %v1802 = vlaneseq
        %v1803 = vshrl.u32 %v1802, 7
        %v1804 = vsub.s32 %v1801, %v1803
        %v1805 = vrot.slane %v1797, %v1804
        %v1807 = vunpack.c.l.s4 1934713408
        %v1808 = vunpack.c.0.s8 %v1807
        %v1809 = vlaneseq
        %v1810 = vshrl.u32 %v1809, 7
        %v1811 = vsub.s32 %v1808, %v1810
        %v1812 = vrot.slane %v1798, %v1811
        %v1813 = vcombine.low %v1748, %v1764
        %v1814 = vcombine.high %v1748, %v1764
        %v1816 = vunpack.c.l.s4 1934713408
        %v1817 = vunpack.c.0.s8 %v1816
        %v1818 = vlaneseq
        %v1819 = vshrl.u32 %v1818, 7
        %v1820 = vsub.s32 %v1817, %v1819
        %v1821 = vrot.slane %v1813, %v1820
        %v1823 = vunpack.c.l.s4 1934713408
        %v1824 = vunpack.c.0.s8 %v1823
        %v1825 = vlaneseq
        %v1826 = vshrl.u32 %v1825, 7
        %v1827 = vsub.s32 %v1824, %v1826
        %v1828 = vrot.slane %v1814, %v1827
        %v1829 = vcombine.low %v1773, %v1789
        %v1830 = vcombine.high %v1773, %v1789
        %v1832 = vunpack.c.l.s4 1934713408
        %v1833 = vunpack.c.0.s8 %v1832
        %v1834 = vlaneseq
        %v1835 = vshrl.u32 %v1834, 7
        %v1836 = vsub.s32 %v1833, %v1835
        %v1837 = vrot.slane %v1829, %v1836
        %v1839 = vunpack.c.l.s4 1934713408
        %v1840 = vunpack.c.0.s8 %v1839
        %v1841 = vlaneseq
        %v1842 = vshrl.u32 %v1841, 7
        %v1843 = vsub.s32 %v1840, %v1842
        %v1844 = vrot.slane %v1830, %v1843
        %v1845 = vcombine.low %v1780, %v1796
        %v1846 = vcombine.high %v1780, %v1796
        %v1848 = vunpack.c.l.s4 1934713408
        %v1849 = vunpack.c.0.s8 %v1848
        %v1850 = vlaneseq
        %v1851 = vshrl.u32 %v1850, 7
        %v1852 = vsub.s32 %v1849, %v1851
        %v1853 = vrot.slane %v1845, %v1852
        %v1855 = vunpack.c.l.s4 1934713408
        %v1856 = vunpack.c.0.s8 %v1855
        %v1857 = vlaneseq
        %v1858 = vshrl.u32 %v1857, 7
        %v1859 = vsub.s32 %v1856, %v1858
        %v1860 = vrot.slane %v1846, %v1859
        %v1861 = vcombine.low %v1805, %v1837
        %v1862 = vcombine.high %v1805, %v1837
        %v1863 = vcombine.low %v1812, %v1844
        %v1864 = vcombine.high %v1812, %v1844
        %v1865 = vcombine.low %v1821, %v1853
        %v1866 = vcombine.high %v1821, %v1853
        %v1867 = vcombine.low %v1828, %v1860
        %v1868 = vcombine.high %v1828, %v1860
        %v1869 = vcombine.low %v1725, %v1727
        %v1870 = vcombine.high %v1725, %v1727
        %v1872 = vunpack.c.l.s4 1983009808
        %v1873 = vunpack.c.0.s8 %v1872
        %v1874 = vlaneseq
        %v1875 = vshrl.u32 %v1874, 7
        %v1876 = vsub.s32 %v1873, %v1875
        %v1877 = vrot.slane %v1869, %v1876
        %v1879 = vunpack.c.l.s4 1983009808
        %v1880 = vunpack.c.0.s8 %v1879
        %v1881 = vlaneseq
        %v1882 = vshrl.u32 %v1881, 7
        %v1883 = vsub.s32 %v1880, %v1882
        %v1884 = vrot.slane %v1870, %v1883
        %v1885 = vcombine.low %v1726, %v1728
        %v1886 = vcombine.high %v1726, %v1728
        %v1888 = vunpack.c.l.s4 1983009808
        %v1889 = vunpack.c.0.s8 %v1888
        %v1890 = vlaneseq
        %v1891 = vshrl.u32 %v1890, 7
        %v1892 = vsub.s32 %v1889, %v1891
        %v1893 = vrot.slane %v1885, %v1892
        %v1895 = vunpack.c.l.s4 1983009808
        %v1896 = vunpack.c.0.s8 %v1895
        %v1897 = vlaneseq
        %v1898 = vshrl.u32 %v1897, 7
        %v1899 = vsub.s32 %v1896, %v1898
        %v1900 = vrot.slane %v1886, %v1899
        %v1901 = vcombine.low %v1729, %v1731
        %v1902 = vcombine.high %v1729, %v1731
        %v1904 = vunpack.c.l.s4 1983009808
        %v1905 = vunpack.c.0.s8 %v1904
        %v1906 = vlaneseq
        %v1907 = vshrl.u32 %v1906, 7
        %v1908 = vsub.s32 %v1905, %v1907
        %v1909 = vrot.slane %v1901, %v1908
        %v1911 = vunpack.c.l.s4 1983009808
        %v1912 = vunpack.c.0.s8 %v1911
        %v1913 = vlaneseq
        %v1914 = vshrl.u32 %v1913, 7
        %v1915 = vsub.s32 %v1912, %v1914
        %v1916 = vrot.slane %v1902, %v1915
        %v1917 = vcombine.low %v1730, %v1732
        %v1918 = vcombine.high %v1730, %v1732
        %v1920 = vunpack.c.l.s4 1983009808
        %v1921 = vunpack.c.0.s8 %v1920
        %v1922 = vlaneseq
        %v1923 = vshrl.u32 %v1922, 7
        %v1924 = vsub.s32 %v1921, %v1923
        %v1925 = vrot.slane %v1917, %v1924
        %v1927 = vunpack.c.l.s4 1983009808
        %v1928 = vunpack.c.0.s8 %v1927
        %v1929 = vlaneseq
        %v1930 = vshrl.u32 %v1929, 7
        %v1931 = vsub.s32 %v1928, %v1930
        %v1932 = vrot.slane %v1918, %v1931
        %v1933 = vcombine.low %v1877, %v1893
        %v1934 = vcombine.high %v1877, %v1893
        %v1936 = vunpack.c.l.s4 1934713408
        %v1937 = vunpack.c.0.s8 %v1936
        %v1938 = vlaneseq
        %v1939 = vshrl.u32 %v1938, 7
        %v1940 = vsub.s32 %v1937, %v1939
        %v1941 = vrot.slane %v1933, %v1940
        %v1943 = vunpack.c.l.s4 1934713408
        %v1944 = vunpack.c.0.s8 %v1943
        %v1945 = vlaneseq
        %v1946 = vshrl.u32 %v1945, 7
        %v1947 = vsub.s32 %v1944, %v1946
        %v1948 = vrot.slane %v1934, %v1947
        %v1949 = vcombine.low %v1884, %v1900
        %v1950 = vcombine.high %v1884, %v1900
        %v1952 = vunpack.c.l.s4 1934713408
        %v1953 = vunpack.c.0.s8 %v1952
        %v1954 = vlaneseq
        %v1955 = vshrl.u32 %v1954, 7
        %v1956 = vsub.s32 %v1953, %v1955
        %v1957 = vrot.slane %v1949, %v1956
        %v1959 = vunpack.c.l.s4 1934713408
        %v1960 = vunpack.c.0.s8 %v1959
        %v1961 = vlaneseq
        %v1962 = vshrl.u32 %v1961, 7
        %v1963 = vsub.s32 %v1960, %v1962
        %v1964 = vrot.slane %v1950, %v1963
        %v1965 = vcombine.low %v1909, %v1925
        %v1966 = vcombine.high %v1909, %v1925
        %v1968 = vunpack.c.l.s4 1934713408
        %v1969 = vunpack.c.0.s8 %v1968
        %v1970 = vlaneseq
        %v1971 = vshrl.u32 %v1970, 7
        %v1972 = vsub.s32 %v1969, %v1971
        %v1973 = vrot.slane %v1965, %v1972
        %v1975 = vunpack.c.l.s4 1934713408
        %v1976 = vunpack.c.0.s8 %v1975
        %v1977 = vlaneseq
        %v1978 = vshrl.u32 %v1977, 7
        %v1979 = vsub.s32 %v1976, %v1978
        %v1980 = vrot.slane %v1966, %v1979
        %v1981 = vcombine.low %v1916, %v1932
        %v1982 = vcombine.high %v1916, %v1932
        %v1984 = vunpack.c.l.s4 1934713408
        %v1985 = vunpack.c.0.s8 %v1984
        %v1986 = vlaneseq
        %v1987 = vshrl.u32 %v1986, 7
        %v1988 = vsub.s32 %v1985, %v1987
        %v1989 = vrot.slane %v1981, %v1988
        %v1991 = vunpack.c.l.s4 1934713408
        %v1992 = vunpack.c.0.s8 %v1991
        %v1993 = vlaneseq
        %v1994 = vshrl.u32 %v1993, 7
        %v1995 = vsub.s32 %v1992, %v1994
        %v1996 = vrot.slane %v1982, %v1995
        %v1997 = vcombine.low %v1941, %v1973
        %v1998 = vcombine.high %v1941, %v1973
        %v1999 = vcombine.low %v1948, %v1980
        %v2000 = vcombine.high %v1948, %v1980
        %v2001 = vcombine.low %v1957, %v1989
        %v2002 = vcombine.high %v1957, %v1989
        %v2003 = vcombine.low %v1964, %v1996
        %v2004 = vcombine.high %v1964, %v1996
        %v2005 = vcombine.low %v1861, %v1863
        %v2006 = vcombine.high %v1861, %v1863
        %v2008 = vunpack.c.l.s4 1983009808
        %v2009 = vunpack.c.0.s8 %v2008
        %v2010 = vlaneseq
        %v2011 = vshrl.u32 %v2010, 7
        %v2012 = vsub.s32 %v2009, %v2011
        %v2013 = vrot.slane %v2005, %v2012
        %v2015 = vunpack.c.l.s4 1983009808
        %v2016 = vunpack.c.0.s8 %v2015
        %v2017 = vlaneseq
        %v2018 = vshrl.u32 %v2017, 7
        %v2019 = vsub.s32 %v2016, %v2018
        %v2020 = vrot.slane %v2006, %v2019
        %v2021 = vcombine.low %v1862, %v1864
        %v2022 = vcombine.high %v1862, %v1864
        %v2024 = vunpack.c.l.s4 1983009808
        %v2025 = vunpack.c.0.s8 %v2024
        %v2026 = vlaneseq
        %v2027 = vshrl.u32 %v2026, 7
        %v2028 = vsub.s32 %v2025, %v2027
        %v2029 = vrot.slane %v2021, %v2028
        %v2031 = vunpack.c.l.s4 1983009808
        %v2032 = vunpack.c.0.s8 %v2031
        %v2033 = vlaneseq
        %v2034 = vshrl.u32 %v2033, 7
        %v2035 = vsub.s32 %v2032, %v2034
        %v2036 = vrot.slane %v2022, %v2035
        %v2037 = vcombine.low %v1865, %v1867
        %v2038 = vcombine.high %v1865, %v1867
        %v2040 = vunpack.c.l.s4 1983009808
        %v2041 = vunpack.c.0.s8 %v2040
        %v2042 = vlaneseq
        %v2043 = vshrl.u32 %v2042, 7
        %v2044 = vsub.s32 %v2041, %v2043
        %v2045 = vrot.slane %v2037, %v2044
        %v2047 = vunpack.c.l.s4 1983009808
        %v2048 = vunpack.c.0.s8 %v2047
        %v2049 = vlaneseq
        %v2050 = vshrl.u32 %v2049, 7
        %v2051 = vsub.s32 %v2048, %v2050
        %v2052 = vrot.slane %v2038, %v2051
        %v2053 = vcombine.low %v1866, %v1868
        %v2054 = vcombine.high %v1866, %v1868
        %v2056 = vunpack.c.l.s4 1983009808
        %v2057 = vunpack.c.0.s8 %v2056
        %v2058 = vlaneseq
        %v2059 = vshrl.u32 %v2058, 7
        %v2060 = vsub.s32 %v2057, %v2059
        %v2061 = vrot.slane %v2053, %v2060
        %v2063 = vunpack.c.l.s4 1983009808
        %v2064 = vunpack.c.0.s8 %v2063
        %v2065 = vlaneseq
        %v2066 = vshrl.u32 %v2065, 7
        %v2067 = vsub.s32 %v2064, %v2066
        %v2068 = vrot.slane %v2054, %v2067
        %v2069 = vcombine.low %v2013, %v2029
        %v2070 = vcombine.high %v2013, %v2029
        %v2072 = vunpack.c.l.s4 1934713408
        %v2073 = vunpack.c.0.s8 %v2072
        %v2074 = vlaneseq
        %v2075 = vshrl.u32 %v2074, 7
        %v2076 = vsub.s32 %v2073, %v2075
        %v2077 = vrot.slane %v2069, %v2076
        %v2079 = vunpack.c.l.s4 1934713408
        %v2080 = vunpack.c.0.s8 %v2079
        %v2081 = vlaneseq
        %v2082 = vshrl.u32 %v2081, 7
        %v2083 = vsub.s32 %v2080, %v2082
        %v2084 = vrot.slane %v2070, %v2083
        %v2085 = vcombine.low %v2020, %v2036
        %v2086 = vcombine.high %v2020, %v2036
        %v2088 = vunpack.c.l.s4 1934713408
        %v2089 = vunpack.c.0.s8 %v2088
        %v2090 = vlaneseq
        %v2091 = vshrl.u32 %v2090, 7
        %v2092 = vsub.s32 %v2089, %v2091
        %v2093 = vrot.slane %v2085, %v2092
        %v2095 = vunpack.c.l.s4 1934713408
        %v2096 = vunpack.c.0.s8 %v2095
        %v2097 = vlaneseq
        %v2098 = vshrl.u32 %v2097, 7
        %v2099 = vsub.s32 %v2096, %v2098
        %v2100 = vrot.slane %v2086, %v2099
        %v2101 = vcombine.low %v2045, %v2061
        %v2102 = vcombine.high %v2045, %v2061
        %v2104 = vunpack.c.l.s4 1934713408
        %v2105 = vunpack.c.0.s8 %v2104
        %v2106 = vlaneseq
        %v2107 = vshrl.u32 %v2106, 7
        %v2108 = vsub.s32 %v2105, %v2107
        %v2109 = vrot.slane %v2101, %v2108
        %v2111 = vunpack.c.l.s4 1934713408
        %v2112 = vunpack.c.0.s8 %v2111
        %v2113 = vlaneseq
        %v2114 = vshrl.u32 %v2113, 7
        %v2115 = vsub.s32 %v2112, %v2114
        %v2116 = vrot.slane %v2102, %v2115
        %v2117 = vcombine.low %v2052, %v2068
        %v2118 = vcombine.high %v2052, %v2068
        %v2120 = vunpack.c.l.s4 1934713408
        %v2121 = vunpack.c.0.s8 %v2120
        %v2122 = vlaneseq
        %v2123 = vshrl.u32 %v2122, 7
        %v2124 = vsub.s32 %v2121, %v2123
        %v2125 = vrot.slane %v2117, %v2124
        %v2127 = vunpack.c.l.s4 1934713408
        %v2128 = vunpack.c.0.s8 %v2127
        %v2129 = vlaneseq
        %v2130 = vshrl.u32 %v2129, 7
        %v2131 = vsub.s32 %v2128, %v2130
        %v2132 = vrot.slane %v2118, %v2131
        %v2133 = vcombine.low %v2077, %v2109
        %v2134 = vcombine.high %v2077, %v2109
        %v2135 = vcombine.low %v2084, %v2116
        %v2136 = vcombine.high %v2084, %v2116
        %v2137 = vcombine.low %v2093, %v2125
        %v2138 = vcombine.high %v2093, %v2125
        %v2139 = vcombine.low %v2100, %v2132
        %v2140 = vcombine.high %v2100, %v2132
        %v2141 = vpack.c.bf16 %v2133, %v1997
        %v2142 = vpack.c.bf16 %v2134, %v1998
        %v2143 = vpack.c.bf16 %v2135, %v1999
        %v2144 = vpack.c.bf16 %v2136, %v2000
        %v2145 = vpack.c.bf16 %v2137, %v2001
        %v2146 = vpack.c.bf16 %v2138, %v2002
        %v2147 = vpack.c.bf16 %v2139, %v2003
        %v2148 = vpack.c.bf16 %v2140, %v2004
        %vm2149 = vcmask 64512
        %v2151 = vsel %vm2149, %v945, 0
        %v2154 = vsel %vm2149, %v1545, 0
        %2156 = vmatprep.subr.bf16.mxu0 0
        %2157 = vmatpush1.bf16.xpose.msra.mxu0 0
        %2158 = vmatprep.subr.bf16.mxu0 0
        %2159 = vmatpush1.bf16.xpose.msra.mxu0 0
        %2160 = vmatprep.subr.bf16.mxu0 0
        %2161 = vmatpush1.bf16.xpose.msra.mxu0 0
        %2162 = vmatprep.subr.bf16.mxu0 0
        %2163 = vmatpush1.bf16.xpose.msra.mxu0 0
        %2164 = vmatprep.subr.bf16.mxu0 0
        %2165 = vmatpush1.bf16.xpose.msra.mxu0 0
        %2166 = vmatprep.subr.bf16.mxu0 0
        %2167 = vmatpush1.bf16.xpose.msra.mxu0 0
        %2168 = vmatprep.subr.bf16.mxu0 0
        %2169 = vmatpush1.bf16.xpose.msra.mxu0 0
        %2170 = vmatprep.subr.bf16.mxu0 0
        %2171 = vmatpush1.bf16.xpose.msra.mxu0 %v2154
        %2172 = vmatprep.subr.bf16.mxu0 0
        %2173 = vmatpush2.bf16.xpose.msra.mxu0 0
        %2174 = vmatprep.subr.bf16.mxu0 0
        %2175 = vmatpush2.bf16.xpose.msra.mxu0 0
        %2176 = vmatprep.subr.bf16.mxu0 0
        %2177 = vmatpush2.bf16.xpose.msra.mxu0 0
        %2178 = vmatprep.subr.bf16.mxu0 0
        %2179 = vmatpush2.bf16.xpose.msra.mxu0 0
        %2180 = vmatprep.subr.bf16.mxu0 0
        %2181 = vmatpush2.bf16.xpose.msra.mxu0 0
        %2182 = vmatprep.subr.bf16.mxu0 0
        %2183 = vmatpush2.bf16.xpose.msra.mxu0 0
        %2184 = vmatprep.subr.bf16.mxu0 0
        %2185 = vmatpush2.bf16.xpose.msra.mxu0 0
        %2186 = vmatprep.subr.bf16.mxu0 0
        %2187 = vmatpush2.bf16.xpose.msra.mxu0 0
        %2188 = vmatprep.mubr.bf16.mxu0 0
        %2189 = vmatmul.mubr.bf16.gmra.mxu0 %v2151
        %v2190 = vpop.f32.mrf.mxu0
        %v2191 = vadd.f32 0.0, %v2190
        %v2192 = vpop.f32.mrf.mxu0
        %v2193 = vpop.f32.mrf.mxu0
        %v2194 = vadd.f32 0.0, %v2193
        %v2195 = vpop.f32.mrf.mxu0
        %2196 = vdwg.mxu0
        %v2198 = vsel %vm2149, %v946, 0
        %v2201 = vsel %vm2149, %v1546, 0
        %2203 = vmatprep.subr.bf16.mxu0 0
        %2204 = vmatpush1.bf16.xpose.msra.mxu0 0
        %2205 = vmatprep.subr.bf16.mxu0 0
        %2206 = vmatpush1.bf16.xpose.msra.mxu0 0
        %2207 = vmatprep.subr.bf16.mxu0 0
        %2208 = vmatpush1.bf16.xpose.msra.mxu0 0
        %2209 = vmatprep.subr.bf16.mxu0 0
        %2210 = vmatpush1.bf16.xpose.msra.mxu0 0
        %2211 = vmatprep.subr.bf16.mxu0 0
        %2212 = vmatpush1.bf16.xpose.msra.mxu0 0
        %2213 = vmatprep.subr.bf16.mxu0 0
        %2214 = vmatpush1.bf16.xpose.msra.mxu0 0
        %2215 = vmatprep.subr.bf16.mxu0 0
        %2216 = vmatpush1.bf16.xpose.msra.mxu0 0
        %2217 = vmatprep.subr.bf16.mxu0 0
        %2218 = vmatpush1.bf16.xpose.msra.mxu0 %v2201
        %2219 = vmatprep.subr.bf16.mxu0 0
        %2220 = vmatpush2.bf16.xpose.msra.mxu0 0
        %2221 = vmatprep.subr.bf16.mxu0 0
        %2222 = vmatpush2.bf16.xpose.msra.mxu0 0
        %2223 = vmatprep.subr.bf16.mxu0 0
        %2224 = vmatpush2.bf16.xpose.msra.mxu0 0
        %2225 = vmatprep.subr.bf16.mxu0 0
        %2226 = vmatpush2.bf16.xpose.msra.mxu0 0
        %2227 = vmatprep.subr.bf16.mxu0 0
        %2228 = vmatpush2.bf16.xpose.msra.mxu0 0
        %2229 = vmatprep.subr.bf16.mxu0 0
        %2230 = vmatpush2.bf16.xpose.msra.mxu0 0
        %2231 = vmatprep.subr.bf16.mxu0 0
        %2232 = vmatpush2.bf16.xpose.msra.mxu0 0
        %2233 = vmatprep.subr.bf16.mxu0 0
        %2234 = vmatpush2.bf16.xpose.msra.mxu0 0
        %2235 = vmatprep.mubr.bf16.mxu0 0
        %2236 = vmatmul.mubr.bf16.gmra.mxu0 %v2198
        %v2237 = vpop.f32.mrf.mxu0
        %v2238 = vadd.f32 0.0, %v2237
        %v2239 = vpop.f32.mrf.mxu0
        %v2240 = vpop.f32.mrf.mxu0
        %v2241 = vadd.f32 0.0, %v2240
        %v2242 = vpop.f32.mrf.mxu0
        %2243 = vdwg.mxu0
        %v2245 = vsel %vm2149, %v947, 0
        %v2248 = vsel %vm2149, %v1547, 0
        %2250 = vmatprep.subr.bf16.mxu0 0
        %2251 = vmatpush1.bf16.xpose.msra.mxu0 0
        %2252 = vmatprep.subr.bf16.mxu0 0
        %2253 = vmatpush1.bf16.xpose.msra.mxu0 0
        %2254 = vmatprep.subr.bf16.mxu0 0
        %2255 = vmatpush1.bf16.xpose.msra.mxu0 0
        %2256 = vmatprep.subr.bf16.mxu0 0
        %2257 = vmatpush1.bf16.xpose.msra.mxu0 0
        %2258 = vmatprep.subr.bf16.mxu0 0
        %2259 = vmatpush1.bf16.xpose.msra.mxu0 0
        %2260 = vmatprep.subr.bf16.mxu0 0
        %2261 = vmatpush1.bf16.xpose.msra.mxu0 0
        %2262 = vmatprep.subr.bf16.mxu0 0
        %2263 = vmatpush1.bf16.xpose.msra.mxu0 0
        %2264 = vmatprep.subr.bf16.mxu0 0
        %2265 = vmatpush1.bf16.xpose.msra.mxu0 %v2248
        %2266 = vmatprep.subr.bf16.mxu0 0
        %2267 = vmatpush2.bf16.xpose.msra.mxu0 0
        %2268 = vmatprep.subr.bf16.mxu0 0
        %2269 = vmatpush2.bf16.xpose.msra.mxu0 0
        %2270 = vmatprep.subr.bf16.mxu0 0
        %2271 = vmatpush2.bf16.xpose.msra.mxu0 0
        %2272 = vmatprep.subr.bf16.mxu0 0
        %2273 = vmatpush2.bf16.xpose.msra.mxu0 0
        %2274 = vmatprep.subr.bf16.mxu0 0
        %2275 = vmatpush2.bf16.xpose.msra.mxu0 0
        %2276 = vmatprep.subr.bf16.mxu0 0
        %2277 = vmatpush2.bf16.xpose.msra.mxu0 0
        %2278 = vmatprep.subr.bf16.mxu0 0
        %2279 = vmatpush2.bf16.xpose.msra.mxu0 0
        %2280 = vmatprep.subr.bf16.mxu0 0
        %2281 = vmatpush2.bf16.xpose.msra.mxu0 0
        %2282 = vmatprep.mubr.bf16.mxu0 0
        %2283 = vmatmul.mubr.bf16.gmra.mxu0 %v2245
        %v2284 = vpop.f32.mrf.mxu0
        %v2285 = vadd.f32 0.0, %v2284
        %v2286 = vpop.f32.mrf.mxu0
        %v2287 = vpop.f32.mrf.mxu0
        %v2288 = vadd.f32 0.0, %v2287
        %v2289 = vpop.f32.mrf.mxu0
        %2290 = vdwg.mxu0
        %v2292 = vsel %vm2149, %v948, 0
        %v2295 = vsel %vm2149, %v1548, 0
        %2297 = vmatprep.subr.bf16.mxu0 0
        %2298 = vmatpush1.bf16.xpose.msra.mxu0 0
        %2299 = vmatprep.subr.bf16.mxu0 0
        %2300 = vmatpush1.bf16.xpose.msra.mxu0 0
        %2301 = vmatprep.subr.bf16.mxu0 0
        %2302 = vmatpush1.bf16.xpose.msra.mxu0 0
        %2303 = vmatprep.subr.bf16.mxu0 0
        %2304 = vmatpush1.bf16.xpose.msra.mxu0 0
        %2305 = vmatprep.subr.bf16.mxu0 0
        %2306 = vmatpush1.bf16.xpose.msra.mxu0 0
        %2307 = vmatprep.subr.bf16.mxu0 0
        %2308 = vmatpush1.bf16.xpose.msra.mxu0 0
        %2309 = vmatprep.subr.bf16.mxu0 0
        %2310 = vmatpush1.bf16.xpose.msra.mxu0 0
        %2311 = vmatprep.subr.bf16.mxu0 0
        %2312 = vmatpush1.bf16.xpose.msra.mxu0 %v2295
        %2313 = vmatprep.subr.bf16.mxu0 0
        %2314 = vmatpush2.bf16.xpose.msra.mxu0 0
        %2315 = vmatprep.subr.bf16.mxu0 0
        %2316 = vmatpush2.bf16.xpose.msra.mxu0 0
        %2317 = vmatprep.subr.bf16.mxu0 0
        %2318 = vmatpush2.bf16.xpose.msra.mxu0 0
        %2319 = vmatprep.subr.bf16.mxu0 0
        %2320 = vmatpush2.bf16.xpose.msra.mxu0 0
        %2321 = vmatprep.subr.bf16.mxu0 0
        %2322 = vmatpush2.bf16.xpose.msra.mxu0 0
        %2323 = vmatprep.subr.bf16.mxu0 0
        %2324 = vmatpush2.bf16.xpose.msra.mxu0 0
        %2325 = vmatprep.subr.bf16.mxu0 0
        %2326 = vmatpush2.bf16.xpose.msra.mxu0 0
        %2327 = vmatprep.subr.bf16.mxu0 0
        %2328 = vmatpush2.bf16.xpose.msra.mxu0 0
        %2329 = vmatprep.mubr.bf16.mxu0 0
        %2330 = vmatmul.mubr.bf16.gmra.mxu0 %v2292
        %v2331 = vpop.f32.mrf.mxu0
        %v2332 = vadd.f32 0.0, %v2331
        %v2333 = vpop.f32.mrf.mxu0
        %v2334 = vpop.f32.mrf.mxu0
        %v2335 = vadd.f32 0.0, %v2334
        %v2336 = vpop.f32.mrf.mxu0
        %2337 = vdwg.mxu0
        %v2339 = vsel %vm2149, %v949, 0
        %v2342 = vsel %vm2149, %v1549, 0
        %2344 = vmatprep.subr.bf16.mxu0 0
        %2345 = vmatpush1.bf16.xpose.msra.mxu0 0
        %2346 = vmatprep.subr.bf16.mxu0 0
        %2347 = vmatpush1.bf16.xpose.msra.mxu0 0
        %2348 = vmatprep.subr.bf16.mxu0 0
        %2349 = vmatpush1.bf16.xpose.msra.mxu0 0
        %2350 = vmatprep.subr.bf16.mxu0 0
        %2351 = vmatpush1.bf16.xpose.msra.mxu0 0
        %2352 = vmatprep.subr.bf16.mxu0 0
        %2353 = vmatpush1.bf16.xpose.msra.mxu0 0
        %2354 = vmatprep.subr.bf16.mxu0 0
        %2355 = vmatpush1.bf16.xpose.msra.mxu0 0
        %2356 = vmatprep.subr.bf16.mxu0 0
        %2357 = vmatpush1.bf16.xpose.msra.mxu0 0
        %2358 = vmatprep.subr.bf16.mxu0 0
        %2359 = vmatpush1.bf16.xpose.msra.mxu0 %v2342
        %2360 = vmatprep.subr.bf16.mxu0 0
        %2361 = vmatpush2.bf16.xpose.msra.mxu0 0
        %2362 = vmatprep.subr.bf16.mxu0 0
        %2363 = vmatpush2.bf16.xpose.msra.mxu0 0
        %2364 = vmatprep.subr.bf16.mxu0 0
        %2365 = vmatpush2.bf16.xpose.msra.mxu0 0
        %2366 = vmatprep.subr.bf16.mxu0 0
        %2367 = vmatpush2.bf16.xpose.msra.mxu0 0
        %2368 = vmatprep.subr.bf16.mxu0 0
        %2369 = vmatpush2.bf16.xpose.msra.mxu0 0
        %2370 = vmatprep.subr.bf16.mxu0 0
        %2371 = vmatpush2.bf16.xpose.msra.mxu0 0
        %2372 = vmatprep.subr.bf16.mxu0 0
        %2373 = vmatpush2.bf16.xpose.msra.mxu0 0
        %2374 = vmatprep.subr.bf16.mxu0 0
        %2375 = vmatpush2.bf16.xpose.msra.mxu0 0
        %2376 = vmatprep.mubr.bf16.mxu0 0
        %2377 = vmatmul.mubr.bf16.gmra.mxu0 %v2339
        %v2378 = vpop.f32.mrf.mxu0
        %v2379 = vadd.f32 0.0, %v2378
        %v2380 = vpop.f32.mrf.mxu0
        %v2381 = vpop.f32.mrf.mxu0
        %v2382 = vadd.f32 0.0, %v2381
        %v2383 = vpop.f32.mrf.mxu0
        %2384 = vdwg.mxu0
        %v2386 = vsel %vm2149, %v950, 0
        %v2389 = vsel %vm2149, %v1550, 0
        %2391 = vmatprep.subr.bf16.mxu0 0
        %2392 = vmatpush1.bf16.xpose.msra.mxu0 0
        %2393 = vmatprep.subr.bf16.mxu0 0
        %2394 = vmatpush1.bf16.xpose.msra.mxu0 0
        %2395 = vmatprep.subr.bf16.mxu0 0
        %2396 = vmatpush1.bf16.xpose.msra.mxu0 0
        %2397 = vmatprep.subr.bf16.mxu0 0
        %2398 = vmatpush1.bf16.xpose.msra.mxu0 0
        %2399 = vmatprep.subr.bf16.mxu0 0
        %2400 = vmatpush1.bf16.xpose.msra.mxu0 0
        %2401 = vmatprep.subr.bf16.mxu0 0
        %2402 = vmatpush1.bf16.xpose.msra.mxu0 0
        %2403 = vmatprep.subr.bf16.mxu0 0
        %2404 = vmatpush1.bf16.xpose.msra.mxu0 0
        %2405 = vmatprep.subr.bf16.mxu0 0
        %2406 = vmatpush1.bf16.xpose.msra.mxu0 %v2389
        %2407 = vmatprep.subr.bf16.mxu0 0
        %2408 = vmatpush2.bf16.xpose.msra.mxu0 0
        %2409 = vmatprep.subr.bf16.mxu0 0
        %2410 = vmatpush2.bf16.xpose.msra.mxu0 0
        %2411 = vmatprep.subr.bf16.mxu0 0
        %2412 = vmatpush2.bf16.xpose.msra.mxu0 0
        %2413 = vmatprep.subr.bf16.mxu0 0
        %2414 = vmatpush2.bf16.xpose.msra.mxu0 0
        %2415 = vmatprep.subr.bf16.mxu0 0
        %2416 = vmatpush2.bf16.xpose.msra.mxu0 0
        %2417 = vmatprep.subr.bf16.mxu0 0
        %2418 = vmatpush2.bf16.xpose.msra.mxu0 0
        %2419 = vmatprep.subr.bf16.mxu0 0
        %2420 = vmatpush2.bf16.xpose.msra.mxu0 0
        %2421 = vmatprep.subr.bf16.mxu0 0
        %2422 = vmatpush2.bf16.xpose.msra.mxu0 0
        %2423 = vmatprep.mubr.bf16.mxu0 0
        %2424 = vmatmul.mubr.bf16.gmra.mxu0 %v2386
        %v2425 = vpop.f32.mrf.mxu0
        %v2426 = vadd.f32 0.0, %v2425
        %v2427 = vpop.f32.mrf.mxu0
        %v2428 = vpop.f32.mrf.mxu0
        %v2429 = vadd.f32 0.0, %v2428
        %v2430 = vpop.f32.mrf.mxu0
        %2431 = vdwg.mxu0
        %v2433 = vsel %vm2149, %v951, 0
        %v2436 = vsel %vm2149, %v1551, 0
        %2438 = vmatprep.subr.bf16.mxu0 0
        %2439 = vmatpush1.bf16.xpose.msra.mxu0 0
        %2440 = vmatprep.subr.bf16.mxu0 0
        %2441 = vmatpush1.bf16.xpose.msra.mxu0 0
        %2442 = vmatprep.subr.bf16.mxu0 0
        %2443 = vmatpush1.bf16.xpose.msra.mxu0 0
        %2444 = vmatprep.subr.bf16.mxu0 0
        %2445 = vmatpush1.bf16.xpose.msra.mxu0 0
        %2446 = vmatprep.subr.bf16.mxu0 0
        %2447 = vmatpush1.bf16.xpose.msra.mxu0 0
        %2448 = vmatprep.subr.bf16.mxu0 0
        %2449 = vmatpush1.bf16.xpose.msra.mxu0 0
        %2450 = vmatprep.subr.bf16.mxu0 0
        %2451 = vmatpush1.bf16.xpose.msra.mxu0 0
        %2452 = vmatprep.subr.bf16.mxu0 0
        %2453 = vmatpush1.bf16.xpose.msra.mxu0 %v2436
        %2454 = vmatprep.subr.bf16.mxu0 0
        %2455 = vmatpush2.bf16.xpose.msra.mxu0 0
        %2456 = vmatprep.subr.bf16.mxu0 0
        %2457 = vmatpush2.bf16.xpose.msra.mxu0 0
        %2458 = vmatprep.subr.bf16.mxu0 0
        %2459 = vmatpush2.bf16.xpose.msra.mxu0 0
        %2460 = vmatprep.subr.bf16.mxu0 0
        %2461 = vmatpush2.bf16.xpose.msra.mxu0 0
        %2462 = vmatprep.subr.bf16.mxu0 0
        %2463 = vmatpush2.bf16.xpose.msra.mxu0 0
        %2464 = vmatprep.subr.bf16.mxu0 0
        %2465 = vmatpush2.bf16.xpose.msra.mxu0 0
        %2466 = vmatprep.subr.bf16.mxu0 0
        %2467 = vmatpush2.bf16.xpose.msra.mxu0 0
        %2468 = vmatprep.subr.bf16.mxu0 0
        %2469 = vmatpush2.bf16.xpose.msra.mxu0 0
        %2470 = vmatprep.mubr.bf16.mxu0 0
        %2471 = vmatmul.mubr.bf16.gmra.mxu0 %v2433
        %v2472 = vpop.f32.mrf.mxu0
        %v2473 = vadd.f32 0.0, %v2472
        %v2474 = vpop.f32.mrf.mxu0
        %v2475 = vpop.f32.mrf.mxu0
        %v2476 = vadd.f32 0.0, %v2475
        %v2477 = vpop.f32.mrf.mxu0
        %2478 = vdwg.mxu0
        %v2480 = vsel %vm2149, %v952, 0
        %v2483 = vsel %vm2149, %v1552, 0
        %2485 = vmatprep.subr.bf16.mxu0 0
        %2486 = vmatpush1.bf16.xpose.msra.mxu0 0
        %2487 = vmatprep.subr.bf16.mxu0 0
        %2488 = vmatpush1.bf16.xpose.msra.mxu0 0
        %2489 = vmatprep.subr.bf16.mxu0 0
        %2490 = vmatpush1.bf16.xpose.msra.mxu0 0
        %2491 = vmatprep.subr.bf16.mxu0 0
        %2492 = vmatpush1.bf16.xpose.msra.mxu0 0
        %2493 = vmatprep.subr.bf16.mxu0 0
        %2494 = vmatpush1.bf16.xpose.msra.mxu0 0
        %2495 = vmatprep.subr.bf16.mxu0 0
        %2496 = vmatpush1.bf16.xpose.msra.mxu0 0
        %2497 = vmatprep.subr.bf16.mxu0 0
        %2498 = vmatpush1.bf16.xpose.msra.mxu0 0
        %2499 = vmatprep.subr.bf16.mxu0 0
        %2500 = vmatpush1.bf16.xpose.msra.mxu0 %v2483
        %2501 = vmatprep.subr.bf16.mxu0 0
        %2502 = vmatpush2.bf16.xpose.msra.mxu0 0
        %2503 = vmatprep.subr.bf16.mxu0 0
        %2504 = vmatpush2.bf16.xpose.msra.mxu0 0
        %2505 = vmatprep.subr.bf16.mxu0 0
        %2506 = vmatpush2.bf16.xpose.msra.mxu0 0
        %2507 = vmatprep.subr.bf16.mxu0 0
        %2508 = vmatpush2.bf16.xpose.msra.mxu0 0
        %2509 = vmatprep.subr.bf16.mxu0 0
        %2510 = vmatpush2.bf16.xpose.msra.mxu0 0
        %2511 = vmatprep.subr.bf16.mxu0 0
        %2512 = vmatpush2.bf16.xpose.msra.mxu0 0
        %2513 = vmatprep.subr.bf16.mxu0 0
        %2514 = vmatpush2.bf16.xpose.msra.mxu0 0
        %2515 = vmatprep.subr.bf16.mxu0 0
        %2516 = vmatpush2.bf16.xpose.msra.mxu0 0
        %2517 = vmatprep.mubr.bf16.mxu0 0
        %2518 = vmatmul.mubr.bf16.gmra.mxu0 %v2480
        %v2519 = vpop.f32.mrf.mxu0
        %v2520 = vadd.f32 0.0, %v2519
        %v2521 = vpop.f32.mrf.mxu0
        %v2522 = vpop.f32.mrf.mxu0
        %v2523 = vadd.f32 0.0, %v2522
        %v2524 = vpop.f32.mrf.mxu0
        %2525 = vdwg.mxu0
        %vm2526 = vcmask 130048
        %v2527 = vsel %vm2526, %v2191, -inf
        %2528 = vmax.xlane.f32.xlu0 %v2527
        %v2529 = vpop.xlane.xlu0 %2528
        %v2530 = vsel %vm2526, %v2194, -inf
        %2531 = vmax.xlane.f32.xlu0 %v2530
        %v2532 = vpop.xlane.xlu0 %2531
        %v2533 = vsel %vm2526, %v2238, -inf
        %2534 = vmax.xlane.f32.xlu0 %v2533
        %v2535 = vpop.xlane.xlu0 %2534
        %v2536 = vsel %vm2526, %v2241, -inf
        %2537 = vmax.xlane.f32.xlu0 %v2536
        %v2538 = vpop.xlane.xlu0 %2537
        %v2539 = vsel %vm2526, %v2285, -inf
        %2540 = vmax.xlane.f32.xlu0 %v2539
        %v2541 = vpop.xlane.xlu0 %2540
        %v2542 = vsel %vm2526, %v2288, -inf
        %2543 = vmax.xlane.f32.xlu0 %v2542
        %v2544 = vpop.xlane.xlu0 %2543
        %v2545 = vsel %vm2526, %v2332, -inf
        %2546 = vmax.xlane.f32.xlu0 %v2545
        %v2547 = vpop.xlane.xlu0 %2546
        %v2548 = vsel %vm2526, %v2335, -inf
        %2549 = vmax.xlane.f32.xlu0 %v2548
        %v2550 = vpop.xlane.xlu0 %2549
        %v2551 = vsel %vm2526, %v2379, -inf
        %2552 = vmax.xlane.f32.xlu0 %v2551
        %v2553 = vpop.xlane.xlu0 %2552
        %v2554 = vsel %vm2526, %v2382, -inf
        %2555 = vmax.xlane.f32.xlu0 %v2554
        %v2556 = vpop.xlane.xlu0 %2555
        %v2557 = vsel %vm2526, %v2426, -inf
        %2558 = vmax.xlane.f32.xlu0 %v2557
        %v2559 = vpop.xlane.xlu0 %2558
        %v2560 = vsel %vm2526, %v2429, -inf
        %2561 = vmax.xlane.f32.xlu0 %v2560
        %v2562 = vpop.xlane.xlu0 %2561
        %v2563 = vsel %vm2526, %v2473, -inf
        %2564 = vmax.xlane.f32.xlu0 %v2563
        %v2565 = vpop.xlane.xlu0 %2564
        %v2566 = vsel %vm2526, %v2476, -inf
        %2567 = vmax.xlane.f32.xlu0 %v2566
        %v2568 = vpop.xlane.xlu0 %2567
        %v2569 = vsel %vm2526, %v2520, -inf
        %2570 = vmax.xlane.f32.xlu0 %v2569
        %v2571 = vpop.xlane.xlu0 %2570
        %v2572 = vsel %vm2526, %v2523, -inf
        %2573 = vmax.xlane.f32.xlu0 %v2572
        %v2574 = vpop.xlane.xlu0 %2573
        %v2575 = vsub.f32 %v2191, %v2529
        %v2576 = vsub.f32 %v2194, %v2532
        %v2577 = vsub.f32 %v2238, %v2535
        %v2578 = vsub.f32 %v2241, %v2538
        %v2579 = vsub.f32 %v2285, %v2541
        %v2580 = vsub.f32 %v2288, %v2544
        %v2581 = vsub.f32 %v2332, %v2547
        %v2582 = vsub.f32 %v2335, %v2550
        %v2583 = vsub.f32 %v2379, %v2553
        %v2584 = vsub.f32 %v2382, %v2556
        %v2585 = vsub.f32 %v2426, %v2559
        %v2586 = vsub.f32 %v2429, %v2562
        %v2587 = vsub.f32 %v2473, %v2565
        %v2588 = vsub.f32 %v2476, %v2568
        %v2589 = vsub.f32 %v2520, %v2571
        %v2590 = vsub.f32 %v2523, %v2574
        %v2591 = vmul.f32 %v2575, 1.442695
        %v2592 = vpow.pop %v2591
        %v2593 = vmul.f32 %v2576, 1.442695
        %v2594 = vpow.pop %v2593
        %v2595 = vmul.f32 %v2577, 1.442695
        %v2596 = vpow.pop %v2595
        %v2597 = vmul.f32 %v2578, 1.442695
        %v2598 = vpow.pop %v2597
        %v2599 = vmul.f32 %v2579, 1.442695
        %v2600 = vpow.pop %v2599
        %v2601 = vmul.f32 %v2580, 1.442695
        %v2602 = vpow.pop %v2601
        %v2603 = vmul.f32 %v2581, 1.442695
        %v2604 = vpow.pop %v2603
        %v2605 = vmul.f32 %v2582, 1.442695
        %v2606 = vpow.pop %v2605
        %v2607 = vmul.f32 %v2583, 1.442695
        %v2608 = vpow.pop %v2607
        %v2609 = vmul.f32 %v2584, 1.442695
        %v2610 = vpow.pop %v2609
        %v2611 = vmul.f32 %v2585, 1.442695
        %v2612 = vpow.pop %v2611
        %v2613 = vmul.f32 %v2586, 1.442695
        %v2614 = vpow.pop %v2613
        %v2615 = vmul.f32 %v2587, 1.442695
        %v2616 = vpow.pop %v2615
        %v2617 = vmul.f32 %v2588, 1.442695
        %v2618 = vpow.pop %v2617
        %v2619 = vmul.f32 %v2589, 1.442695
        %v2620 = vpow.pop %v2619
        %v2621 = vmul.f32 %v2590, 1.442695
        %v2622 = vpow.pop %v2621
        %v2623 = vsel %vm2526, %v2592, 0.0
        %2624 = vadd.xlane.f32.xlu0 %v2623
        %v2625 = vpop.xlane.xlu0 %2624
        %v2626 = vsel %vm2526, %v2594, 0.0
        %2627 = vadd.xlane.f32.xlu0 %v2626
        %v2628 = vpop.xlane.xlu0 %2627
        %v2629 = vsel %vm2526, %v2596, 0.0
        %2630 = vadd.xlane.f32.xlu0 %v2629
        %v2631 = vpop.xlane.xlu0 %2630
        %v2632 = vsel %vm2526, %v2598, 0.0
        %2633 = vadd.xlane.f32.xlu0 %v2632
        %v2634 = vpop.xlane.xlu0 %2633
        %v2635 = vsel %vm2526, %v2600, 0.0
        %2636 = vadd.xlane.f32.xlu0 %v2635
        %v2637 = vpop.xlane.xlu0 %2636
        %v2638 = vsel %vm2526, %v2602, 0.0
        %2639 = vadd.xlane.f32.xlu0 %v2638
        %v2640 = vpop.xlane.xlu0 %2639
        %v2641 = vsel %vm2526, %v2604, 0.0
        %2642 = vadd.xlane.f32.xlu0 %v2641
        %v2643 = vpop.xlane.xlu0 %2642
        %v2644 = vsel %vm2526, %v2606, 0.0
        %2645 = vadd.xlane.f32.xlu0 %v2644
        %v2646 = vpop.xlane.xlu0 %2645
        %v2647 = vsel %vm2526, %v2608, 0.0
        %2648 = vadd.xlane.f32.xlu0 %v2647
        %v2649 = vpop.xlane.xlu0 %2648
        %v2650 = vsel %vm2526, %v2610, 0.0
        %2651 = vadd.xlane.f32.xlu0 %v2650
        %v2652 = vpop.xlane.xlu0 %2651
        %v2653 = vsel %vm2526, %v2612, 0.0
        %2654 = vadd.xlane.f32.xlu0 %v2653
        %v2655 = vpop.xlane.xlu0 %2654
        %v2656 = vsel %vm2526, %v2614, 0.0
        %2657 = vadd.xlane.f32.xlu0 %v2656
        %v2658 = vpop.xlane.xlu0 %2657
        %v2659 = vsel %vm2526, %v2616, 0.0
        %2660 = vadd.xlane.f32.xlu0 %v2659
        %v2661 = vpop.xlane.xlu0 %2660
        %v2662 = vsel %vm2526, %v2618, 0.0
        %2663 = vadd.xlane.f32.xlu0 %v2662
        %v2664 = vpop.xlane.xlu0 %2663
        %v2665 = vsel %vm2526, %v2620, 0.0
        %2666 = vadd.xlane.f32.xlu0 %v2665
        %v2667 = vpop.xlane.xlu0 %2666
        %v2668 = vsel %vm2526, %v2622, 0.0
        %2669 = vadd.xlane.f32.xlu0 %v2668
        %v2670 = vpop.xlane.xlu0 %2669
        %v2671 = vrcp.pop %v2625
        %v2672 = vmul.f32 %v2592, %v2671
        %v2673 = vrcp.pop %v2628
        %v2674 = vmul.f32 %v2594, %v2673
        %v2675 = vrcp.pop %v2631
        %v2676 = vmul.f32 %v2596, %v2675
        %v2677 = vrcp.pop %v2634
        %v2678 = vmul.f32 %v2598, %v2677
        %v2679 = vrcp.pop %v2637
        %v2680 = vmul.f32 %v2600, %v2679
        %v2681 = vrcp.pop %v2640
        %v2682 = vmul.f32 %v2602, %v2681
        %v2683 = vrcp.pop %v2643
        %v2684 = vmul.f32 %v2604, %v2683
        %v2685 = vrcp.pop %v2646
        %v2686 = vmul.f32 %v2606, %v2685
        %v2687 = vrcp.pop %v2649
        %v2688 = vmul.f32 %v2608, %v2687
        %v2689 = vrcp.pop %v2652
        %v2690 = vmul.f32 %v2610, %v2689
        %v2691 = vrcp.pop %v2655
        %v2692 = vmul.f32 %v2612, %v2691
        %v2693 = vrcp.pop %v2658
        %v2694 = vmul.f32 %v2614, %v2693
        %v2695 = vrcp.pop %v2661
        %v2696 = vmul.f32 %v2616, %v2695
        %v2697 = vrcp.pop %v2664
        %v2698 = vmul.f32 %v2618, %v2697
        %v2699 = vrcp.pop %v2667
        %v2700 = vmul.f32 %v2620, %v2699
        %v2701 = vrcp.pop %v2670
        %v2702 = vmul.f32 %v2622, %v2701
        %v2703 = vpack.c.bf16 %v2674, %v2672
        %v2704 = vpack.c.bf16 %v2678, %v2676
        %v2705 = vpack.c.bf16 %v2682, %v2680
        %v2706 = vpack.c.bf16 %v2686, %v2684
        %v2707 = vpack.c.bf16 %v2690, %v2688
        %v2708 = vpack.c.bf16 %v2694, %v2692
        %v2709 = vpack.c.bf16 %v2698, %v2696
        %v2710 = vpack.c.bf16 %v2702, %v2700
        %v2712 = vsel %vm2526, %v2703, 0
        %2714 = vmatprep.subr.bf16.mxu0 0
        %2715 = vmatpush1.bf16.msra.mxu0 0
        %2716 = vmatprep.subr.bf16.mxu0 0
        %2717 = vmatpush1.bf16.msra.mxu0 0
        %2718 = vmatprep.subr.bf16.mxu0 0
        %2719 = vmatpush1.bf16.msra.mxu0 0
        %2720 = vmatprep.subr.bf16.mxu0 0
        %2721 = vmatpush1.bf16.msra.mxu0 0
        %2722 = vmatprep.subr.bf16.mxu0 0
        %2723 = vmatpush1.bf16.msra.mxu0 0
        %2724 = vmatprep.subr.bf16.mxu0 0
        %2725 = vmatpush1.bf16.msra.mxu0 0
        %2726 = vmatprep.subr.bf16.mxu0 0
        %2727 = vmatpush1.bf16.msra.mxu0 0
        %2728 = vmatprep.subr.bf16.mxu0 0
        %2729 = vmatpush1.bf16.msra.mxu0 %v2141
        %2730 = vmatprep.subr.bf16.mxu0 0
        %2731 = vmatpush2.bf16.msra.mxu0 0
        %2732 = vmatprep.subr.bf16.mxu0 0
        %2733 = vmatpush2.bf16.msra.mxu0 0
        %2734 = vmatprep.subr.bf16.mxu0 0
        %2735 = vmatpush2.bf16.msra.mxu0 0
        %2736 = vmatprep.subr.bf16.mxu0 0
        %2737 = vmatpush2.bf16.msra.mxu0 0
        %2738 = vmatprep.subr.bf16.mxu0 0
        %2739 = vmatpush2.bf16.msra.mxu0 0
        %2740 = vmatprep.subr.bf16.mxu0 0
        %2741 = vmatpush2.bf16.msra.mxu0 0
        %2742 = vmatprep.subr.bf16.mxu0 0
        %2743 = vmatpush2.bf16.msra.mxu0 0
        %2744 = vmatprep.subr.bf16.mxu0 0
        %2745 = vmatpush2.bf16.msra.mxu0 0
        %2746 = vmatprep.mubr.bf16.mxu0 0
        %2747 = vmatmul.mubr.bf16.gmra.mxu0 %v2712
        %v2748 = vpop.f32.mrf.mxu0
        %v2749 = vadd.f32 0.0, %v2748
        %v2750 = vpop.f32.mrf.mxu0
        %v2751 = vpop.f32.mrf.mxu0
        %v2752 = vadd.f32 0.0, %v2751
        %v2753 = vpop.f32.mrf.mxu0
        %2754 = vdwg.mxu0
        %v2756 = vsel %vm2526, %v2704, 0
        %2758 = vmatprep.subr.bf16.mxu0 0
        %2759 = vmatpush1.bf16.msra.mxu0 0
        %2760 = vmatprep.subr.bf16.mxu0 0
        %2761 = vmatpush1.bf16.msra.mxu0 0
        %2762 = vmatprep.subr.bf16.mxu0 0
        %2763 = vmatpush1.bf16.msra.mxu0 0
        %2764 = vmatprep.subr.bf16.mxu0 0
        %2765 = vmatpush1.bf16.msra.mxu0 0
        %2766 = vmatprep.subr.bf16.mxu0 0
        %2767 = vmatpush1.bf16.msra.mxu0 0
        %2768 = vmatprep.subr.bf16.mxu0 0
        %2769 = vmatpush1.bf16.msra.mxu0 0
        %2770 = vmatprep.subr.bf16.mxu0 0
        %2771 = vmatpush1.bf16.msra.mxu0 0
        %2772 = vmatprep.subr.bf16.mxu0 0
        %2773 = vmatpush1.bf16.msra.mxu0 %v2142
        %2774 = vmatprep.subr.bf16.mxu0 0
        %2775 = vmatpush2.bf16.msra.mxu0 0
        %2776 = vmatprep.subr.bf16.mxu0 0
        %2777 = vmatpush2.bf16.msra.mxu0 0
        %2778 = vmatprep.subr.bf16.mxu0 0
        %2779 = vmatpush2.bf16.msra.mxu0 0
        %2780 = vmatprep.subr.bf16.mxu0 0
        %2781 = vmatpush2.bf16.msra.mxu0 0
        %2782 = vmatprep.subr.bf16.mxu0 0
        %2783 = vmatpush2.bf16.msra.mxu0 0
        %2784 = vmatprep.subr.bf16.mxu0 0
        %2785 = vmatpush2.bf16.msra.mxu0 0
        %2786 = vmatprep.subr.bf16.mxu0 0
        %2787 = vmatpush2.bf16.msra.mxu0 0
        %2788 = vmatprep.subr.bf16.mxu0 0
        %2789 = vmatpush2.bf16.msra.mxu0 0
        %2790 = vmatprep.mubr.bf16.mxu0 0
        %2791 = vmatmul.mubr.bf16.gmra.mxu0 %v2756
        %v2792 = vpop.f32.mrf.mxu0
        %v2793 = vadd.f32 0.0, %v2792
        %v2794 = vpop.f32.mrf.mxu0
        %v2795 = vpop.f32.mrf.mxu0
        %v2796 = vadd.f32 0.0, %v2795
        %v2797 = vpop.f32.mrf.mxu0
        %2798 = vdwg.mxu0
        %v2800 = vsel %vm2526, %v2705, 0
        %2802 = vmatprep.subr.bf16.mxu0 0
        %2803 = vmatpush1.bf16.msra.mxu0 0
        %2804 = vmatprep.subr.bf16.mxu0 0
        %2805 = vmatpush1.bf16.msra.mxu0 0
        %2806 = vmatprep.subr.bf16.mxu0 0
        %2807 = vmatpush1.bf16.msra.mxu0 0
        %2808 = vmatprep.subr.bf16.mxu0 0
        %2809 = vmatpush1.bf16.msra.mxu0 0
        %2810 = vmatprep.subr.bf16.mxu0 0
        %2811 = vmatpush1.bf16.msra.mxu0 0
        %2812 = vmatprep.subr.bf16.mxu0 0
        %2813 = vmatpush1.bf16.msra.mxu0 0
        %2814 = vmatprep.subr.bf16.mxu0 0
        %2815 = vmatpush1.bf16.msra.mxu0 0
        %2816 = vmatprep.subr.bf16.mxu0 0
        %2817 = vmatpush1.bf16.msra.mxu0 %v2143
        %2818 = vmatprep.subr.bf16.mxu0 0
        %2819 = vmatpush2.bf16.msra.mxu0 0
        %2820 = vmatprep.subr.bf16.mxu0 0
        %2821 = vmatpush2.bf16.msra.mxu0 0
        %2822 = vmatprep.subr.bf16.mxu0 0
        %2823 = vmatpush2.bf16.msra.mxu0 0
        %2824 = vmatprep.subr.bf16.mxu0 0
        %2825 = vmatpush2.bf16.msra.mxu0 0
        %2826 = vmatprep.subr.bf16.mxu0 0
        %2827 = vmatpush2.bf16.msra.mxu0 0
        %2828 = vmatprep.subr.bf16.mxu0 0
        %2829 = vmatpush2.bf16.msra.mxu0 0
        %2830 = vmatprep.subr.bf16.mxu0 0
        %2831 = vmatpush2.bf16.msra.mxu0 0
        %2832 = vmatprep.subr.bf16.mxu0 0
        %2833 = vmatpush2.bf16.msra.mxu0 0
        %2834 = vmatprep.mubr.bf16.mxu0 0
        %2835 = vmatmul.mubr.bf16.gmra.mxu0 %v2800
        %v2836 = vpop.f32.mrf.mxu0
        %v2837 = vadd.f32 0.0, %v2836
        %v2838 = vpop.f32.mrf.mxu0
        %v2839 = vpop.f32.mrf.mxu0
        %v2840 = vadd.f32 0.0, %v2839
        %v2841 = vpop.f32.mrf.mxu0
        %2842 = vdwg.mxu0
        %v2844 = vsel %vm2526, %v2706, 0
        %2846 = vmatprep.subr.bf16.mxu0 0
        %2847 = vmatpush1.bf16.msra.mxu0 0
        %2848 = vmatprep.subr.bf16.mxu0 0
        %2849 = vmatpush1.bf16.msra.mxu0 0
        %2850 = vmatprep.subr.bf16.mxu0 0
        %2851 = vmatpush1.bf16.msra.mxu0 0
        %2852 = vmatprep.subr.bf16.mxu0 0
        %2853 = vmatpush1.bf16.msra.mxu0 0
        %2854 = vmatprep.subr.bf16.mxu0 0
        %2855 = vmatpush1.bf16.msra.mxu0 0
        %2856 = vmatprep.subr.bf16.mxu0 0
        %2857 = vmatpush1.bf16.msra.mxu0 0
        %2858 = vmatprep.subr.bf16.mxu0 0
        %2859 = vmatpush1.bf16.msra.mxu0 0
        %2860 = vmatprep.subr.bf16.mxu0 0
        %2861 = vmatpush1.bf16.msra.mxu0 %v2144
        %2862 = vmatprep.subr.bf16.mxu0 0
        %2863 = vmatpush2.bf16.msra.mxu0 0
        %2864 = vmatprep.subr.bf16.mxu0 0
        %2865 = vmatpush2.bf16.msra.mxu0 0
        %2866 = vmatprep.subr.bf16.mxu0 0
        %2867 = vmatpush2.bf16.msra.mxu0 0
        %2868 = vmatprep.subr.bf16.mxu0 0
        %2869 = vmatpush2.bf16.msra.mxu0 0
        %2870 = vmatprep.subr.bf16.mxu0 0
        %2871 = vmatpush2.bf16.msra.mxu0 0
        %2872 = vmatprep.subr.bf16.mxu0 0
        %2873 = vmatpush2.bf16.msra.mxu0 0
        %2874 = vmatprep.subr.bf16.mxu0 0
        %2875 = vmatpush2.bf16.msra.mxu0 0
        %2876 = vmatprep.subr.bf16.mxu0 0
        %2877 = vmatpush2.bf16.msra.mxu0 0
        %2878 = vmatprep.mubr.bf16.mxu0 0
        %2879 = vmatmul.mubr.bf16.gmra.mxu0 %v2844
        %v2880 = vpop.f32.mrf.mxu0
        %v2881 = vadd.f32 0.0, %v2880
        %v2882 = vpop.f32.mrf.mxu0
        %v2883 = vpop.f32.mrf.mxu0
        %v2884 = vadd.f32 0.0, %v2883
        %v2885 = vpop.f32.mrf.mxu0
        %2886 = vdwg.mxu0
        %v2888 = vsel %vm2526, %v2707, 0
        %2890 = vmatprep.subr.bf16.mxu0 0
        %2891 = vmatpush1.bf16.msra.mxu0 0
        %2892 = vmatprep.subr.bf16.mxu0 0
        %2893 = vmatpush1.bf16.msra.mxu0 0
        %2894 = vmatprep.subr.bf16.mxu0 0
        %2895 = vmatpush1.bf16.msra.mxu0 0
        %2896 = vmatprep.subr.bf16.mxu0 0
        %2897 = vmatpush1.bf16.msra.mxu0 0
        %2898 = vmatprep.subr.bf16.mxu0 0
        %2899 = vmatpush1.bf16.msra.mxu0 0
        %2900 = vmatprep.subr.bf16.mxu0 0
        %2901 = vmatpush1.bf16.msra.mxu0 0
        %2902 = vmatprep.subr.bf16.mxu0 0
        %2903 = vmatpush1.bf16.msra.mxu0 0
        %2904 = vmatprep.subr.bf16.mxu0 0
        %2905 = vmatpush1.bf16.msra.mxu0 %v2145
        %2906 = vmatprep.subr.bf16.mxu0 0
        %2907 = vmatpush2.bf16.msra.mxu0 0
        %2908 = vmatprep.subr.bf16.mxu0 0
        %2909 = vmatpush2.bf16.msra.mxu0 0
        %2910 = vmatprep.subr.bf16.mxu0 0
        %2911 = vmatpush2.bf16.msra.mxu0 0
        %2912 = vmatprep.subr.bf16.mxu0 0
        %2913 = vmatpush2.bf16.msra.mxu0 0
        %2914 = vmatprep.subr.bf16.mxu0 0
        %2915 = vmatpush2.bf16.msra.mxu0 0
        %2916 = vmatprep.subr.bf16.mxu0 0
        %2917 = vmatpush2.bf16.msra.mxu0 0
        %2918 = vmatprep.subr.bf16.mxu0 0
        %2919 = vmatpush2.bf16.msra.mxu0 0
        %2920 = vmatprep.subr.bf16.mxu0 0
        %2921 = vmatpush2.bf16.msra.mxu0 0
        %2922 = vmatprep.mubr.bf16.mxu0 0
        %2923 = vmatmul.mubr.bf16.gmra.mxu0 %v2888
        %v2924 = vpop.f32.mrf.mxu0
        %v2925 = vadd.f32 0.0, %v2924
        %v2926 = vpop.f32.mrf.mxu0
        %v2927 = vpop.f32.mrf.mxu0
        %v2928 = vadd.f32 0.0, %v2927
        %v2929 = vpop.f32.mrf.mxu0
        %2930 = vdwg.mxu0
        %v2932 = vsel %vm2526, %v2708, 0
        %2934 = vmatprep.subr.bf16.mxu0 0
        %2935 = vmatpush1.bf16.msra.mxu0 0
        %2936 = vmatprep.subr.bf16.mxu0 0
        %2937 = vmatpush1.bf16.msra.mxu0 0
        %2938 = vmatprep.subr.bf16.mxu0 0
        %2939 = vmatpush1.bf16.msra.mxu0 0
        %2940 = vmatprep.subr.bf16.mxu0 0
        %2941 = vmatpush1.bf16.msra.mxu0 0
        %2942 = vmatprep.subr.bf16.mxu0 0
        %2943 = vmatpush1.bf16.msra.mxu0 0
        %2944 = vmatprep.subr.bf16.mxu0 0
        %2945 = vmatpush1.bf16.msra.mxu0 0
        %2946 = vmatprep.subr.bf16.mxu0 0
        %2947 = vmatpush1.bf16.msra.mxu0 0
        %2948 = vmatprep.subr.bf16.mxu0 0
        %2949 = vmatpush1.bf16.msra.mxu0 %v2146
        %2950 = vmatprep.subr.bf16.mxu0 0
        %2951 = vmatpush2.bf16.msra.mxu0 0
        %2952 = vmatprep.subr.bf16.mxu0 0
        %2953 = vmatpush2.bf16.msra.mxu0 0
        %2954 = vmatprep.subr.bf16.mxu0 0
        %2955 = vmatpush2.bf16.msra.mxu0 0
        %2956 = vmatprep.subr.bf16.mxu0 0
        %2957 = vmatpush2.bf16.msra.mxu0 0
        %2958 = vmatprep.subr.bf16.mxu0 0
        %2959 = vmatpush2.bf16.msra.mxu0 0
        %2960 = vmatprep.subr.bf16.mxu0 0
        %2961 = vmatpush2.bf16.msra.mxu0 0
        %2962 = vmatprep.subr.bf16.mxu0 0
        %2963 = vmatpush2.bf16.msra.mxu0 0
        %2964 = vmatprep.subr.bf16.mxu0 0
        %2965 = vmatpush2.bf16.msra.mxu0 0
        %2966 = vmatprep.mubr.bf16.mxu0 0
        %2967 = vmatmul.mubr.bf16.gmra.mxu0 %v2932
        %v2968 = vpop.f32.mrf.mxu0
        %v2969 = vadd.f32 0.0, %v2968
        %v2970 = vpop.f32.mrf.mxu0
        %v2971 = vpop.f32.mrf.mxu0
        %v2972 = vadd.f32 0.0, %v2971
        %v2973 = vpop.f32.mrf.mxu0
        %2974 = vdwg.mxu0
        %v2976 = vsel %vm2526, %v2709, 0
        %2978 = vmatprep.subr.bf16.mxu0 0
        %2979 = vmatpush1.bf16.msra.mxu0 0
        %2980 = vmatprep.subr.bf16.mxu0 0
        %2981 = vmatpush1.bf16.msra.mxu0 0
        %2982 = vmatprep.subr.bf16.mxu0 0
        %2983 = vmatpush1.bf16.msra.mxu0 0
        %2984 = vmatprep.subr.bf16.mxu0 0
        %2985 = vmatpush1.bf16.msra.mxu0 0
        %2986 = vmatprep.subr.bf16.mxu0 0
        %2987 = vmatpush1.bf16.msra.mxu0 0
        %2988 = vmatprep.subr.bf16.mxu0 0
        %2989 = vmatpush1.bf16.msra.mxu0 0
        %2990 = vmatprep.subr.bf16.mxu0 0
        %2991 = vmatpush1.bf16.msra.mxu0 0
        %2992 = vmatprep.subr.bf16.mxu0 0
        %2993 = vmatpush1.bf16.msra.mxu0 %v2147
        %2994 = vmatprep.subr.bf16.mxu0 0
        %2995 = vmatpush2.bf16.msra.mxu0 0
        %2996 = vmatprep.subr.bf16.mxu0 0
        %2997 = vmatpush2.bf16.msra.mxu0 0
        %2998 = vmatprep.subr.bf16.mxu0 0
        %2999 = vmatpush2.bf16.msra.mxu0 0
        %3000 = vmatprep.subr.bf16.mxu0 0
        %3001 = vmatpush2.bf16.msra.mxu0 0
        %3002 = vmatprep.subr.bf16.mxu0 0
        %3003 = vmatpush2.bf16.msra.mxu0 0
        %3004 = vmatprep.subr.bf16.mxu0 0
        %3005 = vmatpush2.bf16.msra.mxu0 0
        %3006 = vmatprep.subr.bf16.mxu0 0
        %3007 = vmatpush2.bf16.msra.mxu0 0
        %3008 = vmatprep.subr.bf16.mxu0 0
        %3009 = vmatpush2.bf16.msra.mxu0 0
        %3010 = vmatprep.mubr.bf16.mxu0 0
        %3011 = vmatmul.mubr.bf16.gmra.mxu0 %v2976
        %v3012 = vpop.f32.mrf.mxu0
        %v3013 = vadd.f32 0.0, %v3012
        %v3014 = vpop.f32.mrf.mxu0
        %v3015 = vpop.f32.mrf.mxu0
        %v3016 = vadd.f32 0.0, %v3015
        %v3017 = vpop.f32.mrf.mxu0
        %3018 = vdwg.mxu0
        %v3020 = vsel %vm2526, %v2710, 0
        %3022 = vmatprep.subr.bf16.mxu0 0
        %3023 = vmatpush1.bf16.msra.mxu0 0
        %3024 = vmatprep.subr.bf16.mxu0 0
        %3025 = vmatpush1.bf16.msra.mxu0 0
        %3026 = vmatprep.subr.bf16.mxu0 0
        %3027 = vmatpush1.bf16.msra.mxu0 0
        %3028 = vmatprep.subr.bf16.mxu0 0
        %3029 = vmatpush1.bf16.msra.mxu0 0
        %3030 = vmatprep.subr.bf16.mxu0 0
        %3031 = vmatpush1.bf16.msra.mxu0 0
        %3032 = vmatprep.subr.bf16.mxu0 0
        %3033 = vmatpush1.bf16.msra.mxu0 0
        %3034 = vmatprep.subr.bf16.mxu0 0
        %3035 = vmatpush1.bf16.msra.mxu0 0
        %3036 = vmatprep.subr.bf16.mxu0 0
        %3037 = vmatpush1.bf16.msra.mxu0 %v2148
        %3038 = vmatprep.subr.bf16.mxu0 0
        %3039 = vmatpush2.bf16.msra.mxu0 0
        %3040 = vmatprep.subr.bf16.mxu0 0
        %3041 = vmatpush2.bf16.msra.mxu0 0
        %3042 = vmatprep.subr.bf16.mxu0 0
        %3043 = vmatpush2.bf16.msra.mxu0 0
        %3044 = vmatprep.subr.bf16.mxu0 0
        %3045 = vmatpush2.bf16.msra.mxu0 0
        %3046 = vmatprep.subr.bf16.mxu0 0
        %3047 = vmatpush2.bf16.msra.mxu0 0
        %3048 = vmatprep.subr.bf16.mxu0 0
        %3049 = vmatpush2.bf16.msra.mxu0 0
        %3050 = vmatprep.subr.bf16.mxu0 0
        %3051 = vmatpush2.bf16.msra.mxu0 0
        %3052 = vmatprep.subr.bf16.mxu0 0
        %3053 = vmatpush2.bf16.msra.mxu0 0
        %3054 = vmatprep.mubr.bf16.mxu0 0
        %3055 = vmatmul.mubr.bf16.gmra.mxu0 %v3020
        %v3056 = vpop.f32.mrf.mxu0
        %v3057 = vadd.f32 0.0, %v3056
        %v3058 = vpop.f32.mrf.mxu0
        %v3059 = vpop.f32.mrf.mxu0
        %v3060 = vadd.f32 0.0, %v3059
        %v3061 = vpop.f32.mrf.mxu0
        %3062 = vdwg.mxu0
        %v3063 = vcombine.low %v2749, %v2837
        %v3064 = vcombine.high %v2749, %v2837
        %v3066 = vunpack.c.l.s4 1983009808
        %v3067 = vunpack.c.0.s8 %v3066
        %v3068 = vlaneseq
        %v3069 = vshrl.u32 %v3068, 7
        %v3070 = vsub.s32 %v3067, %v3069
        %v3071 = vrot.slane %v3063, %v3070
        %v3073 = vunpack.c.l.s4 1983009808
        %v3074 = vunpack.c.0.s8 %v3073
        %v3075 = vlaneseq
        %v3076 = vshrl.u32 %v3075, 7
        %v3077 = vsub.s32 %v3074, %v3076
        %v3078 = vrot.slane %v3064, %v3077
        %v3079 = vcombine.low %v2793, %v2881
        %v3080 = vcombine.high %v2793, %v2881
        %v3082 = vunpack.c.l.s4 1983009808
        %v3083 = vunpack.c.0.s8 %v3082
        %v3084 = vlaneseq
        %v3085 = vshrl.u32 %v3084, 7
        %v3086 = vsub.s32 %v3083, %v3085
        %v3087 = vrot.slane %v3079, %v3086
        %v3089 = vunpack.c.l.s4 1983009808
        %v3090 = vunpack.c.0.s8 %v3089
        %v3091 = vlaneseq
        %v3092 = vshrl.u32 %v3091, 7
        %v3093 = vsub.s32 %v3090, %v3092
        %v3094 = vrot.slane %v3080, %v3093
        %v3095 = vcombine.low %v2925, %v3013
        %v3096 = vcombine.high %v2925, %v3013
        %v3098 = vunpack.c.l.s4 1983009808
        %v3099 = vunpack.c.0.s8 %v3098
        %v3100 = vlaneseq
        %v3101 = vshrl.u32 %v3100, 7
        %v3102 = vsub.s32 %v3099, %v3101
        %v3103 = vrot.slane %v3095, %v3102
        %v3105 = vunpack.c.l.s4 1983009808
        %v3106 = vunpack.c.0.s8 %v3105
        %v3107 = vlaneseq
        %v3108 = vshrl.u32 %v3107, 7
        %v3109 = vsub.s32 %v3106, %v3108
        %v3110 = vrot.slane %v3096, %v3109
        %v3111 = vcombine.low %v2969, %v3057
        %v3112 = vcombine.high %v2969, %v3057
        %v3114 = vunpack.c.l.s4 1983009808
        %v3115 = vunpack.c.0.s8 %v3114
        %v3116 = vlaneseq
        %v3117 = vshrl.u32 %v3116, 7
        %v3118 = vsub.s32 %v3115, %v3117
        %v3119 = vrot.slane %v3111, %v3118
        %v3121 = vunpack.c.l.s4 1983009808
        %v3122 = vunpack.c.0.s8 %v3121
        %v3123 = vlaneseq
        %v3124 = vshrl.u32 %v3123, 7
        %v3125 = vsub.s32 %v3122, %v3124
        %v3126 = vrot.slane %v3112, %v3125
        %v3127 = vcombine.low %v3071, %v3087
        %v3128 = vcombine.high %v3071, %v3087
        %v3130 = vunpack.c.l.s4 1934713408
        %v3131 = vunpack.c.0.s8 %v3130
        %v3132 = vlaneseq
        %v3133 = vshrl.u32 %v3132, 7
        %v3134 = vsub.s32 %v3131, %v3133
        %v3135 = vrot.slane %v3127, %v3134
        %v3137 = vunpack.c.l.s4 1934713408
        %v3138 = vunpack.c.0.s8 %v3137
        %v3139 = vlaneseq
        %v3140 = vshrl.u32 %v3139, 7
        %v3141 = vsub.s32 %v3138, %v3140
        %v3142 = vrot.slane %v3128, %v3141
        %v3143 = vcombine.low %v3078, %v3094
        %v3144 = vcombine.high %v3078, %v3094
        %v3146 = vunpack.c.l.s4 1934713408
        %v3147 = vunpack.c.0.s8 %v3146
        %v3148 = vlaneseq
        %v3149 = vshrl.u32 %v3148, 7
        %v3150 = vsub.s32 %v3147, %v3149
        %v3151 = vrot.slane %v3143, %v3150
        %v3153 = vunpack.c.l.s4 1934713408
        %v3154 = vunpack.c.0.s8 %v3153
        %v3155 = vlaneseq
        %v3156 = vshrl.u32 %v3155, 7
        %v3157 = vsub.s32 %v3154, %v3156
        %v3158 = vrot.slane %v3144, %v3157
        %v3159 = vcombine.low %v3103, %v3119
        %v3160 = vcombine.high %v3103, %v3119
        %v3162 = vunpack.c.l.s4 1934713408
        %v3163 = vunpack.c.0.s8 %v3162
        %v3164 = vlaneseq
        %v3165 = vshrl.u32 %v3164, 7
        %v3166 = vsub.s32 %v3163, %v3165
        %v3167 = vrot.slane %v3159, %v3166
        %v3169 = vunpack.c.l.s4 1934713408
        %v3170 = vunpack.c.0.s8 %v3169
        %v3171 = vlaneseq
        %v3172 = vshrl.u32 %v3171, 7
        %v3173 = vsub.s32 %v3170, %v3172
        %v3174 = vrot.slane %v3160, %v3173
        %v3175 = vcombine.low %v3110, %v3126
        %v3176 = vcombine.high %v3110, %v3126
        %v3178 = vunpack.c.l.s4 1934713408
        %v3179 = vunpack.c.0.s8 %v3178
        %v3180 = vlaneseq
        %v3181 = vshrl.u32 %v3180, 7
        %v3182 = vsub.s32 %v3179, %v3181
        %v3183 = vrot.slane %v3175, %v3182
        %v3185 = vunpack.c.l.s4 1934713408
        %v3186 = vunpack.c.0.s8 %v3185
        %v3187 = vlaneseq
        %v3188 = vshrl.u32 %v3187, 7
        %v3189 = vsub.s32 %v3186, %v3188
        %v3190 = vrot.slane %v3176, %v3189
        %v3191 = vcombine.low %v3135, %v3167
        %v3192 = vcombine.high %v3135, %v3167
        %v3193 = vcombine.low %v3142, %v3174
        %v3194 = vcombine.high %v3142, %v3174
        %v3195 = vcombine.low %v3151, %v3183
        %v3196 = vcombine.high %v3151, %v3183
        %v3197 = vcombine.low %v3158, %v3190
        %v3198 = vcombine.high %v3158, %v3190
        %v3199 = vcombine.low %v2752, %v2840
        %v3200 = vcombine.high %v2752, %v2840
        %v3202 = vunpack.c.l.s4 1983009808
        %v3203 = vunpack.c.0.s8 %v3202
        %v3204 = vlaneseq
        %v3205 = vshrl.u32 %v3204, 7
        %v3206 = vsub.s32 %v3203, %v3205
        %v3207 = vrot.slane %v3199, %v3206
        %v3209 = vunpack.c.l.s4 1983009808
        %v3210 = vunpack.c.0.s8 %v3209
        %v3211 = vlaneseq
        %v3212 = vshrl.u32 %v3211, 7
        %v3213 = vsub.s32 %v3210, %v3212
        %v3214 = vrot.slane %v3200, %v3213
        %v3215 = vcombine.low %v2796, %v2884
        %v3216 = vcombine.high %v2796, %v2884
        %v3218 = vunpack.c.l.s4 1983009808
        %v3219 = vunpack.c.0.s8 %v3218
        %v3220 = vlaneseq
        %v3221 = vshrl.u32 %v3220, 7
        %v3222 = vsub.s32 %v3219, %v3221
        %v3223 = vrot.slane %v3215, %v3222
        %v3225 = vunpack.c.l.s4 1983009808
        %v3226 = vunpack.c.0.s8 %v3225
        %v3227 = vlaneseq
        %v3228 = vshrl.u32 %v3227, 7
        %v3229 = vsub.s32 %v3226, %v3228
        %v3230 = vrot.slane %v3216, %v3229
        %v3231 = vcombine.low %v2928, %v3016
        %v3232 = vcombine.high %v2928, %v3016
        %v3234 = vunpack.c.l.s4 1983009808
        %v3235 = vunpack.c.0.s8 %v3234
        %v3236 = vlaneseq
        %v3237 = vshrl.u32 %v3236, 7
        %v3238 = vsub.s32 %v3235, %v3237
        %v3239 = vrot.slane %v3231, %v3238
        %v3241 = vunpack.c.l.s4 1983009808
        %v3242 = vunpack.c.0.s8 %v3241
        %v3243 = vlaneseq
        %v3244 = vshrl.u32 %v3243, 7
        %v3245 = vsub.s32 %v3242, %v3244
        %v3246 = vrot.slane %v3232, %v3245
        %v3247 = vcombine.low %v2972, %v3060
        %v3248 = vcombine.high %v2972, %v3060
        %v3250 = vunpack.c.l.s4 1983009808
        %v3251 = vunpack.c.0.s8 %v3250
        %v3252 = vlaneseq
        %v3253 = vshrl.u32 %v3252, 7
        %v3254 = vsub.s32 %v3251, %v3253
        %v3255 = vrot.slane %v3247, %v3254
        %v3257 = vunpack.c.l.s4 1983009808
        %v3258 = vunpack.c.0.s8 %v3257
        %v3259 = vlaneseq
        %v3260 = vshrl.u32 %v3259, 7
        %v3261 = vsub.s32 %v3258, %v3260
        %v3262 = vrot.slane %v3248, %v3261
        %v3263 = vcombine.low %v3207, %v3223
        %v3264 = vcombine.high %v3207, %v3223
        %v3266 = vunpack.c.l.s4 1934713408
        %v3267 = vunpack.c.0.s8 %v3266
        %v3268 = vlaneseq
        %v3269 = vshrl.u32 %v3268, 7
        %v3270 = vsub.s32 %v3267, %v3269
        %v3271 = vrot.slane %v3263, %v3270
        %v3273 = vunpack.c.l.s4 1934713408
        %v3274 = vunpack.c.0.s8 %v3273
        %v3275 = vlaneseq
        %v3276 = vshrl.u32 %v3275, 7
        %v3277 = vsub.s32 %v3274, %v3276
        %v3278 = vrot.slane %v3264, %v3277
        %v3279 = vcombine.low %v3214, %v3230
        %v3280 = vcombine.high %v3214, %v3230
        %v3282 = vunpack.c.l.s4 1934713408
        %v3283 = vunpack.c.0.s8 %v3282
        %v3284 = vlaneseq
        %v3285 = vshrl.u32 %v3284, 7
        %v3286 = vsub.s32 %v3283, %v3285
        %v3287 = vrot.slane %v3279, %v3286
        %v3289 = vunpack.c.l.s4 1934713408
        %v3290 = vunpack.c.0.s8 %v3289
        %v3291 = vlaneseq
        %v3292 = vshrl.u32 %v3291, 7
        %v3293 = vsub.s32 %v3290, %v3292
        %v3294 = vrot.slane %v3280, %v3293
        %v3295 = vcombine.low %v3239, %v3255
        %v3296 = vcombine.high %v3239, %v3255
        %v3298 = vunpack.c.l.s4 1934713408
        %v3299 = vunpack.c.0.s8 %v3298
        %v3300 = vlaneseq
        %v3301 = vshrl.u32 %v3300, 7
        %v3302 = vsub.s32 %v3299, %v3301
        %v3303 = vrot.slane %v3295, %v3302
        %v3305 = vunpack.c.l.s4 1934713408
        %v3306 = vunpack.c.0.s8 %v3305
        %v3307 = vlaneseq
        %v3308 = vshrl.u32 %v3307, 7
        %v3309 = vsub.s32 %v3306, %v3308
        %v3310 = vrot.slane %v3296, %v3309
        %v3311 = vcombine.low %v3246, %v3262
        %v3312 = vcombine.high %v3246, %v3262
        %v3314 = vunpack.c.l.s4 1934713408
        %v3315 = vunpack.c.0.s8 %v3314
        %v3316 = vlaneseq
        %v3317 = vshrl.u32 %v3316, 7
        %v3318 = vsub.s32 %v3315, %v3317
        %v3319 = vrot.slane %v3311, %v3318
        %v3321 = vunpack.c.l.s4 1934713408
        %v3322 = vunpack.c.0.s8 %v3321
        %v3323 = vlaneseq
        %v3324 = vshrl.u32 %v3323, 7
        %v3325 = vsub.s32 %v3322, %v3324
        %v3326 = vrot.slane %v3312, %v3325
        %v3327 = vcombine.low %v3271, %v3303
        %v3328 = vcombine.high %v3271, %v3303
        %v3329 = vcombine.low %v3278, %v3310
        %v3330 = vcombine.high %v3278, %v3310
        %v3331 = vcombine.low %v3287, %v3319
        %v3332 = vcombine.high %v3287, %v3319
        %v3333 = vcombine.low %v3294, %v3326
        %v3334 = vcombine.high %v3294, %v3326
        %v3335 = vcombine.low %v3191, %v3193
        %v3336 = vcombine.high %v3191, %v3193
        %v3338 = vunpack.c.l.s4 1983009808
        %v3339 = vunpack.c.0.s8 %v3338
        %v3340 = vlaneseq
        %v3341 = vshrl.u32 %v3340, 7
        %v3342 = vsub.s32 %v3339, %v3341
        %v3343 = vrot.slane %v3335, %v3342
        %v3345 = vunpack.c.l.s4 1983009808
        %v3346 = vunpack.c.0.s8 %v3345
        %v3347 = vlaneseq
        %v3348 = vshrl.u32 %v3347, 7
        %v3349 = vsub.s32 %v3346, %v3348
        %v3350 = vrot.slane %v3336, %v3349
        %v3351 = vcombine.low %v3192, %v3194
        %v3352 = vcombine.high %v3192, %v3194
        %v3354 = vunpack.c.l.s4 1983009808
        %v3355 = vunpack.c.0.s8 %v3354
        %v3356 = vlaneseq
        %v3357 = vshrl.u32 %v3356, 7
        %v3358 = vsub.s32 %v3355, %v3357
        %v3359 = vrot.slane %v3351, %v3358
        %v3361 = vunpack.c.l.s4 1983009808
        %v3362 = vunpack.c.0.s8 %v3361
        %v3363 = vlaneseq
        %v3364 = vshrl.u32 %v3363, 7
        %v3365 = vsub.s32 %v3362, %v3364
        %v3366 = vrot.slane %v3352, %v3365
        %v3367 = vcombine.low %v3195, %v3197
        %v3368 = vcombine.high %v3195, %v3197
        %v3370 = vunpack.c.l.s4 1983009808
        %v3371 = vunpack.c.0.s8 %v3370
        %v3372 = vlaneseq
        %v3373 = vshrl.u32 %v3372, 7
        %v3374 = vsub.s32 %v3371, %v3373
        %v3375 = vrot.slane %v3367, %v3374
        %v3377 = vunpack.c.l.s4 1983009808
        %v3378 = vunpack.c.0.s8 %v3377
        %v3379 = vlaneseq
        %v3380 = vshrl.u32 %v3379, 7
        %v3381 = vsub.s32 %v3378, %v3380
        %v3382 = vrot.slane %v3368, %v3381
        %v3383 = vcombine.low %v3196, %v3198
        %v3384 = vcombine.high %v3196, %v3198
        %v3386 = vunpack.c.l.s4 1983009808
        %v3387 = vunpack.c.0.s8 %v3386
        %v3388 = vlaneseq
        %v3389 = vshrl.u32 %v3388, 7
        %v3390 = vsub.s32 %v3387, %v3389
        %v3391 = vrot.slane %v3383, %v3390
        %v3393 = vunpack.c.l.s4 1983009808
        %v3394 = vunpack.c.0.s8 %v3393
        %v3395 = vlaneseq
        %v3396 = vshrl.u32 %v3395, 7
        %v3397 = vsub.s32 %v3394, %v3396
        %v3398 = vrot.slane %v3384, %v3397
        %v3399 = vcombine.low %v3343, %v3359
        %v3400 = vcombine.high %v3343, %v3359
        %v3402 = vunpack.c.l.s4 1934713408
        %v3403 = vunpack.c.0.s8 %v3402
        %v3404 = vlaneseq
        %v3405 = vshrl.u32 %v3404, 7
        %v3406 = vsub.s32 %v3403, %v3405
        %v3407 = vrot.slane %v3399, %v3406
        %v3409 = vunpack.c.l.s4 1934713408
        %v3410 = vunpack.c.0.s8 %v3409
        %v3411 = vlaneseq
        %v3412 = vshrl.u32 %v3411, 7
        %v3413 = vsub.s32 %v3410, %v3412
        %v3414 = vrot.slane %v3400, %v3413
        %v3415 = vcombine.low %v3350, %v3366
        %v3416 = vcombine.high %v3350, %v3366
        %v3418 = vunpack.c.l.s4 1934713408
        %v3419 = vunpack.c.0.s8 %v3418
        %v3420 = vlaneseq
        %v3421 = vshrl.u32 %v3420, 7
        %v3422 = vsub.s32 %v3419, %v3421
        %v3423 = vrot.slane %v3415, %v3422
        %v3425 = vunpack.c.l.s4 1934713408
        %v3426 = vunpack.c.0.s8 %v3425
        %v3427 = vlaneseq
        %v3428 = vshrl.u32 %v3427, 7
        %v3429 = vsub.s32 %v3426, %v3428
        %v3430 = vrot.slane %v3416, %v3429
        %v3431 = vcombine.low %v3375, %v3391
        %v3432 = vcombine.high %v3375, %v3391
        %v3434 = vunpack.c.l.s4 1934713408
        %v3435 = vunpack.c.0.s8 %v3434
        %v3436 = vlaneseq
        %v3437 = vshrl.u32 %v3436, 7
        %v3438 = vsub.s32 %v3435, %v3437
        %v3439 = vrot.slane %v3431, %v3438
        %v3441 = vunpack.c.l.s4 1934713408
        %v3442 = vunpack.c.0.s8 %v3441
        %v3443 = vlaneseq
        %v3444 = vshrl.u32 %v3443, 7
        %v3445 = vsub.s32 %v3442, %v3444
        %v3446 = vrot.slane %v3432, %v3445
        %v3447 = vcombine.low %v3382, %v3398
        %v3448 = vcombine.high %v3382, %v3398
        %v3450 = vunpack.c.l.s4 1934713408
        %v3451 = vunpack.c.0.s8 %v3450
        %v3452 = vlaneseq
        %v3453 = vshrl.u32 %v3452, 7
        %v3454 = vsub.s32 %v3451, %v3453
        %v3455 = vrot.slane %v3447, %v3454
        %v3457 = vunpack.c.l.s4 1934713408
        %v3458 = vunpack.c.0.s8 %v3457
        %v3459 = vlaneseq
        %v3460 = vshrl.u32 %v3459, 7
        %v3461 = vsub.s32 %v3458, %v3460
        %v3462 = vrot.slane %v3448, %v3461
        %v3463 = vcombine.low %v3407, %v3439
        %v3464 = vcombine.high %v3407, %v3439
        %v3465 = vcombine.low %v3414, %v3446
        %v3466 = vcombine.high %v3414, %v3446
        %v3467 = vcombine.low %v3423, %v3455
        %v3468 = vcombine.high %v3423, %v3455
        %v3469 = vcombine.low %v3430, %v3462
        %v3470 = vcombine.high %v3430, %v3462
        %v3471 = vcombine.low %v3327, %v3329
        %v3472 = vcombine.high %v3327, %v3329
        %v3474 = vunpack.c.l.s4 1983009808
        %v3475 = vunpack.c.0.s8 %v3474
        %v3476 = vlaneseq
        %v3477 = vshrl.u32 %v3476, 7
        %v3478 = vsub.s32 %v3475, %v3477
        %v3479 = vrot.slane %v3471, %v3478
        %v3481 = vunpack.c.l.s4 1983009808
        %v3482 = vunpack.c.0.s8 %v3481
        %v3483 = vlaneseq
        %v3484 = vshrl.u32 %v3483, 7
        %v3485 = vsub.s32 %v3482, %v3484
        %v3486 = vrot.slane %v3472, %v3485
        %v3487 = vcombine.low %v3328, %v3330
        %v3488 = vcombine.high %v3328, %v3330
        %v3490 = vunpack.c.l.s4 1983009808
        %v3491 = vunpack.c.0.s8 %v3490
        %v3492 = vlaneseq
        %v3493 = vshrl.u32 %v3492, 7
        %v3494 = vsub.s32 %v3491, %v3493
        %v3495 = vrot.slane %v3487, %v3494
        %v3497 = vunpack.c.l.s4 1983009808
        %v3498 = vunpack.c.0.s8 %v3497
        %v3499 = vlaneseq
        %v3500 = vshrl.u32 %v3499, 7
        %v3501 = vsub.s32 %v3498, %v3500
        %v3502 = vrot.slane %v3488, %v3501
        %v3503 = vcombine.low %v3331, %v3333
        %v3504 = vcombine.high %v3331, %v3333
        %v3506 = vunpack.c.l.s4 1983009808
        %v3507 = vunpack.c.0.s8 %v3506
        %v3508 = vlaneseq
        %v3509 = vshrl.u32 %v3508, 7
        %v3510 = vsub.s32 %v3507, %v3509
        %v3511 = vrot.slane %v3503, %v3510
        %v3513 = vunpack.c.l.s4 1983009808
        %v3514 = vunpack.c.0.s8 %v3513
        %v3515 = vlaneseq
        %v3516 = vshrl.u32 %v3515, 7
        %v3517 = vsub.s32 %v3514, %v3516
        %v3518 = vrot.slane %v3504, %v3517
        %v3519 = vcombine.low %v3332, %v3334
        %v3520 = vcombine.high %v3332, %v3334
        %v3522 = vunpack.c.l.s4 1983009808
        %v3523 = vunpack.c.0.s8 %v3522
        %v3524 = vlaneseq
        %v3525 = vshrl.u32 %v3524, 7
        %v3526 = vsub.s32 %v3523, %v3525
        %v3527 = vrot.slane %v3519, %v3526
        %v3529 = vunpack.c.l.s4 1983009808
        %v3530 = vunpack.c.0.s8 %v3529
        %v3531 = vlaneseq
        %v3532 = vshrl.u32 %v3531, 7
        %v3533 = vsub.s32 %v3530, %v3532
        %v3534 = vrot.slane %v3520, %v3533
        %v3535 = vcombine.low %v3479, %v3495
        %v3536 = vcombine.high %v3479, %v3495
        %v3538 = vunpack.c.l.s4 1934713408
        %v3539 = vunpack.c.0.s8 %v3538
        %v3540 = vlaneseq
        %v3541 = vshrl.u32 %v3540, 7
        %v3542 = vsub.s32 %v3539, %v3541
        %v3543 = vrot.slane %v3535, %v3542
        %v3545 = vunpack.c.l.s4 1934713408
        %v3546 = vunpack.c.0.s8 %v3545
        %v3547 = vlaneseq
        %v3548 = vshrl.u32 %v3547, 7
        %v3549 = vsub.s32 %v3546, %v3548
        %v3550 = vrot.slane %v3536, %v3549
        %v3551 = vcombine.low %v3486, %v3502
        %v3552 = vcombine.high %v3486, %v3502
        %v3554 = vunpack.c.l.s4 1934713408
        %v3555 = vunpack.c.0.s8 %v3554
        %v3556 = vlaneseq
        %v3557 = vshrl.u32 %v3556, 7
        %v3558 = vsub.s32 %v3555, %v3557
        %v3559 = vrot.slane %v3551, %v3558
        %v3561 = vunpack.c.l.s4 1934713408
        %v3562 = vunpack.c.0.s8 %v3561
        %v3563 = vlaneseq
        %v3564 = vshrl.u32 %v3563, 7
        %v3565 = vsub.s32 %v3562, %v3564
        %v3566 = vrot.slane %v3552, %v3565
        %v3567 = vcombine.low %v3511, %v3527
        %v3568 = vcombine.high %v3511, %v3527
        %v3570 = vunpack.c.l.s4 1934713408
        %v3571 = vunpack.c.0.s8 %v3570
        %v3572 = vlaneseq
        %v3573 = vshrl.u32 %v3572, 7
        %v3574 = vsub.s32 %v3571, %v3573
        %v3575 = vrot.slane %v3567, %v3574
        %v3577 = vunpack.c.l.s4 1934713408
        %v3578 = vunpack.c.0.s8 %v3577
        %v3579 = vlaneseq
        %v3580 = vshrl.u32 %v3579, 7
        %v3581 = vsub.s32 %v3578, %v3580
        %v3582 = vrot.slane %v3568, %v3581
        %v3583 = vcombine.low %v3518, %v3534
        %v3584 = vcombine.high %v3518, %v3534
        %v3586 = vunpack.c.l.s4 1934713408
        %v3587 = vunpack.c.0.s8 %v3586
        %v3588 = vlaneseq
        %v3589 = vshrl.u32 %v3588, 7
        %v3590 = vsub.s32 %v3587, %v3589
        %v3591 = vrot.slane %v3583, %v3590
        %v3593 = vunpack.c.l.s4 1934713408
        %v3594 = vunpack.c.0.s8 %v3593
        %v3595 = vlaneseq
        %v3596 = vshrl.u32 %v3595, 7
        %v3597 = vsub.s32 %v3594, %v3596
        %v3598 = vrot.slane %v3584, %v3597
        %v3599 = vcombine.low %v3543, %v3575
        %v3600 = vcombine.high %v3543, %v3575
        %v3601 = vcombine.low %v3550, %v3582
        %v3602 = vcombine.high %v3550, %v3582
        %v3603 = vcombine.low %v3559, %v3591
        %v3604 = vcombine.high %v3559, %v3591
        %v3605 = vcombine.low %v3566, %v3598
        %v3606 = vcombine.high %v3566, %v3598
        %3609 = vrot.lane.b32.xlu0 %v3464, 8
        %v3610 = vpop.permute.xlu0 %3609
        %3611 = vrot.lane.b32.xlu0 %v3600, 8
        %v3612 = vpop.permute.xlu0 %3611
        %3617 = vrot.lane.b32.xlu0 %v3465, 16
        %v3618 = vpop.permute.xlu0 %3617
        %3619 = vrot.lane.b32.xlu0 %v3601, 16
        %v3620 = vpop.permute.xlu0 %3619
        %3625 = vrot.lane.b32.xlu0 %v3466, 24
        %v3626 = vpop.permute.xlu0 %3625
        %3627 = vrot.lane.b32.xlu0 %v3602, 24
        %v3628 = vpop.permute.xlu0 %3627
        %3633 = vrot.lane.b32.xlu0 %v3467, 32
        %v3634 = vpop.permute.xlu0 %3633
        %3635 = vrot.lane.b32.xlu0 %v3603, 32
        %v3636 = vpop.permute.xlu0 %3635
        %3641 = vrot.lane.b32.xlu0 %v3468, 40
        %v3642 = vpop.permute.xlu0 %3641
        %3643 = vrot.lane.b32.xlu0 %v3604, 40
        %v3644 = vpop.permute.xlu0 %3643
        %3649 = vrot.lane.b32.xlu0 %v3469, 48
        %v3650 = vpop.permute.xlu0 %3649
        %3651 = vrot.lane.b32.xlu0 %v3605, 48
        %v3652 = vpop.permute.xlu0 %3651
        %3657 = vrot.lane.b32.xlu0 %v3470, 56
        %v3658 = vpop.permute.xlu0 %3657
        %3659 = vrot.lane.b32.xlu0 %v3606, 56
        %v3660 = vpop.permute.xlu0 %3659
        %v3663 = vsel %vm2149, %v3463, %v3610
        %v3664 = vsel %vm2149, %v3599, %v3612
        %v3665 = vsel %vm2526, %v3663, %v3618
        %v3666 = vsel %vm2526, %v3664, %v3620
        %vm3667 = vcmask 195584
        %v3668 = vsel %vm3667, %v3665, %v3626
        %v3669 = vsel %vm3667, %v3666, %v3628
        %vm3670 = vcmask 261120
        %v3671 = vsel %vm3670, %v3668, %v3634
        %v3672 = vsel %vm3670, %v3669, %v3636
        %vm3673 = vcmask 326656
        %v3674 = vsel %vm3673, %v3671, %v3642
        %v3675 = vsel %vm3673, %v3672, %v3644
        %vm3676 = vcmask 392192
        %v3677 = vsel %vm3676, %v3674, %v3650
        %v3678 = vsel %vm3676, %v3675, %v3652
        %vm3679 = vcmask 457728
        %v3680 = vsel %vm3679, %v3677, %v3658
        %v3681 = vsel %vm3679, %v3678, %v3660
        %v3682 = vpack.c.bf16 %v3681, %v3680
        %v3684 = vlaneseq
        %v3685 = vshrl.u32 %v3684, 7
        %v3686 = vsub.s32 0, %v3685
        %v3687 = vrot.slane %v262, %v3686
        %v3697 = vunpack.c.l.b16 %v254
        %v3698 = vunpack.c.l.b16 %v255
        %v3699 = vunpack.c.l.b16 %v256
        %v3700 = vunpack.c.l.b16 %v257
        %v3701 = vunpack.c.l.b16 %v258
        %v3702 = vunpack.c.l.b16 %v259
        %v3703 = vunpack.c.l.b16 %v260
        %v3704 = vunpack.c.l.b16 %v261
        %v3705 = vpack.c.b16 %v3698, %v3697
        %v3706 = vpack.c.b16 %v3700, %v3699
        %v3707 = vpack.c.b16 %v3702, %v3701
        %v3708 = vpack.c.b16 %v3704, %v3703
        %v3714 = vsel %vm310, %v3682, 0
        %3716 = vmatprep.subr.bf16.mxu0 0
        %3717 = vmatpush1.bf16.msra.mxu0 0
        %3718 = vmatprep.subr.bf16.mxu0 0
        %3719 = vmatpush1.bf16.msra.mxu0 0
        %3720 = vmatprep.subr.bf16.mxu0 0
        %3721 = vmatpush1.bf16.msra.mxu0 0
        %3722 = vmatprep.subr.bf16.mxu0 0
        %3723 = vmatpush1.bf16.msra.mxu0 0
        %3724 = vmatprep.subr.bf16.mxu0 0
        %3725 = vmatpush1.bf16.msra.mxu0 %v3708
        %3726 = vmatprep.subr.bf16.mxu0 0
        %3727 = vmatpush1.bf16.msra.mxu0 %v3707
        %3728 = vmatprep.subr.bf16.mxu0 0
        %3729 = vmatpush1.bf16.msra.mxu0 %v3706
        %3730 = vmatprep.subr.bf16.mxu0 0
        %3731 = vmatpush1.bf16.msra.mxu0 %v3705
        %3732 = vmatprep.subr.bf16.mxu0 0
        %3733 = vmatpush2.bf16.msra.mxu0 0
        %3734 = vmatprep.subr.bf16.mxu0 0
        %3735 = vmatpush2.bf16.msra.mxu0 0
        %3736 = vmatprep.subr.bf16.mxu0 0
        %3737 = vmatpush2.bf16.msra.mxu0 0
        %3738 = vmatprep.subr.bf16.mxu0 0
        %3739 = vmatpush2.bf16.msra.mxu0 0
        %3740 = vmatprep.subr.bf16.mxu0 0
        %3741 = vmatpush2.bf16.msra.mxu0 0
        %3742 = vmatprep.subr.bf16.mxu0 0
        %3743 = vmatpush2.bf16.msra.mxu0 0
        %3744 = vmatprep.subr.bf16.mxu0 0
        %3745 = vmatpush2.bf16.msra.mxu0 0
        %3746 = vmatprep.subr.bf16.mxu0 0
        %3747 = vmatpush2.bf16.msra.mxu0 0
        %3748 = vmatprep.mubr.bf16.mxu0 0
        %3749 = vmatmul.mubr.bf16.gmra.mxu0 %v3714
        %v3750 = vpop.f32.mrf.mxu0
        %v3751 = vadd.f32 %v3687, %v3750
        %v3752 = vpop.f32.mrf.mxu0
        %v3753 = vpop.f32.mrf.mxu0
        %v3754 = vadd.f32 %v3687, %v3753
        %v3755 = vpop.f32.mrf.mxu0
        %3756 = vdwg.mxu0
        %3757 = vst.msk [vmem:[%s244] sm:$0xff] %vm310, %v3751
        %3758 = vst.msk [vmem:[%s244 + $0x8] sm:$0xff] %vm310, %v3754
        %s3759 = sand.u32 %s119, 1
        %s3760 = scalar_lea.sflag [#allocation4], %s3759
        %s3761 = sand.u32 %s119, 1
        %s3762 = smul.addr %s3761, 16
        %s3763 = scalar_lea.vmem [#allocation8], %s3762
        // Predicated region
        $region49: #{tpu_custom_call.1} parent=35 // pred_check
          %p3764 = pneg %p129
        $region50: #{tpu_custom_call.1} parent=35 // pred_check_branch
          %3766 = sbr.rel (%p3764) target = $region52
        $region51: #{tpu_custom_call.1} parent=35 // pred_region
          %s3768 = ssub.s32 256, 256
          %3769 = vsyncadd %s3760, %s3768
          %s3770 = smul.addr %s22, 2
          %s3771 = smul.addr %s3770, 128
          %s3772 = scalar_lea.hbm %s4, %s3771
          %s3773 = sshll.u32 %s3763, 4
          %s3774 = int_to_ptr.vmem [resolvable:$true] %s3773
          %3779 = dma.vmem_to_hbm [thread:$0]  %s3774, 256, %s3772, %s3760, 128, 128, 8
        $region52: #{tpu_custom_call.1} parent=35 // pred_fallthru
          _
      $region36: #{tpu_custom_call.1} parent=5 // pred_fallthru
        _
      %p3780 = scmp.le.s32.totalorder 2, %s17
      // Predicated region
      $region53: #{tpu_custom_call.1} parent=5 // pred_check
        %p3781 = pneg %p3780
      $region54: #{tpu_custom_call.1} parent=5 // pred_check_branch
        %3783 = sbr.rel (%p3781) target = $region56
      $region55: #{tpu_custom_call.1} parent=5 // pred_region
        %s3784 = ssub.s32 %s17, 2
        // Predicated region
        $region57: #{tpu_custom_call.1} parent=55 // pred_check
          %p3785 = pneg %p135
        $region58: #{tpu_custom_call.1} parent=55 // pred_check_branch
          %3787 = sbr.rel (%p3785) target = $region60
        $region59: #{tpu_custom_call.1} parent=55 // pred_region
          %s3788 = sand.u32 %s120, 1
          %s3789 = scalar_lea.sflag [#allocation4], %s3788
          %s3790 = sand.u32 %s120, 1
          %s3791 = smul.addr %s3790, 16
          %s3792 = scalar_lea.vmem [#allocation8], %s3791
          %3793 = dma.done %s3789, 256
        $region60: #{tpu_custom_call.1} parent=55 // pred_fallthru
          _
      $region56: #{tpu_custom_call.1} parent=5 // pred_fallthru
        _
    $region6: #{tpu_custom_call.1} parent=1 // loop_footer
      %s21 = sadd.s32 1, %s17
    $region7: #{tpu_custom_call.1} parent=1 // loop_footer_branch
      %16 = sbr.rel target = $region3
    $region8: #{tpu_custom_call.1} parent=1 // loop_exit
      _
    %3794 = vsyncpa [#allocation3], 1
    %s3795 = scalar_lea.sflag [#allocation3], 1
    %3796 = vsyncpa %s3795, 1
    %3797 = vsyncpa [#allocation6], 1
    %3798 = vsyncpa [#allocation4], 1
    %s3799 = scalar_lea.sflag [#allocation4], 1
    %3800 = vsyncpa %s3799, 1

</llo_original>
